<compile_context>
chip_gen: v7x
topology: tpu7x:2x2x1
jax: 0.10.0
libtpu: 0.0.40
codegen_flags: <defaults>
</compile_context>

<pallas_src>
import functools

import numpy as np
import jax
import jax.numpy as jnp
from jax.experimental import pallas as pl
from jax.experimental.pallas import tpu as pltpu


# Each 3x3 tap index k decomposes as k = 2*shift + parity, k in {0, 1, 2}.
_TAPS = ((0, 0, 0), (1, 1, 0), (2, 0, 1))   # (k, parity, shift)


def _blurpool_kernel(x_ref, w_ref, o_ref, *, c_in, c_out, ho, wo):
    # x_ref: VMEM (1, 2, 2, ho+1, c_in, wo+1) parity-major, channels on
    #        sublanes, decimated width on lanes (one batch element).
    # w_ref: VMEM (3, 3, c_out, c_in) conv weights, one matrix per tap.
    # o_ref: VMEM (1, c_out, ho, wo) output block (NCHW order).
    del c_in  # implied by the ref shapes

    # Hoist the 9 (c_out, c_in) weight matrices out of the row loop.
    w_mats = [[w_ref[kh, kw] for kw in range(3)] for kh in range(3)]

    for y in range(ho):  # static unroll; ho * 9 MXU matmuls per image
        acc = jnp.zeros((c_out, wo), jnp.float32)
        for kh, p, a in _TAPS:
            for kw, q, b in _TAPS:
                # x[n, c, 2*y + kh, 2*j + kw] == x_r[n, p, q, y + a, c, j + b]
                xb = x_ref[0, p, q, y + a, :, b:b + wo]            # (c_in, wo)
                acc = acc + jnp.dot(w_mats[kh][kw], xb,
                                    preferred_element_type=jnp.float32)
        o_ref[0, :, y, :] = acc.astype(o_ref.dtype)


def blurpool_forward(x, w):
    """x: (N, C_in, H, W) f32; w: (C_out, C_in, 3, 3) f32.
    3x3 conv, stride 2, no padding, no bias (valid conv), like nn.Conv2d."""
    n, c_in, h, wdt = x.shape
    c_out = w.shape[0]
    ho = (h - 3) // 2 + 1
    wo = (wdt - 3) // 2 + 1
    h2, w2 = ho + 1, wo + 1          # parity-plane extents
    hp, wp = 2 * h2, 2 * w2          # padded spatial extents (padding never read)
    if (hp, wp) != (h, wdt):
        x = jnp.pad(x, ((0, 0), (0, 0), (0, hp - h), (0, wp - wdt)))

    # Parity-major / channels-on-sublane / width-on-lane layout (layout glue):
    #   x_r[n, p, q, r, c, s] = x_pad[n, c, 2*r + p, 2*s + q]
    x_r = x.reshape(n, c_in, h2, 2, w2, 2).transpose(0, 3, 5, 2, 1, 4)
    # Per-tap (c_out, c_in) weight matrices, ready to be the matmul LHS.
    w_t = jnp.transpose(w, (2, 3, 0, 1)).astype(jnp.float32)   # (3, 3, c_out, c_in)

    kernel = functools.partial(
        _blurpool_kernel, c_in=c_in, c_out=c_out, ho=ho, wo=wo)

    return pl.pallas_call(
        kernel,
        out_shape=jax.ShapeDtypeStruct((n, c_out, ho, wo), jnp.float32),
        grid=(n,),
        in_specs=[
            pl.BlockSpec((1, 2, 2, h2, c_in, w2),
                         lambda nb: (nb, 0, 0, 0, 0, 0)),
            pl.BlockSpec((3, 3, c_out, c_in), lambda nb: (0, 0, 0, 0)),
        ],
        out_specs=pl.BlockSpec((1, c_out, ho, wo), lambda nb: (nb, 0, 0, 0)),
        compiler_params=pltpu.CompilerParams(
            dimension_semantics=("parallel",)),
    )(x_r, w_t)


if __name__ == "__main__":
    # Small shapes consistent with the module; c_in == c_out is required by the
    # original module's weight assignment.
    n, c_in, c_out, h, w_sp = 2, 4, 4, 16, 16

    key = jax.random.PRNGKey(0)
    x = jax.random.normal(key, (n, c_in, h, w_sp), dtype=jnp.float32)

    # Deterministic weights, exactly as BlurPool.__init__ builds them:
    # normalized binomial blur replicated across every (out, in) channel pair.
    blur = np.array([[1., 2., 1.], [2., 4., 2.], [1., 2., 1.]], dtype=np.float32)
    blur = blur / blur.sum()
    weight = np.tile(blur[None, None], (c_out, c_in, 1, 1)).astype(np.float32)

    out = jax.block_until_ready(blurpool_forward(x, jnp.asarray(weight)))

    # Host reference (valid conv, stride 2) in f32.
    x_np = np.asarray(x)
    ho = (h - 3) // 2 + 1
    wo = (w_sp - 3) // 2 + 1
    ref = np.zeros((n, c_out, ho, wo), np.float32)
    for kh in range(3):
        for kw in range(3):
            xs = x_np[:, :, kh:kh + 2 * ho:2, kw:kw + 2 * wo:2]  # (N, C_in, Ho, Wo)
            ref += np.einsum('ncij,oc->noij', xs, weight[:, :, kh, kw])

    assert out.shape == (n, c_out, ho, wo)
    np.testing.assert_allclose(np.asarray(out), ref, rtol=1e-4, atol=1e-4)
    print("KERNEL_OK")
</pallas_src>

<mosaic_0001>
module attributes {stable_mosaic.version = 11 : i64} {
  func.func @_blurpool_kernel(%arg0: i32, %arg1: memref<1x2x2x8x4x8xf32, #tpu.memory_space<vmem>>, %arg2: memref<3x3x4x4xf32, #tpu.memory_space<vmem>>, %arg3: memref<1x4x7x7xf32, #tpu.memory_space<vmem>>) attributes {dimension_semantics = [#tpu.dimension_semantics<parallel>], iteration_bounds = array<i64: 2>, scalar_prefetch = 0 : i64, scratch_operands = 0 : i64, tpu.core_type = #tpu.core_type<tc>, window_params = [{transform_indices = @transform_0, window_bounds = array<i64: 1, 2, 2, 8, 4, 8>}, {pipeline_mode = #tpu.pipeline_mode<synchronous>, transform_indices = @transform_1, window_bounds = array<i64: 3, 3, 4, 4>}, {transform_indices = @transform_2, window_bounds = array<i64: 1, 4, 7, 7>}]} {
    %c0 = arith.constant 0 : index
    %c0_0 = arith.constant 0 : index
    %c0_1 = arith.constant 0 : index
    %c0_2 = arith.constant 0 : index
    %0 = vector.load %arg2[%c0, %c0_0, %c0_1, %c0_2] : memref<3x3x4x4xf32, #tpu.memory_space<vmem>>, vector<1x1x4x4xf32>
    %1 = vector.shape_cast %0 : vector<1x1x4x4xf32> to vector<4x4xf32>
    %c0_3 = arith.constant 0 : index
    %c1 = arith.constant 1 : index
    %c0_4 = arith.constant 0 : index
    %c0_5 = arith.constant 0 : index
    %2 = vector.load %arg2[%c0_3, %c1, %c0_4, %c0_5] : memref<3x3x4x4xf32, #tpu.memory_space<vmem>>, vector<1x1x4x4xf32>
    %3 = vector.shape_cast %2 : vector<1x1x4x4xf32> to vector<4x4xf32>
    %c0_6 = arith.constant 0 : index
    %c2 = arith.constant 2 : index
    %c0_7 = arith.constant 0 : index
    %c0_8 = arith.constant 0 : index
    %4 = vector.load %arg2[%c0_6, %c2, %c0_7, %c0_8] : memref<3x3x4x4xf32, #tpu.memory_space<vmem>>, vector<1x1x4x4xf32>
    %5 = vector.shape_cast %4 : vector<1x1x4x4xf32> to vector<4x4xf32>
    %c1_9 = arith.constant 1 : index
    %c0_10 = arith.constant 0 : index
    %c0_11 = arith.constant 0 : index
    %c0_12 = arith.constant 0 : index
    %6 = vector.load %arg2[%c1_9, %c0_10, %c0_11, %c0_12] : memref<3x3x4x4xf32, #tpu.memory_space<vmem>>, vector<1x1x4x4xf32>
    %7 = vector.shape_cast %6 : vector<1x1x4x4xf32> to vector<4x4xf32>
    %c1_13 = arith.constant 1 : index
    %c1_14 = arith.constant 1 : index
    %c0_15 = arith.constant 0 : index
    %c0_16 = arith.constant 0 : index
    %8 = vector.load %arg2[%c1_13, %c1_14, %c0_15, %c0_16] : memref<3x3x4x4xf32, #tpu.memory_space<vmem>>, vector<1x1x4x4xf32>
    %9 = vector.shape_cast %8 : vector<1x1x4x4xf32> to vector<4x4xf32>
    %c1_17 = arith.constant 1 : index
    %c2_18 = arith.constant 2 : index
    %c0_19 = arith.constant 0 : index
    %c0_20 = arith.constant 0 : index
    %10 = vector.load %arg2[%c1_17, %c2_18, %c0_19, %c0_20] : memref<3x3x4x4xf32, #tpu.memory_space<vmem>>, vector<1x1x4x4xf32>
    %11 = vector.shape_cast %10 : vector<1x1x4x4xf32> to vector<4x4xf32>
    %c2_21 = arith.constant 2 : index
    %c0_22 = arith.constant 0 : index
    %c0_23 = arith.constant 0 : index
    %c0_24 = arith.constant 0 : index
    %12 = vector.load %arg2[%c2_21, %c0_22, %c0_23, %c0_24] : memref<3x3x4x4xf32, #tpu.memory_space<vmem>>, vector<1x1x4x4xf32>
    %13 = vector.shape_cast %12 : vector<1x1x4x4xf32> to vector<4x4xf32>
    %c2_25 = arith.constant 2 : index
    %c1_26 = arith.constant 1 : index
    %c0_27 = arith.constant 0 : index
    %c0_28 = arith.constant 0 : index
    %14 = vector.load %arg2[%c2_25, %c1_26, %c0_27, %c0_28] : memref<3x3x4x4xf32, #tpu.memory_space<vmem>>, vector<1x1x4x4xf32>
    %15 = vector.shape_cast %14 : vector<1x1x4x4xf32> to vector<4x4xf32>
    %c2_29 = arith.constant 2 : index
    %c2_30 = arith.constant 2 : index
    %c0_31 = arith.constant 0 : index
    %c0_32 = arith.constant 0 : index
    %16 = vector.load %arg2[%c2_29, %c2_30, %c0_31, %c0_32] : memref<3x3x4x4xf32, #tpu.memory_space<vmem>>, vector<1x1x4x4xf32>
    %17 = vector.shape_cast %16 : vector<1x1x4x4xf32> to vector<4x4xf32>
    %cst = arith.constant 0.000000e+00 : f32
    %18 = vector.broadcast %cst : f32 to vector<4x7xf32>
    %c0_33 = arith.constant 0 : index
    %c0_34 = arith.constant 0 : index
    %c0_35 = arith.constant 0 : index
    %c0_36 = arith.constant 0 : index
    %c0_37 = arith.constant 0 : index
    %c0_38 = arith.constant 0 : index
    %19 = vector.load %arg1[%c0_33, %c0_34, %c0_35, %c0_36, %c0_37, %c0_38] : memref<1x2x2x8x4x8xf32, #tpu.memory_space<vmem>>, vector<1x1x1x1x4x7xf32>
    %20 = vector.shape_cast %19 : vector<1x1x1x1x4x7xf32> to vector<4x7xf32>
    %cst_39 = arith.constant dense<0.000000e+00> : vector<4x7xf32>
    %21 = tpu.matmul %1, %20, %cst_39 {dimension_numbers = #tpu.dot_dimension_numbers<[1], [0], [0], [1], [0, 0, 1, 1], [], []>} : vector<4x4xf32>, vector<4x7xf32>, vector<4x7xf32> -> vector<4x7xf32>
    %22 = arith.addf %18, %21 : vector<4x7xf32>
    %c0_40 = arith.constant 0 : index
    %c0_41 = arith.constant 0 : index
    %c1_42 = arith.constant 1 : index
    %c0_43 = arith.constant 0 : index
    %c0_44 = arith.constant 0 : index
    %c0_45 = arith.constant 0 : index
    %23 = vector.load %arg1[%c0_40, %c0_41, %c1_42, %c0_43, %c0_44, %c0_45] : memref<1x2x2x8x4x8xf32, #tpu.memory_space<vmem>>, vector<1x1x1x1x4x7xf32>
    %24 = vector.shape_cast %23 : vector<1x1x1x1x4x7xf32> to vector<4x7xf32>
    %cst_46 = arith.constant dense<0.000000e+00> : vector<4x7xf32>
    %25 = tpu.matmul %3, %24, %cst_46 {dimension_numbers = #tpu.dot_dimension_numbers<[1], [0], [0], [1], [0, 0, 1, 1], [], []>} : vector<4x4xf32>, vector<4x7xf32>, vector<4x7xf32> -> vector<4x7xf32>
    %26 = arith.addf %22, %25 : vector<4x7xf32>
    %c0_47 = arith.constant 0 : index
    %c0_48 = arith.constant 0 : index
    %c0_49 = arith.constant 0 : index
    %c0_50 = arith.constant 0 : index
    %c0_51 = arith.constant 0 : index
    %c1_52 = arith.constant 1 : index
    %27 = vector.load %arg1[%c0_47, %c0_48, %c0_49, %c0_50, %c0_51, %c1_52] : memref<1x2x2x8x4x8xf32, #tpu.memory_space<vmem>>, vector<1x1x1x1x4x7xf32>
    %28 = vector.shape_cast %27 : vector<1x1x1x1x4x7xf32> to vector<4x7xf32>
    %cst_53 = arith.constant dense<0.000000e+00> : vector<4x7xf32>
    %29 = tpu.matmul %5, %28, %cst_53 {dimension_numbers = #tpu.dot_dimension_numbers<[1], [0], [0], [1], [0, 0, 1, 1], [], []>} : vector<4x4xf32>, vector<4x7xf32>, vector<4x7xf32> -> vector<4x7xf32>
    %30 = arith.addf %26, %29 : vector<4x7xf32>
    %c0_54 = arith.constant 0 : index
    %c1_55 = arith.constant 1 : index
    %c0_56 = arith.constant 0 : index
    %c0_57 = arith.constant 0 : index
    %c0_58 = arith.constant 0 : index
    %c0_59 = arith.constant 0 : index
    %31 = vector.load %arg1[%c0_54, %c1_55, %c0_56, %c0_57, %c0_58, %c0_59] : memref<1x2x2x8x4x8xf32, #tpu.memory_space<vmem>>, vector<1x1x1x1x4x7xf32>
    %32 = vector.shape_cast %31 : vector<1x1x1x1x4x7xf32> to vector<4x7xf32>
    %cst_60 = arith.constant dense<0.000000e+00> : vector<4x7xf32>
    %33 = tpu.matmul %7, %32, %cst_60 {dimension_numbers = #tpu.dot_dimension_numbers<[1], [0], [0], [1], [0, 0, 1, 1], [], []>} : vector<4x4xf32>, vector<4x7xf32>, vector<4x7xf32> -> vector<4x7xf32>
    %34 = arith.addf %30, %33 : vector<4x7xf32>
    %c0_61 = arith.constant 0 : index
    %c1_62 = arith.constant 1 : index
    %c1_63 = arith.constant 1 : index
    %c0_64 = arith.constant 0 : index
    %c0_65 = arith.constant 0 : index
    %c0_66 = arith.constant 0 : index
    %35 = vector.load %arg1[%c0_61, %c1_62, %c1_63, %c0_64, %c0_65, %c0_66] : memref<1x2x2x8x4x8xf32, #tpu.memory_space<vmem>>, vector<1x1x1x1x4x7xf32>
    %36 = vector.shape_cast %35 : vector<1x1x1x1x4x7xf32> to vector<4x7xf32>
    %cst_67 = arith.constant dense<0.000000e+00> : vector<4x7xf32>
    %37 = tpu.matmul %9, %36, %cst_67 {dimension_numbers = #tpu.dot_dimension_numbers<[1], [0], [0], [1], [0, 0, 1, 1], [], []>} : vector<4x4xf32>, vector<4x7xf32>, vector<4x7xf32> -> vector<4x7xf32>
    %38 = arith.addf %34, %37 : vector<4x7xf32>
    %c0_68 = arith.constant 0 : index
    %c1_69 = arith.constant 1 : index
    %c0_70 = arith.constant 0 : index
    %c0_71 = arith.constant 0 : index
    %c0_72 = arith.constant 0 : index
    %c1_73 = arith.constant 1 : index
    %39 = vector.load %arg1[%c0_68, %c1_69, %c0_70, %c0_71, %c0_72, %c1_73] : memref<1x2x2x8x4x8xf32, #tpu.memory_space<vmem>>, vector<1x1x1x1x4x7xf32>
    %40 = vector.shape_cast %39 : vector<1x1x1x1x4x7xf32> to vector<4x7xf32>
    %cst_74 = arith.constant dense<0.000000e+00> : vector<4x7xf32>
    %41 = tpu.matmul %11, %40, %cst_74 {dimension_numbers = #tpu.dot_dimension_numbers<[1], [0], [0], [1], [0, 0, 1, 1], [], []>} : vector<4x4xf32>, vector<4x7xf32>, vector<4x7xf32> -> vector<4x7xf32>
    %42 = arith.addf %38, %41 : vector<4x7xf32>
    %c0_75 = arith.constant 0 : index
    %c0_76 = arith.constant 0 : index
    %c0_77 = arith.constant 0 : index
    %c1_78 = arith.constant 1 : index
    %c0_79 = arith.constant 0 : index
    %c0_80 = arith.constant 0 : index
    %43 = vector.load %arg1[%c0_75, %c0_76, %c0_77, %c1_78, %c0_79, %c0_80] : memref<1x2x2x8x4x8xf32, #tpu.memory_space<vmem>>, vector<1x1x1x1x4x7xf32>
    %44 = vector.shape_cast %43 : vector<1x1x1x1x4x7xf32> to vector<4x7xf32>
    %cst_81 = arith.constant dense<0.000000e+00> : vector<4x7xf32>
    %45 = tpu.matmul %13, %44, %cst_81 {dimension_numbers = #tpu.dot_dimension_numbers<[1], [0], [0], [1], [0, 0, 1, 1], [], []>} : vector<4x4xf32>, vector<4x7xf32>, vector<4x7xf32> -> vector<4x7xf32>
    %46 = arith.addf %42, %45 : vector<4x7xf32>
    %c0_82 = arith.constant 0 : index
    %c0_83 = arith.constant 0 : index
    %c1_84 = arith.constant 1 : index
    %c1_85 = arith.constant 1 : index
    %c0_86 = arith.constant 0 : index
    %c0_87 = arith.constant 0 : index
    %47 = vector.load %arg1[%c0_82, %c0_83, %c1_84, %c1_85, %c0_86, %c0_87] : memref<1x2x2x8x4x8xf32, #tpu.memory_space<vmem>>, vector<1x1x1x1x4x7xf32>
    %48 = vector.shape_cast %47 : vector<1x1x1x1x4x7xf32> to vector<4x7xf32>
    %cst_88 = arith.constant dense<0.000000e+00> : vector<4x7xf32>
    %49 = tpu.matmul %15, %48, %cst_88 {dimension_numbers = #tpu.dot_dimension_numbers<[1], [0], [0], [1], [0, 0, 1, 1], [], []>} : vector<4x4xf32>, vector<4x7xf32>, vector<4x7xf32> -> vector<4x7xf32>
    %50 = arith.addf %46, %49 : vector<4x7xf32>
    %c0_89 = arith.constant 0 : index
    %c0_90 = arith.constant 0 : index
    %c0_91 = arith.constant 0 : index
    %c1_92 = arith.constant 1 : index
    %c0_93 = arith.constant 0 : index
    %c1_94 = arith.constant 1 : index
    %51 = vector.load %arg1[%c0_89, %c0_90, %c0_91, %c1_92, %c0_93, %c1_94] : memref<1x2x2x8x4x8xf32, #tpu.memory_space<vmem>>, vector<1x1x1x1x4x7xf32>
    %52 = vector.shape_cast %51 : vector<1x1x1x1x4x7xf32> to vector<4x7xf32>
    %cst_95 = arith.constant dense<0.000000e+00> : vector<4x7xf32>
    %53 = tpu.matmul %17, %52, %cst_95 {dimension_numbers = #tpu.dot_dimension_numbers<[1], [0], [0], [1], [0, 0, 1, 1], [], []>} : vector<4x4xf32>, vector<4x7xf32>, vector<4x7xf32> -> vector<4x7xf32>
    %54 = arith.addf %50, %53 : vector<4x7xf32>
    %c0_96 = arith.constant 0 : index
    %c0_97 = arith.constant 0 : index
    %c0_98 = arith.constant 0 : index
    %c0_99 = arith.constant 0 : index
    %55 = vector.load %arg3[%c0_96, %c0_97, %c0_98, %c0_99] : memref<1x4x7x7xf32, #tpu.memory_space<vmem>>, vector<1x4x1x7xf32>
    %56 = vector.shape_cast %55 : vector<1x4x1x7xf32> to vector<4x7xf32>
    %57 = vector.shape_cast %54 : vector<4x7xf32> to vector<1x4x1x7xf32>
    tpu.vector_store %arg3[%c0_96, %c0_97, %c0_98, %c0_99], %57 {strides = array<i32>} : memref<1x4x7x7xf32, #tpu.memory_space<vmem>>, vector<1x4x1x7xf32>,
    %cst_100 = arith.constant 0.000000e+00 : f32
    %58 = vector.broadcast %cst_100 : f32 to vector<4x7xf32>
    %c0_101 = arith.constant 0 : index
    %c0_102 = arith.constant 0 : index
    %c0_103 = arith.constant 0 : index
    %c1_104 = arith.constant 1 : index
    %c0_105 = arith.constant 0 : index
    %c0_106 = arith.constant 0 : index
    %59 = vector.load %arg1[%c0_101, %c0_102, %c0_103, %c1_104, %c0_105, %c0_106] : memref<1x2x2x8x4x8xf32, #tpu.memory_space<vmem>>, vector<1x1x1x1x4x7xf32>
    %60 = vector.shape_cast %59 : vector<1x1x1x1x4x7xf32> to vector<4x7xf32>
    %cst_107 = arith.constant dense<0.000000e+00> : vector<4x7xf32>
    %61 = tpu.matmul %1, %60, %cst_107 {dimension_numbers = #tpu.dot_dimension_numbers<[1], [0], [0], [1], [0, 0, 1, 1], [], []>} : vector<4x4xf32>, vector<4x7xf32>, vector<4x7xf32> -> vector<4x7xf32>
    %62 = arith.addf %58, %61 : vector<4x7xf32>
    %c0_108 = arith.constant 0 : index
    %c0_109 = arith.constant 0 : index
    %c1_110 = arith.constant 1 : index
    %c1_111 = arith.constant 1 : index
    %c0_112 = arith.constant 0 : index
    %c0_113 = arith.constant 0 : index
    %63 = vector.load %arg1[%c0_108, %c0_109, %c1_110, %c1_111, %c0_112, %c0_113] : memref<1x2x2x8x4x8xf32, #tpu.memory_space<vmem>>, vector<1x1x1x1x4x7xf32>
    %64 = vector.shape_cast %63 : vector<1x1x1x1x4x7xf32> to vector<4x7xf32>
    %cst_114 = arith.constant dense<0.000000e+00> : vector<4x7xf32>
    %65 = tpu.matmul %3, %64, %cst_114 {dimension_numbers = #tpu.dot_dimension_numbers<[1], [0], [0], [1], [0, 0, 1, 1], [], []>} : vector<4x4xf32>, vector<4x7xf32>, vector<4x7xf32> -> vector<4x7xf32>
    %66 = arith.addf %62, %65 : vector<4x7xf32>
    %c0_115 = arith.constant 0 : index
    %c0_116 = arith.constant 0 : index
    %c0_117 = arith.constant 0 : index
    %c1_118 = arith.constant 1 : index
    %c0_119 = arith.constant 0 : index
    %c1_120 = arith.constant 1 : index
    %67 = vector.load %arg1[%c0_115, %c0_116, %c0_117, %c1_118, %c0_119, %c1_120] : memref<1x2x2x8x4x8xf32, #tpu.memory_space<vmem>>, vector<1x1x1x1x4x7xf32>
    %68 = vector.shape_cast %67 : vector<1x1x1x1x4x7xf32> to vector<4x7xf32>
    %cst_121 = arith.constant dense<0.000000e+00> : vector<4x7xf32>
    %69 = tpu.matmul %5, %68, %cst_121 {dimension_numbers = #tpu.dot_dimension_numbers<[1], [0], [0], [1], [0, 0, 1, 1], [], []>} : vector<4x4xf32>, vector<4x7xf32>, vector<4x7xf32> -> vector<4x7xf32>
    %70 = arith.addf %66, %69 : vector<4x7xf32>
    %c0_122 = arith.constant 0 : index
    %c1_123 = arith.constant 1 : index
    %c0_124 = arith.constant 0 : index
    %c1_125 = arith.constant 1 : index
    %c0_126 = arith.constant 0 : index
    %c0_127 = arith.constant 0 : index
    %71 = vector.load %arg1[%c0_122, %c1_123, %c0_124, %c1_125, %c0_126, %c0_127] : memref<1x2x2x8x4x8xf32, #tpu.memory_space<vmem>>, vector<1x1x1x1x4x7xf32>
    %72 = vector.shape_cast %71 : vector<1x1x1x1x4x7xf32> to vector<4x7xf32>
    %cst_128 = arith.constant dense<0.000000e+00> : vector<4x7xf32>
    %73 = tpu.matmul %7, %72, %cst_128 {dimension_numbers = #tpu.dot_dimension_numbers<[1], [0], [0], [1], [0, 0, 1, 1], [], []>} : vector<4x4xf32>, vector<4x7xf32>, vector<4x7xf32> -> vector<4x7xf32>
    %74 = arith.addf %70, %73 : vector<4x7xf32>
    %c0_129 = arith.constant 0 : index
    %c1_130 = arith.constant 1 : index
    %c1_131 = arith.constant 1 : index
    %c1_132 = arith.constant 1 : index
    %c0_133 = arith.constant 0 : index
    %c0_134 = arith.constant 0 : index
    %75 = vector.load %arg1[%c0_129, %c1_130, %c1_131, %c1_132, %c0_133, %c0_134] : memref<1x2x2x8x4x8xf32, #tpu.memory_space<vmem>>, vector<1x1x1x1x4x7xf32>
    %76 = vector.shape_cast %75 : vector<1x1x1x1x4x7xf32> to vector<4x7xf32>
    %cst_135 = arith.constant dense<0.000000e+00> : vector<4x7xf32>
    %77 = tpu.matmul %9, %76, %cst_135 {dimension_numbers = #tpu.dot_dimension_numbers<[1], [0], [0], [1], [0, 0, 1, 1], [], []>} : vector<4x4xf32>, vector<4x7xf32>, vector<4x7xf32> -> vector<4x7xf32>
    %78 = arith.addf %74, %77 : vector<4x7xf32>
    %c0_136 = arith.constant 0 : index
    %c1_137 = arith.constant 1 : index
    %c0_138 = arith.constant 0 : index
    %c1_139 = arith.constant 1 : index
    %c0_140 = arith.constant 0 : index
    %c1_141 = arith.constant 1 : index
    %79 = vector.load %arg1[%c0_136, %c1_137, %c0_138, %c1_139, %c0_140, %c1_141] : memref<1x2x2x8x4x8xf32, #tpu.memory_space<vmem>>, vector<1x1x1x1x4x7xf32>
    %80 = vector.shape_cast %79 : vector<1x1x1x1x4x7xf32> to vector<4x7xf32>
    %cst_142 = arith.constant dense<0.000000e+00> : vector<4x7xf32>
    %81 = tpu.matmul %11, %80, %cst_142 {dimension_numbers = #tpu.dot_dimension_numbers<[1], [0], [0], [1], [0, 0, 1, 1], [], []>} : vector<4x4xf32>, vector<4x7xf32>, vector<4x7xf32> -> vector<4x7xf32>
    %82 = arith.addf %78, %81 : vector<4x7xf32>
    %c0_143 = arith.constant 0 : index
    %c0_144 = arith.constant 0 : index
    %c0_145 = arith.constant 0 : index
    %c2_146 = arith.constant 2 : index
    %c0_147 = arith.constant 0 : index
    %c0_148 = arith.constant 0 : index
    %83 = vector.load %arg1[%c0_143, %c0_144, %c0_145, %c2_146, %c0_147, %c0_148] : memref<1x2x2x8x4x8xf32, #tpu.memory_space<vmem>>, vector<1x1x1x1x4x7xf32>
    %84 = vector.shape_cast %83 : vector<1x1x1x1x4x7xf32> to vector<4x7xf32>
    %cst_149 = arith.constant dense<0.000000e+00> : vector<4x7xf32>
    %85 = tpu.matmul %13, %84, %cst_149 {dimension_numbers = #tpu.dot_dimension_numbers<[1], [0], [0], [1], [0, 0, 1, 1], [], []>} : vector<4x4xf32>, vector<4x7xf32>, vector<4x7xf32> -> vector<4x7xf32>
    %86 = arith.addf %82, %85 : vector<4x7xf32>
    %c0_150 = arith.constant 0 : index
    %c0_151 = arith.constant 0 : index
    %c1_152 = arith.constant 1 : index
    %c2_153 = arith.constant 2 : index
    %c0_154 = arith.constant 0 : index
    %c0_155 = arith.constant 0 : index
    %87 = vector.load %arg1[%c0_150, %c0_151, %c1_152, %c2_153, %c0_154, %c0_155] : memref<1x2x2x8x4x8xf32, #tpu.memory_space<vmem>>, vector<1x1x1x1x4x7xf32>
    %88 = vector.shape_cast %87 : vector<1x1x1x1x4x7xf32> to vector<4x7xf32>
    %cst_156 = arith.constant dense<0.000000e+00> : vector<4x7xf32>
    %89 = tpu.matmul %15, %88, %cst_156 {dimension_numbers = #tpu.dot_dimension_numbers<[1], [0], [0], [1], [0, 0, 1, 1], [], []>} : vector<4x4xf32>, vector<4x7xf32>, vector<4x7xf32> -> vector<4x7xf32>
    %90 = arith.addf %86, %89 : vector<4x7xf32>
    %c0_157 = arith.constant 0 : index
    %c0_158 = arith.constant 0 : index
    %c0_159 = arith.constant 0 : index
    %c2_160 = arith.constant 2 : index
    %c0_161 = arith.constant 0 : index
    %c1_162 = arith.constant 1 : index
    %91 = vector.load %arg1[%c0_157, %c0_158, %c0_159, %c2_160, %c0_161, %c1_162] : memref<1x2x2x8x4x8xf32, #tpu.memory_space<vmem>>, vector<1x1x1x1x4x7xf32>
    %92 = vector.shape_cast %91 : vector<1x1x1x1x4x7xf32> to vector<4x7xf32>
    %cst_163 = arith.constant dense<0.000000e+00> : vector<4x7xf32>
    %93 = tpu.matmul %17, %92, %cst_163 {dimension_numbers = #tpu.dot_dimension_numbers<[1], [0], [0], [1], [0, 0, 1, 1], [], []>} : vector<4x4xf32>, vector<4x7xf32>, vector<4x7xf32> -> vector<4x7xf32>
    %94 = arith.addf %90, %93 : vector<4x7xf32>
    %c0_164 = arith.constant 0 : index
    %c0_165 = arith.constant 0 : index
    %c1_166 = arith.constant 1 : index
    %c0_167 = arith.constant 0 : index
    %95 = vector.load %arg3[%c0_164, %c0_165, %c1_166, %c0_167] : memref<1x4x7x7xf32, #tpu.memory_space<vmem>>, vector<1x4x1x7xf32>
    %96 = vector.shape_cast %95 : vector<1x4x1x7xf32> to vector<4x7xf32>
    %97 = vector.shape_cast %94 : vector<4x7xf32> to vector<1x4x1x7xf32>
    tpu.vector_store %arg3[%c0_164, %c0_165, %c1_166, %c0_167], %97 {strides = array<i32>} : memref<1x4x7x7xf32, #tpu.memory_space<vmem>>, vector<1x4x1x7xf32>,
    %cst_168 = arith.constant 0.000000e+00 : f32
    %98 = vector.broadcast %cst_168 : f32 to vector<4x7xf32>
    %c0_169 = arith.constant 0 : index
    %c0_170 = arith.constant 0 : index
    %c0_171 = arith.constant 0 : index
    %c2_172 = arith.constant 2 : index
    %c0_173 = arith.constant 0 : index
    %c0_174 = arith.constant 0 : index
    %99 = vector.load %arg1[%c0_169, %c0_170, %c0_171, %c2_172, %c0_173, %c0_174] : memref<1x2x2x8x4x8xf32, #tpu.memory_space<vmem>>, vector<1x1x1x1x4x7xf32>
    %100 = vector.shape_cast %99 : vector<1x1x1x1x4x7xf32> to vector<4x7xf32>
    %cst_175 = arith.constant dense<0.000000e+00> : vector<4x7xf32>
    %101 = tpu.matmul %1, %100, %cst_175 {dimension_numbers = #tpu.dot_dimension_numbers<[1], [0], [0], [1], [0, 0, 1, 1], [], []>} : vector<4x4xf32>, vector<4x7xf32>, vector<4x7xf32> -> vector<4x7xf32>
    %102 = arith.addf %98, %101 : vector<4x7xf32>
    %c0_176 = arith.constant 0 : index
    %c0_177 = arith.constant 0 : index
    %c1_178 = arith.constant 1 : index
    %c2_179 = arith.constant 2 : index
    %c0_180 = arith.constant 0 : index
    %c0_181 = arith.constant 0 : index
    %103 = vector.load %arg1[%c0_176, %c0_177, %c1_178, %c2_179, %c0_180, %c0_181] : memref<1x2x2x8x4x8xf32, #tpu.memory_space<vmem>>, vector<1x1x1x1x4x7xf32>
    %104 = vector.shape_cast %103 : vector<1x1x1x1x4x7xf32> to vector<4x7xf32>
    %cst_182 = arith.constant dense<0.000000e+00> : vector<4x7xf32>
    %105 = tpu.matmul %3, %104, %cst_182 {dimension_numbers = #tpu.dot_dimension_numbers<[1], [0], [0], [1], [0, 0, 1, 1], [], []>} : vector<4x4xf32>, vector<4x7xf32>, vector<4x7xf32> -> vector<4x7xf32>
    %106 = arith.addf %102, %105 : vector<4x7xf32>
    %c0_183 = arith.constant 0 : index
    %c0_184 = arith.constant 0 : index
    %c0_185 = arith.constant 0 : index
    %c2_186 = arith.constant 2 : index
    %c0_187 = arith.constant 0 : index
    %c1_188 = arith.constant 1 : index
    %107 = vector.load %arg1[%c0_183, %c0_184, %c0_185, %c2_186, %c0_187, %c1_188] : memref<1x2x2x8x4x8xf32, #tpu.memory_space<vmem>>, vector<1x1x1x1x4x7xf32>
    %108 = vector.shape_cast %107 : vector<1x1x1x1x4x7xf32> to vector<4x7xf32>
    %cst_189 = arith.constant dense<0.000000e+00> : vector<4x7xf32>
    %109 = tpu.matmul %5, %108, %cst_189 {dimension_numbers = #tpu.dot_dimension_numbers<[1], [0], [0], [1], [0, 0, 1, 1], [], []>} : vector<4x4xf32>, vector<4x7xf32>, vector<4x7xf32> -> vector<4x7xf32>
    %110 = arith.addf %106, %109 : vector<4x7xf32>
    %c0_190 = arith.constant 0 : index
    %c1_191 = arith.constant 1 : index
    %c0_192 = arith.constant 0 : index
    %c2_193 = arith.constant 2 : index
    %c0_194 = arith.constant 0 : index
    %c0_195 = arith.constant 0 : index
    %111 = vector.load %arg1[%c0_190, %c1_191, %c0_192, %c2_193, %c0_194, %c0_195] : memref<1x2x2x8x4x8xf32, #tpu.memory_space<vmem>>, vector<1x1x1x1x4x7xf32>
    %112 = vector.shape_cast %111 : vector<1x1x1x1x4x7xf32> to vector<4x7xf32>
    %cst_196 = arith.constant dense<0.000000e+00> : vector<4x7xf32>
    %113 = tpu.matmul %7, %112, %cst_196 {dimension_numbers = #tpu.dot_dimension_numbers<[1], [0], [0], [1], [0, 0, 1, 1], [], []>} : vector<4x4xf32>, vector<4x7xf32>, vector<4x7xf32> -> vector<4x7xf32>
    %114 = arith.addf %110, %113 : vector<4x7xf32>
    %c0_197 = arith.constant 0 : index
    %c1_198 = arith.constant 1 : index
    %c1_199 = arith.constant 1 : index
    %c2_200 = arith.constant 2 : index
    %c0_201 = arith.constant 0 : index
    %c0_202 = arith.constant 0 : index
    %115 = vector.load %arg1[%c0_197, %c1_198, %c1_199, %c2_200, %c0_201, %c0_202] : memref<1x2x2x8x4x8xf32, #tpu.memory_space<vmem>>, vector<1x1x1x1x4x7xf32>
    %116 = vector.shape_cast %115 : vector<1x1x1x1x4x7xf32> to vector<4x7xf32>
    %cst_203 = arith.constant dense<0.000000e+00> : vector<4x7xf32>
    %117 = tpu.matmul %9, %116, %cst_203 {dimension_numbers = #tpu.dot_dimension_numbers<[1], [0], [0], [1], [0, 0, 1, 1], [], []>} : vector<4x4xf32>, vector<4x7xf32>, vector<4x7xf32> -> vector<4x7xf32>
    %118 = arith.addf %114, %117 : vector<4x7xf32>
    %c0_204 = arith.constant 0 : index
    %c1_205 = arith.constant 1 : index
    %c0_206 = arith.constant 0 : index
    %c2_207 = arith.constant 2 : index
    %c0_208 = arith.constant 0 : index
    %c1_209 = arith.constant 1 : index
    %119 = vector.load %arg1[%c0_204, %c1_205, %c0_206, %c2_207, %c0_208, %c1_209] : memref<1x2x2x8x4x8xf32, #tpu.memory_space<vmem>>, vector<1x1x1x1x4x7xf32>
    %120 = vector.shape_cast %119 : vector<1x1x1x1x4x7xf32> to vector<4x7xf32>
    %cst_210 = arith.constant dense<0.000000e+00> : vector<4x7xf32>
    %121 = tpu.matmul %11, %120, %cst_210 {dimension_numbers = #tpu.dot_dimension_numbers<[1], [0], [0], [1], [0, 0, 1, 1], [], []>} : vector<4x4xf32>, vector<4x7xf32>, vector<4x7xf32> -> vector<4x7xf32>
    %122 = arith.addf %118, %121 : vector<4x7xf32>
    %c0_211 = arith.constant 0 : index
    %c0_212 = arith.constant 0 : index
    %c0_213 = arith.constant 0 : index
    %c3 = arith.constant 3 : index
    %c0_214 = arith.constant 0 : index
    %c0_215 = arith.constant 0 : index
    %123 = vector.load %arg1[%c0_211, %c0_212, %c0_213, %c3, %c0_214, %c0_215] : memref<1x2x2x8x4x8xf32, #tpu.memory_space<vmem>>, vector<1x1x1x1x4x7xf32>
    %124 = vector.shape_cast %123 : vector<1x1x1x1x4x7xf32> to vector<4x7xf32>
    %cst_216 = arith.constant dense<0.000000e+00> : vector<4x7xf32>
    %125 = tpu.matmul %13, %124, %cst_216 {dimension_numbers = #tpu.dot_dimension_numbers<[1], [0], [0], [1], [0, 0, 1, 1], [], []>} : vector<4x4xf32>, vector<4x7xf32>, vector<4x7xf32> -> vector<4x7xf32>
    %126 = arith.addf %122, %125 : vector<4x7xf32>
    %c0_217 = arith.constant 0 : index
    %c0_218 = arith.constant 0 : index
    %c1_219 = arith.constant 1 : index
    %c3_220 = arith.constant 3 : index
    %c0_221 = arith.constant 0 : index
    %c0_222 = arith.constant 0 : index
    %127 = vector.load %arg1[%c0_217, %c0_218, %c1_219, %c3_220, %c0_221, %c0_222] : memref<1x2x2x8x4x8xf32, #tpu.memory_space<vmem>>, vector<1x1x1x1x4x7xf32>
    %128 = vector.shape_cast %127 : vector<1x1x1x1x4x7xf32> to vector<4x7xf32>
    %cst_223 = arith.constant dense<0.000000e+00> : vector<4x7xf32>
    %129 = tpu.matmul %15, %128, %cst_223 {dimension_numbers = #tpu.dot_dimension_numbers<[1], [0], [0], [1], [0, 0, 1, 1], [], []>} : vector<4x4xf32>, vector<4x7xf32>, vector<4x7xf32> -> vector<4x7xf32>
    %130 = arith.addf %126, %129 : vector<4x7xf32>
    %c0_224 = arith.constant 0 : index
    %c0_225 = arith.constant 0 : index
    %c0_226 = arith.constant 0 : index
    %c3_227 = arith.constant 3 : index
    %c0_228 = arith.constant 0 : index
    %c1_229 = arith.constant 1 : index
    %131 = vector.load %arg1[%c0_224, %c0_225, %c0_226, %c3_227, %c0_228, %c1_229] : memref<1x2x2x8x4x8xf32, #tpu.memory_space<vmem>>, vector<1x1x1x1x4x7xf32>
    %132 = vector.shape_cast %131 : vector<1x1x1x1x4x7xf32> to vector<4x7xf32>
    %cst_230 = arith.constant dense<0.000000e+00> : vector<4x7xf32>
    %133 = tpu.matmul %17, %132, %cst_230 {dimension_numbers = #tpu.dot_dimension_numbers<[1], [0], [0], [1], [0, 0, 1, 1], [], []>} : vector<4x4xf32>, vector<4x7xf32>, vector<4x7xf32> -> vector<4x7xf32>
    %134 = arith.addf %130, %133 : vector<4x7xf32>
    %c0_231 = arith.constant 0 : index
    %c0_232 = arith.constant 0 : index
    %c2_233 = arith.constant 2 : index
    %c0_234 = arith.constant 0 : index
    %135 = vector.load %arg3[%c0_231, %c0_232, %c2_233, %c0_234] : memref<1x4x7x7xf32, #tpu.memory_space<vmem>>, vector<1x4x1x7xf32>
    %136 = vector.shape_cast %135 : vector<1x4x1x7xf32> to vector<4x7xf32>
    %137 = vector.shape_cast %134 : vector<4x7xf32> to vector<1x4x1x7xf32>
    tpu.vector_store %arg3[%c0_231, %c0_232, %c2_233, %c0_234], %137 {strides = array<i32>} : memref<1x4x7x7xf32, #tpu.memory_space<vmem>>, vector<1x4x1x7xf32>,
    %cst_235 = arith.constant 0.000000e+00 : f32
    %138 = vector.broadcast %cst_235 : f32 to vector<4x7xf32>
    %c0_236 = arith.constant 0 : index
    %c0_237 = arith.constant 0 : index
    %c0_238 = arith.constant 0 : index
    %c3_239 = arith.constant 3 : index
    %c0_240 = arith.constant 0 : index
    %c0_241 = arith.constant 0 : index
    %139 = vector.load %arg1[%c0_236, %c0_237, %c0_238, %c3_239, %c0_240, %c0_241] : memref<1x2x2x8x4x8xf32, #tpu.memory_space<vmem>>, vector<1x1x1x1x4x7xf32>
    %140 = vector.shape_cast %139 : vector<1x1x1x1x4x7xf32> to vector<4x7xf32>
    %cst_242 = arith.constant dense<0.000000e+00> : vector<4x7xf32>
    %141 = tpu.matmul %1, %140, %cst_242 {dimension_numbers = #tpu.dot_dimension_numbers<[1], [0], [0], [1], [0, 0, 1, 1], [], []>} : vector<4x4xf32>, vector<4x7xf32>, vector<4x7xf32> -> vector<4x7xf32>
    %142 = arith.addf %138, %141 : vector<4x7xf32>
    %c0_243 = arith.constant 0 : index
    %c0_244 = arith.constant 0 : index
    %c1_245 = arith.constant 1 : index
    %c3_246 = arith.constant 3 : index
    %c0_247 = arith.constant 0 : index
    %c0_248 = arith.constant 0 : index
    %143 = vector.load %arg1[%c0_243, %c0_244, %c1_245, %c3_246, %c0_247, %c0_248] : memref<1x2x2x8x4x8xf32, #tpu.memory_space<vmem>>, vector<1x1x1x1x4x7xf32>
    %144 = vector.shape_cast %143 : vector<1x1x1x1x4x7xf32> to vector<4x7xf32>
    %cst_249 = arith.constant dense<0.000000e+00> : vector<4x7xf32>
    %145 = tpu.matmul %3, %144, %cst_249 {dimension_numbers = #tpu.dot_dimension_numbers<[1], [0], [0], [1], [0, 0, 1, 1], [], []>} : vector<4x4xf32>, vector<4x7xf32>, vector<4x7xf32> -> vector<4x7xf32>
    %146 = arith.addf %142, %145 : vector<4x7xf32>
    %c0_250 = arith.constant 0 : index
    %c0_251 = arith.constant 0 : index
    %c0_252 = arith.constant 0 : index
    %c3_253 = arith.constant 3 : index
    %c0_254 = arith.constant 0 : index
    %c1_255 = arith.constant 1 : index
    %147 = vector.load %arg1[%c0_250, %c0_251, %c0_252, %c3_253, %c0_254, %c1_255] : memref<1x2x2x8x4x8xf32, #tpu.memory_space<vmem>>, vector<1x1x1x1x4x7xf32>
    %148 = vector.shape_cast %147 : vector<1x1x1x1x4x7xf32> to vector<4x7xf32>
    %cst_256 = arith.constant dense<0.000000e+00> : vector<4x7xf32>
    %149 = tpu.matmul %5, %148, %cst_256 {dimension_numbers = #tpu.dot_dimension_numbers<[1], [0], [0], [1], [0, 0, 1, 1], [], []>} : vector<4x4xf32>, vector<4x7xf32>, vector<4x7xf32> -> vector<4x7xf32>
    %150 = arith.addf %146, %149 : vector<4x7xf32>
    %c0_257 = arith.constant 0 : index
    %c1_258 = arith.constant 1 : index
    %c0_259 = arith.constant 0 : index
    %c3_260 = arith.constant 3 : index
    %c0_261 = arith.constant 0 : index
    %c0_262 = arith.constant 0 : index
    %151 = vector.load %arg1[%c0_257, %c1_258, %c0_259, %c3_260, %c0_261, %c0_262] : memref<1x2x2x8x4x8xf32, #tpu.memory_space<vmem>>, vector<1x1x1x1x4x7xf32>
    %152 = vector.shape_cast %151 : vector<1x1x1x1x4x7xf32> to vector<4x7xf32>
    %cst_263 = arith.constant dense<0.000000e+00> : vector<4x7xf32>
    %153 = tpu.matmul %7, %152, %cst_263 {dimension_numbers = #tpu.dot_dimension_numbers<[1], [0], [0], [1], [0, 0, 1, 1], [], []>} : vector<4x4xf32>, vector<4x7xf32>, vector<4x7xf32> -> vector<4x7xf32>
    %154 = arith.addf %150, %153 : vector<4x7xf32>
    %c0_264 = arith.constant 0 : index
    %c1_265 = arith.constant 1 : index
    %c1_266 = arith.constant 1 : index
    %c3_267 = arith.constant 3 : index
    %c0_268 = arith.constant 0 : index
    %c0_269 = arith.constant 0 : index
    %155 = vector.load %arg1[%c0_264, %c1_265, %c1_266, %c3_267, %c0_268, %c0_269] : memref<1x2x2x8x4x8xf32, #tpu.memory_space<vmem>>, vector<1x1x1x1x4x7xf32>
    %156 = vector.shape_cast %155 : vector<1x1x1x1x4x7xf32> to vector<4x7xf32>
    %cst_270 = arith.constant dense<0.000000e+00> : vector<4x7xf32>
    %157 = tpu.matmul %9, %156, %cst_270 {dimension_numbers = #tpu.dot_dimension_numbers<[1], [0], [0], [1], [0, 0, 1, 1], [], []>} : vector<4x4xf32>, vector<4x7xf32>, vector<4x7xf32> -> vector<4x7xf32>
    %158 = arith.addf %154, %157 : vector<4x7xf32>
    %c0_271 = arith.constant 0 : index
    %c1_272 = arith.constant 1 : index
    %c0_273 = arith.constant 0 : index
    %c3_274 = arith.constant 3 : index
    %c0_275 = arith.constant 0 : index
    %c1_276 = arith.constant 1 : index
    %159 = vector.load %arg1[%c0_271, %c1_272, %c0_273, %c3_274, %c0_275, %c1_276] : memref<1x2x2x8x4x8xf32, #tpu.memory_space<vmem>>, vector<1x1x1x1x4x7xf32>
    %160 = vector.shape_cast %159 : vector<1x1x1x1x4x7xf32> to vector<4x7xf32>
    %cst_277 = arith.constant dense<0.000000e+00> : vector<4x7xf32>
    %161 = tpu.matmul %11, %160, %cst_277 {dimension_numbers = #tpu.dot_dimension_numbers<[1], [0], [0], [1], [0, 0, 1, 1], [], []>} : vector<4x4xf32>, vector<4x7xf32>, vector<4x7xf32> -> vector<4x7xf32>
    %162 = arith.addf %158, %161 : vector<4x7xf32>
    %c0_278 = arith.constant 0 : index
    %c0_279 = arith.constant 0 : index
    %c0_280 = arith.constant 0 : index
    %c4 = arith.constant 4 : index
    %c0_281 = arith.constant 0 : index
    %c0_282 = arith.constant 0 : index
    %163 = vector.load %arg1[%c0_278, %c0_279, %c0_280, %c4, %c0_281, %c0_282] : memref<1x2x2x8x4x8xf32, #tpu.memory_space<vmem>>, vector<1x1x1x1x4x7xf32>
    %164 = vector.shape_cast %163 : vector<1x1x1x1x4x7xf32> to vector<4x7xf32>
    %cst_283 = arith.constant dense<0.000000e+00> : vector<4x7xf32>
    %165 = tpu.matmul %13, %164, %cst_283 {dimension_numbers = #tpu.dot_dimension_numbers<[1], [0], [0], [1], [0, 0, 1, 1], [], []>} : vector<4x4xf32>, vector<4x7xf32>, vector<4x7xf32> -> vector<4x7xf32>
    %166 = arith.addf %162, %165 : vector<4x7xf32>
    %c0_284 = arith.constant 0 : index
    %c0_285 = arith.constant 0 : index
    %c1_286 = arith.constant 1 : index
    %c4_287 = arith.constant 4 : index
    %c0_288 = arith.constant 0 : index
    %c0_289 = arith.constant 0 : index
    %167 = vector.load %arg1[%c0_284, %c0_285, %c1_286, %c4_287, %c0_288, %c0_289] : memref<1x2x2x8x4x8xf32, #tpu.memory_space<vmem>>, vector<1x1x1x1x4x7xf32>
    %168 = vector.shape_cast %167 : vector<1x1x1x1x4x7xf32> to vector<4x7xf32>
    %cst_290 = arith.constant dense<0.000000e+00> : vector<4x7xf32>
    %169 = tpu.matmul %15, %168, %cst_290 {dimension_numbers = #tpu.dot_dimension_numbers<[1], [0], [0], [1], [0, 0, 1, 1], [], []>} : vector<4x4xf32>, vector<4x7xf32>, vector<4x7xf32> -> vector<4x7xf32>
    %170 = arith.addf %166, %169 : vector<4x7xf32>
    %c0_291 = arith.constant 0 : index
    %c0_292 = arith.constant 0 : index
    %c0_293 = arith.constant 0 : index
    %c4_294 = arith.constant 4 : index
    %c0_295 = arith.constant 0 : index
    %c1_296 = arith.constant 1 : index
    %171 = vector.load %arg1[%c0_291, %c0_292, %c0_293, %c4_294, %c0_295, %c1_296] : memref<1x2x2x8x4x8xf32, #tpu.memory_space<vmem>>, vector<1x1x1x1x4x7xf32>
    %172 = vector.shape_cast %171 : vector<1x1x1x1x4x7xf32> to vector<4x7xf32>
    %cst_297 = arith.constant dense<0.000000e+00> : vector<4x7xf32>
    %173 = tpu.matmul %17, %172, %cst_297 {dimension_numbers = #tpu.dot_dimension_numbers<[1], [0], [0], [1], [0, 0, 1, 1], [], []>} : vector<4x4xf32>, vector<4x7xf32>, vector<4x7xf32> -> vector<4x7xf32>
    %174 = arith.addf %170, %173 : vector<4x7xf32>
    %c0_298 = arith.constant 0 : index
    %c0_299 = arith.constant 0 : index
    %c3_300 = arith.constant 3 : index
    %c0_301 = arith.constant 0 : index
    %175 = vector.load %arg3[%c0_298, %c0_299, %c3_300, %c0_301] : memref<1x4x7x7xf32, #tpu.memory_space<vmem>>, vector<1x4x1x7xf32>
    %176 = vector.shape_cast %175 : vector<1x4x1x7xf32> to vector<4x7xf32>
    %177 = vector.shape_cast %174 : vector<4x7xf32> to vector<1x4x1x7xf32>
    tpu.vector_store %arg3[%c0_298, %c0_299, %c3_300, %c0_301], %177 {strides = array<i32>} : memref<1x4x7x7xf32, #tpu.memory_space<vmem>>, vector<1x4x1x7xf32>,
    %cst_302 = arith.constant 0.000000e+00 : f32
    %178 = vector.broadcast %cst_302 : f32 to vector<4x7xf32>
    %c0_303 = arith.constant 0 : index
    %c0_304 = arith.constant 0 : index
    %c0_305 = arith.constant 0 : index
    %c4_306 = arith.constant 4 : index
    %c0_307 = arith.constant 0 : index
    %c0_308 = arith.constant 0 : index
    %179 = vector.load %arg1[%c0_303, %c0_304, %c0_305, %c4_306, %c0_307, %c0_308] : memref<1x2x2x8x4x8xf32, #tpu.memory_space<vmem>>, vector<1x1x1x1x4x7xf32>
    %180 = vector.shape_cast %179 : vector<1x1x1x1x4x7xf32> to vector<4x7xf32>
    %cst_309 = arith.constant dense<0.000000e+00> : vector<4x7xf32>
    %181 = tpu.matmul %1, %180, %cst_309 {dimension_numbers = #tpu.dot_dimension_numbers<[1], [0], [0], [1], [0, 0, 1, 1], [], []>} : vector<4x4xf32>, vector<4x7xf32>, vector<4x7xf32> -> vector<4x7xf32>
    %182 = arith.addf %178, %181 : vector<4x7xf32>
    %c0_310 = arith.constant 0 : index
    %c0_311 = arith.constant 0 : index
    %c1_312 = arith.constant 1 : index
    %c4_313 = arith.constant 4 : index
    %c0_314 = arith.constant 0 : index
    %c0_315 = arith.constant 0 : index
    %183 = vector.load %arg1[%c0_310, %c0_311, %c1_312, %c4_313, %c0_314, %c0_315] : memref<1x2x2x8x4x8xf32, #tpu.memory_space<vmem>>, vector<1x1x1x1x4x7xf32>
    %184 = vector.shape_cast %183 : vector<1x1x1x1x4x7xf32> to vector<4x7xf32>
    %cst_316 = arith.constant dense<0.000000e+00> : vector<4x7xf32>
    %185 = tpu.matmul %3, %184, %cst_316 {dimension_numbers = #tpu.dot_dimension_numbers<[1], [0], [0], [1], [0, 0, 1, 1], [], []>} : vector<4x4xf32>, vector<4x7xf32>, vector<4x7xf32> -> vector<4x7xf32>
    %186 = arith.addf %182, %185 : vector<4x7xf32>
    %c0_317 = arith.constant 0 : index
    %c0_318 = arith.constant 0 : index
    %c0_319 = arith.constant 0 : index
    %c4_320 = arith.constant 4 : index
    %c0_321 = arith.constant 0 : index
    %c1_322 = arith.constant 1 : index
    %187 = vector.load %arg1[%c0_317, %c0_318, %c0_319, %c4_320, %c0_321, %c1_322] : memref<1x2x2x8x4x8xf32, #tpu.memory_space<vmem>>, vector<1x1x1x1x4x7xf32>
    %188 = vector.shape_cast %187 : vector<1x1x1x1x4x7xf32> to vector<4x7xf32>
    %cst_323 = arith.constant dense<0.000000e+00> : vector<4x7xf32>
    %189 = tpu.matmul %5, %188, %cst_323 {dimension_numbers = #tpu.dot_dimension_numbers<[1], [0], [0], [1], [0, 0, 1, 1], [], []>} : vector<4x4xf32>, vector<4x7xf32>, vector<4x7xf32> -> vector<4x7xf32>
    %190 = arith.addf %186, %189 : vector<4x7xf32>
    %c0_324 = arith.constant 0 : index
    %c1_325 = arith.constant 1 : index
    %c0_326 = arith.constant 0 : index
    %c4_327 = arith.constant 4 : index
    %c0_328 = arith.constant 0 : index
    %c0_329 = arith.constant 0 : index
    %191 = vector.load %arg1[%c0_324, %c1_325, %c0_326, %c4_327, %c0_328, %c0_329] : memref<1x2x2x8x4x8xf32, #tpu.memory_space<vmem>>, vector<1x1x1x1x4x7xf32>
    %192 = vector.shape_cast %191 : vector<1x1x1x1x4x7xf32> to vector<4x7xf32>
    %cst_330 = arith.constant dense<0.000000e+00> : vector<4x7xf32>
    %193 = tpu.matmul %7, %192, %cst_330 {dimension_numbers = #tpu.dot_dimension_numbers<[1], [0], [0], [1], [0, 0, 1, 1], [], []>} : vector<4x4xf32>, vector<4x7xf32>, vector<4x7xf32> -> vector<4x7xf32>
    %194 = arith.addf %190, %193 : vector<4x7xf32>
    %c0_331 = arith.constant 0 : index
    %c1_332 = arith.constant 1 : index
    %c1_333 = arith.constant 1 : index
    %c4_334 = arith.constant 4 : index
    %c0_335 = arith.constant 0 : index
    %c0_336 = arith.constant 0 : index
    %195 = vector.load %arg1[%c0_331, %c1_332, %c1_333, %c4_334, %c0_335, %c0_336] : memref<1x2x2x8x4x8xf32, #tpu.memory_space<vmem>>, vector<1x1x1x1x4x7xf32>
    %196 = vector.shape_cast %195 : vector<1x1x1x1x4x7xf32> to vector<4x7xf32>
    %cst_337 = arith.constant dense<0.000000e+00> : vector<4x7xf32>
    %197 = tpu.matmul %9, %196, %cst_337 {dimension_numbers = #tpu.dot_dimension_numbers<[1], [0], [0], [1], [0, 0, 1, 1], [], []>} : vector<4x4xf32>, vector<4x7xf32>, vector<4x7xf32> -> vector<4x7xf32>
    %198 = arith.addf %194, %197 : vector<4x7xf32>
    %c0_338 = arith.constant 0 : index
    %c1_339 = arith.constant 1 : index
    %c0_340 = arith.constant 0 : index
    %c4_341 = arith.constant 4 : index
    %c0_342 = arith.constant 0 : index
    %c1_343 = arith.constant 1 : index
    %199 = vector.load %arg1[%c0_338, %c1_339, %c0_340, %c4_341, %c0_342, %c1_343] : memref<1x2x2x8x4x8xf32, #tpu.memory_space<vmem>>, vector<1x1x1x1x4x7xf32>
    %200 = vector.shape_cast %199 : vector<1x1x1x1x4x7xf32> to vector<4x7xf32>
    %cst_344 = arith.constant dense<0.000000e+00> : vector<4x7xf32>
    %201 = tpu.matmul %11, %200, %cst_344 {dimension_numbers = #tpu.dot_dimension_numbers<[1], [0], [0], [1], [0, 0, 1, 1], [], []>} : vector<4x4xf32>, vector<4x7xf32>, vector<4x7xf32> -> vector<4x7xf32>
    %202 = arith.addf %198, %201 : vector<4x7xf32>
    %c0_345 = arith.constant 0 : index
    %c0_346 = arith.constant 0 : index
    %c0_347 = arith.constant 0 : index
    %c5 = arith.constant 5 : index
    %c0_348 = arith.constant 0 : index
    %c0_349 = arith.constant 0 : index
    %203 = vector.load %arg1[%c0_345, %c0_346, %c0_347, %c5, %c0_348, %c0_349] : memref<1x2x2x8x4x8xf32, #tpu.memory_space<vmem>>, vector<1x1x1x1x4x7xf32>
    %204 = vector.shape_cast %203 : vector<1x1x1x1x4x7xf32> to vector<4x7xf32>
    %cst_350 = arith.constant dense<0.000000e+00> : vector<4x7xf32>
    %205 = tpu.matmul %13, %204, %cst_350 {dimension_numbers = #tpu.dot_dimension_numbers<[1], [0], [0], [1], [0, 0, 1, 1], [], []>} : vector<4x4xf32>, vector<4x7xf32>, vector<4x7xf32> -> vector<4x7xf32>
    %206 = arith.addf %202, %205 : vector<4x7xf32>
    %c0_351 = arith.constant 0 : index
    %c0_352 = arith.constant 0 : index
    %c1_353 = arith.constant 1 : index
    %c5_354 = arith.constant 5 : index
    %c0_355 = arith.constant 0 : index
    %c0_356 = arith.constant 0 : index
    %207 = vector.load %arg1[%c0_351, %c0_352, %c1_353, %c5_354, %c0_355, %c0_356] : memref<1x2x2x8x4x8xf32, #tpu.memory_space<vmem>>, vector<1x1x1x1x4x7xf32>
    %208 = vector.shape_cast %207 : vector<1x1x1x1x4x7xf32> to vector<4x7xf32>
    %cst_357 = arith.constant dense<0.000000e+00> : vector<4x7xf32>
    %209 = tpu.matmul %15, %208, %cst_357 {dimension_numbers = #tpu.dot_dimension_numbers<[1], [0], [0], [1], [0, 0, 1, 1], [], []>} : vector<4x4xf32>, vector<4x7xf32>, vector<4x7xf32> -> vector<4x7xf32>
    %210 = arith.addf %206, %209 : vector<4x7xf32>
    %c0_358 = arith.constant 0 : index
    %c0_359 = arith.constant 0 : index
    %c0_360 = arith.constant 0 : index
    %c5_361 = arith.constant 5 : index
    %c0_362 = arith.constant 0 : index
    %c1_363 = arith.constant 1 : index
    %211 = vector.load %arg1[%c0_358, %c0_359, %c0_360, %c5_361, %c0_362, %c1_363] : memref<1x2x2x8x4x8xf32, #tpu.memory_space<vmem>>, vector<1x1x1x1x4x7xf32>
    %212 = vector.shape_cast %211 : vector<1x1x1x1x4x7xf32> to vector<4x7xf32>
    %cst_364 = arith.constant dense<0.000000e+00> : vector<4x7xf32>
    %213 = tpu.matmul %17, %212, %cst_364 {dimension_numbers = #tpu.dot_dimension_numbers<[1], [0], [0], [1], [0, 0, 1, 1], [], []>} : vector<4x4xf32>, vector<4x7xf32>, vector<4x7xf32> -> vector<4x7xf32>
    %214 = arith.addf %210, %213 : vector<4x7xf32>
    %c0_365 = arith.constant 0 : index
    %c0_366 = arith.constant 0 : index
    %c4_367 = arith.constant 4 : index
    %c0_368 = arith.constant 0 : index
    %215 = vector.load %arg3[%c0_365, %c0_366, %c4_367, %c0_368] : memref<1x4x7x7xf32, #tpu.memory_space<vmem>>, vector<1x4x1x7xf32>
    %216 = vector.shape_cast %215 : vector<1x4x1x7xf32> to vector<4x7xf32>
    %217 = vector.shape_cast %214 : vector<4x7xf32> to vector<1x4x1x7xf32>
    tpu.vector_store %arg3[%c0_365, %c0_366, %c4_367, %c0_368], %217 {strides = array<i32>} : memref<1x4x7x7xf32, #tpu.memory_space<vmem>>, vector<1x4x1x7xf32>,
    %cst_369 = arith.constant 0.000000e+00 : f32
    %218 = vector.broadcast %cst_369 : f32 to vector<4x7xf32>
    %c0_370 = arith.constant 0 : index
    %c0_371 = arith.constant 0 : index
    %c0_372 = arith.constant 0 : index
    %c5_373 = arith.constant 5 : index
    %c0_374 = arith.constant 0 : index
    %c0_375 = arith.constant 0 : index
    %219 = vector.load %arg1[%c0_370, %c0_371, %c0_372, %c5_373, %c0_374, %c0_375] : memref<1x2x2x8x4x8xf32, #tpu.memory_space<vmem>>, vector<1x1x1x1x4x7xf32>
    %220 = vector.shape_cast %219 : vector<1x1x1x1x4x7xf32> to vector<4x7xf32>
    %cst_376 = arith.constant dense<0.000000e+00> : vector<4x7xf32>
    %221 = tpu.matmul %1, %220, %cst_376 {dimension_numbers = #tpu.dot_dimension_numbers<[1], [0], [0], [1], [0, 0, 1, 1], [], []>} : vector<4x4xf32>, vector<4x7xf32>, vector<4x7xf32> -> vector<4x7xf32>
    %222 = arith.addf %218, %221 : vector<4x7xf32>
    %c0_377 = arith.constant 0 : index
    %c0_378 = arith.constant 0 : index
    %c1_379 = arith.constant 1 : index
    %c5_380 = arith.constant 5 : index
    %c0_381 = arith.constant 0 : index
    %c0_382 = arith.constant 0 : index
    %223 = vector.load %arg1[%c0_377, %c0_378, %c1_379, %c5_380, %c0_381, %c0_382] : memref<1x2x2x8x4x8xf32, #tpu.memory_space<vmem>>, vector<1x1x1x1x4x7xf32>
    %224 = vector.shape_cast %223 : vector<1x1x1x1x4x7xf32> to vector<4x7xf32>
    %cst_383 = arith.constant dense<0.000000e+00> : vector<4x7xf32>
    %225 = tpu.matmul %3, %224, %cst_383 {dimension_numbers = #tpu.dot_dimension_numbers<[1], [0], [0], [1], [0, 0, 1, 1], [], []>} : vector<4x4xf32>, vector<4x7xf32>, vector<4x7xf32> -> vector<4x7xf32>
    %226 = arith.addf %222, %225 : vector<4x7xf32>
    %c0_384 = arith.constant 0 : index
    %c0_385 = arith.constant 0 : index
    %c0_386 = arith.constant 0 : index
    %c5_387 = arith.constant 5 : index
    %c0_388 = arith.constant 0 : index
    %c1_389 = arith.constant 1 : index
    %227 = vector.load %arg1[%c0_384, %c0_385, %c0_386, %c5_387, %c0_388, %c1_389] : memref<1x2x2x8x4x8xf32, #tpu.memory_space<vmem>>, vector<1x1x1x1x4x7xf32>
    %228 = vector.shape_cast %227 : vector<1x1x1x1x4x7xf32> to vector<4x7xf32>
    %cst_390 = arith.constant dense<0.000000e+00> : vector<4x7xf32>
    %229 = tpu.matmul %5, %228, %cst_390 {dimension_numbers = #tpu.dot_dimension_numbers<[1], [0], [0], [1], [0, 0, 1, 1], [], []>} : vector<4x4xf32>, vector<4x7xf32>, vector<4x7xf32> -> vector<4x7xf32>
    %230 = arith.addf %226, %229 : vector<4x7xf32>
    %c0_391 = arith.constant 0 : index
    %c1_392 = arith.constant 1 : index
    %c0_393 = arith.constant 0 : index
    %c5_394 = arith.constant 5 : index
    %c0_395 = arith.constant 0 : index
    %c0_396 = arith.constant 0 : index
    %231 = vector.load %arg1[%c0_391, %c1_392, %c0_393, %c5_394, %c0_395, %c0_396] : memref<1x2x2x8x4x8xf32, #tpu.memory_space<vmem>>, vector<1x1x1x1x4x7xf32>
    %232 = vector.shape_cast %231 : vector<1x1x1x1x4x7xf32> to vector<4x7xf32>
    %cst_397 = arith.constant dense<0.000000e+00> : vector<4x7xf32>
    %233 = tpu.matmul %7, %232, %cst_397 {dimension_numbers = #tpu.dot_dimension_numbers<[1], [0], [0], [1], [0, 0, 1, 1], [], []>} : vector<4x4xf32>, vector<4x7xf32>, vector<4x7xf32> -> vector<4x7xf32>
    %234 = arith.addf %230, %233 : vector<4x7xf32>
    %c0_398 = arith.constant 0 : index
    %c1_399 = arith.constant 1 : index
    %c1_400 = arith.constant 1 : index
    %c5_401 = arith.constant 5 : index
    %c0_402 = arith.constant 0 : index
    %c0_403 = arith.constant 0 : index
    %235 = vector.load %arg1[%c0_398, %c1_399, %c1_400, %c5_401, %c0_402, %c0_403] : memref<1x2x2x8x4x8xf32, #tpu.memory_space<vmem>>, vector<1x1x1x1x4x7xf32>
    %236 = vector.shape_cast %235 : vector<1x1x1x1x4x7xf32> to vector<4x7xf32>
    %cst_404 = arith.constant dense<0.000000e+00> : vector<4x7xf32>
    %237 = tpu.matmul %9, %236, %cst_404 {dimension_numbers = #tpu.dot_dimension_numbers<[1], [0], [0], [1], [0, 0, 1, 1], [], []>} : vector<4x4xf32>, vector<4x7xf32>, vector<4x7xf32> -> vector<4x7xf32>
    %238 = arith.addf %234, %237 : vector<4x7xf32>
    %c0_405 = arith.constant 0 : index
    %c1_406 = arith.constant 1 : index
    %c0_407 = arith.constant 0 : index
    %c5_408 = arith.constant 5 : index
    %c0_409 = arith.constant 0 : index
    %c1_410 = arith.constant 1 : index
    %239 = vector.load %arg1[%c0_405, %c1_406, %c0_407, %c5_408, %c0_409, %c1_410] : memref<1x2x2x8x4x8xf32, #tpu.memory_space<vmem>>, vector<1x1x1x1x4x7xf32>
    %240 = vector.shape_cast %239 : vector<1x1x1x1x4x7xf32> to vector<4x7xf32>
    %cst_411 = arith.constant dense<0.000000e+00> : vector<4x7xf32>
    %241 = tpu.matmul %11, %240, %cst_411 {dimension_numbers = #tpu.dot_dimension_numbers<[1], [0], [0], [1], [0, 0, 1, 1], [], []>} : vector<4x4xf32>, vector<4x7xf32>, vector<4x7xf32> -> vector<4x7xf32>
    %242 = arith.addf %238, %241 : vector<4x7xf32>
    %c0_412 = arith.constant 0 : index
    %c0_413 = arith.constant 0 : index
    %c0_414 = arith.constant 0 : index
    %c6 = arith.constant 6 : index
    %c0_415 = arith.constant 0 : index
    %c0_416 = arith.constant 0 : index
    %243 = vector.load %arg1[%c0_412, %c0_413, %c0_414, %c6, %c0_415, %c0_416] : memref<1x2x2x8x4x8xf32, #tpu.memory_space<vmem>>, vector<1x1x1x1x4x7xf32>
    %244 = vector.shape_cast %243 : vector<1x1x1x1x4x7xf32> to vector<4x7xf32>
    %cst_417 = arith.constant dense<0.000000e+00> : vector<4x7xf32>
    %245 = tpu.matmul %13, %244, %cst_417 {dimension_numbers = #tpu.dot_dimension_numbers<[1], [0], [0], [1], [0, 0, 1, 1], [], []>} : vector<4x4xf32>, vector<4x7xf32>, vector<4x7xf32> -> vector<4x7xf32>
    %246 = arith.addf %242, %245 : vector<4x7xf32>
    %c0_418 = arith.constant 0 : index
    %c0_419 = arith.constant 0 : index
    %c1_420 = arith.constant 1 : index
    %c6_421 = arith.constant 6 : index
    %c0_422 = arith.constant 0 : index
    %c0_423 = arith.constant 0 : index
    %247 = vector.load %arg1[%c0_418, %c0_419, %c1_420, %c6_421, %c0_422, %c0_423] : memref<1x2x2x8x4x8xf32, #tpu.memory_space<vmem>>, vector<1x1x1x1x4x7xf32>
    %248 = vector.shape_cast %247 : vector<1x1x1x1x4x7xf32> to vector<4x7xf32>
    %cst_424 = arith.constant dense<0.000000e+00> : vector<4x7xf32>
    %249 = tpu.matmul %15, %248, %cst_424 {dimension_numbers = #tpu.dot_dimension_numbers<[1], [0], [0], [1], [0, 0, 1, 1], [], []>} : vector<4x4xf32>, vector<4x7xf32>, vector<4x7xf32> -> vector<4x7xf32>
    %250 = arith.addf %246, %249 : vector<4x7xf32>
    %c0_425 = arith.constant 0 : index
    %c0_426 = arith.constant 0 : index
    %c0_427 = arith.constant 0 : index
    %c6_428 = arith.constant 6 : index
    %c0_429 = arith.constant 0 : index
    %c1_430 = arith.constant 1 : index
    %251 = vector.load %arg1[%c0_425, %c0_426, %c0_427, %c6_428, %c0_429, %c1_430] : memref<1x2x2x8x4x8xf32, #tpu.memory_space<vmem>>, vector<1x1x1x1x4x7xf32>
    %252 = vector.shape_cast %251 : vector<1x1x1x1x4x7xf32> to vector<4x7xf32>
    %cst_431 = arith.constant dense<0.000000e+00> : vector<4x7xf32>
    %253 = tpu.matmul %17, %252, %cst_431 {dimension_numbers = #tpu.dot_dimension_numbers<[1], [0], [0], [1], [0, 0, 1, 1], [], []>} : vector<4x4xf32>, vector<4x7xf32>, vector<4x7xf32> -> vector<4x7xf32>
    %254 = arith.addf %250, %253 : vector<4x7xf32>
    %c0_432 = arith.constant 0 : index
    %c0_433 = arith.constant 0 : index
    %c5_434 = arith.constant 5 : index
    %c0_435 = arith.constant 0 : index
    %255 = vector.load %arg3[%c0_432, %c0_433, %c5_434, %c0_435] : memref<1x4x7x7xf32, #tpu.memory_space<vmem>>, vector<1x4x1x7xf32>
    %256 = vector.shape_cast %255 : vector<1x4x1x7xf32> to vector<4x7xf32>
    %257 = vector.shape_cast %254 : vector<4x7xf32> to vector<1x4x1x7xf32>
    tpu.vector_store %arg3[%c0_432, %c0_433, %c5_434, %c0_435], %257 {strides = array<i32>} : memref<1x4x7x7xf32, #tpu.memory_space<vmem>>, vector<1x4x1x7xf32>,
    %cst_436 = arith.constant 0.000000e+00 : f32
    %258 = vector.broadcast %cst_436 : f32 to vector<4x7xf32>
    %c0_437 = arith.constant 0 : index
    %c0_438 = arith.constant 0 : index
    %c0_439 = arith.constant 0 : index
    %c6_440 = arith.constant 6 : index
    %c0_441 = arith.constant 0 : index
    %c0_442 = arith.constant 0 : index
    %259 = vector.load %arg1[%c0_437, %c0_438, %c0_439, %c6_440, %c0_441, %c0_442] : memref<1x2x2x8x4x8xf32, #tpu.memory_space<vmem>>, vector<1x1x1x1x4x7xf32>
    %260 = vector.shape_cast %259 : vector<1x1x1x1x4x7xf32> to vector<4x7xf32>
    %cst_443 = arith.constant dense<0.000000e+00> : vector<4x7xf32>
    %261 = tpu.matmul %1, %260, %cst_443 {dimension_numbers = #tpu.dot_dimension_numbers<[1], [0], [0], [1], [0, 0, 1, 1], [], []>} : vector<4x4xf32>, vector<4x7xf32>, vector<4x7xf32> -> vector<4x7xf32>
    %262 = arith.addf %258, %261 : vector<4x7xf32>
    %c0_444 = arith.constant 0 : index
    %c0_445 = arith.constant 0 : index
    %c1_446 = arith.constant 1 : index
    %c6_447 = arith.constant 6 : index
    %c0_448 = arith.constant 0 : index
    %c0_449 = arith.constant 0 : index
    %263 = vector.load %arg1[%c0_444, %c0_445, %c1_446, %c6_447, %c0_448, %c0_449] : memref<1x2x2x8x4x8xf32, #tpu.memory_space<vmem>>, vector<1x1x1x1x4x7xf32>
    %264 = vector.shape_cast %263 : vector<1x1x1x1x4x7xf32> to vector<4x7xf32>
    %cst_450 = arith.constant dense<0.000000e+00> : vector<4x7xf32>
    %265 = tpu.matmul %3, %264, %cst_450 {dimension_numbers = #tpu.dot_dimension_numbers<[1], [0], [0], [1], [0, 0, 1, 1], [], []>} : vector<4x4xf32>, vector<4x7xf32>, vector<4x7xf32> -> vector<4x7xf32>
    %266 = arith.addf %262, %265 : vector<4x7xf32>
    %c0_451 = arith.constant 0 : index
    %c0_452 = arith.constant 0 : index
    %c0_453 = arith.constant 0 : index
    %c6_454 = arith.constant 6 : index
    %c0_455 = arith.constant 0 : index
    %c1_456 = arith.constant 1 : index
    %267 = vector.load %arg1[%c0_451, %c0_452, %c0_453, %c6_454, %c0_455, %c1_456] : memref<1x2x2x8x4x8xf32, #tpu.memory_space<vmem>>, vector<1x1x1x1x4x7xf32>
    %268 = vector.shape_cast %267 : vector<1x1x1x1x4x7xf32> to vector<4x7xf32>
    %cst_457 = arith.constant dense<0.000000e+00> : vector<4x7xf32>
    %269 = tpu.matmul %5, %268, %cst_457 {dimension_numbers = #tpu.dot_dimension_numbers<[1], [0], [0], [1], [0, 0, 1, 1], [], []>} : vector<4x4xf32>, vector<4x7xf32>, vector<4x7xf32> -> vector<4x7xf32>
    %270 = arith.addf %266, %269 : vector<4x7xf32>
    %c0_458 = arith.constant 0 : index
    %c1_459 = arith.constant 1 : index
    %c0_460 = arith.constant 0 : index
    %c6_461 = arith.constant 6 : index
    %c0_462 = arith.constant 0 : index
    %c0_463 = arith.constant 0 : index
    %271 = vector.load %arg1[%c0_458, %c1_459, %c0_460, %c6_461, %c0_462, %c0_463] : memref<1x2x2x8x4x8xf32, #tpu.memory_space<vmem>>, vector<1x1x1x1x4x7xf32>
    %272 = vector.shape_cast %271 : vector<1x1x1x1x4x7xf32> to vector<4x7xf32>
    %cst_464 = arith.constant dense<0.000000e+00> : vector<4x7xf32>
    %273 = tpu.matmul %7, %272, %cst_464 {dimension_numbers = #tpu.dot_dimension_numbers<[1], [0], [0], [1], [0, 0, 1, 1], [], []>} : vector<4x4xf32>, vector<4x7xf32>, vector<4x7xf32> -> vector<4x7xf32>
    %274 = arith.addf %270, %273 : vector<4x7xf32>
    %c0_465 = arith.constant 0 : index
    %c1_466 = arith.constant 1 : index
    %c1_467 = arith.constant 1 : index
    %c6_468 = arith.constant 6 : index
    %c0_469 = arith.constant 0 : index
    %c0_470 = arith.constant 0 : index
    %275 = vector.load %arg1[%c0_465, %c1_466, %c1_467, %c6_468, %c0_469, %c0_470] : memref<1x2x2x8x4x8xf32, #tpu.memory_space<vmem>>, vector<1x1x1x1x4x7xf32>
    %276 = vector.shape_cast %275 : vector<1x1x1x1x4x7xf32> to vector<4x7xf32>
    %cst_471 = arith.constant dense<0.000000e+00> : vector<4x7xf32>
    %277 = tpu.matmul %9, %276, %cst_471 {dimension_numbers = #tpu.dot_dimension_numbers<[1], [0], [0], [1], [0, 0, 1, 1], [], []>} : vector<4x4xf32>, vector<4x7xf32>, vector<4x7xf32> -> vector<4x7xf32>
    %278 = arith.addf %274, %277 : vector<4x7xf32>
    %c0_472 = arith.constant 0 : index
    %c1_473 = arith.constant 1 : index
    %c0_474 = arith.constant 0 : index
    %c6_475 = arith.constant 6 : index
    %c0_476 = arith.constant 0 : index
    %c1_477 = arith.constant 1 : index
    %279 = vector.load %arg1[%c0_472, %c1_473, %c0_474, %c6_475, %c0_476, %c1_477] : memref<1x2x2x8x4x8xf32, #tpu.memory_space<vmem>>, vector<1x1x1x1x4x7xf32>
    %280 = vector.shape_cast %279 : vector<1x1x1x1x4x7xf32> to vector<4x7xf32>
    %cst_478 = arith.constant dense<0.000000e+00> : vector<4x7xf32>
    %281 = tpu.matmul %11, %280, %cst_478 {dimension_numbers = #tpu.dot_dimension_numbers<[1], [0], [0], [1], [0, 0, 1, 1], [], []>} : vector<4x4xf32>, vector<4x7xf32>, vector<4x7xf32> -> vector<4x7xf32>
    %282 = arith.addf %278, %281 : vector<4x7xf32>
    %c0_479 = arith.constant 0 : index
    %c0_480 = arith.constant 0 : index
    %c0_481 = arith.constant 0 : index
    %c7 = arith.constant 7 : index
    %c0_482 = arith.constant 0 : index
    %c0_483 = arith.constant 0 : index
    %283 = vector.load %arg1[%c0_479, %c0_480, %c0_481, %c7, %c0_482, %c0_483] : memref<1x2x2x8x4x8xf32, #tpu.memory_space<vmem>>, vector<1x1x1x1x4x7xf32>
    %284 = vector.shape_cast %283 : vector<1x1x1x1x4x7xf32> to vector<4x7xf32>
    %cst_484 = arith.constant dense<0.000000e+00> : vector<4x7xf32>
    %285 = tpu.matmul %13, %284, %cst_484 {dimension_numbers = #tpu.dot_dimension_numbers<[1], [0], [0], [1], [0, 0, 1, 1], [], []>} : vector<4x4xf32>, vector<4x7xf32>, vector<4x7xf32> -> vector<4x7xf32>
    %286 = arith.addf %282, %285 : vector<4x7xf32>
    %c0_485 = arith.constant 0 : index
    %c0_486 = arith.constant 0 : index
    %c1_487 = arith.constant 1 : index
    %c7_488 = arith.constant 7 : index
    %c0_489 = arith.constant 0 : index
    %c0_490 = arith.constant 0 : index
    %287 = vector.load %arg1[%c0_485, %c0_486, %c1_487, %c7_488, %c0_489, %c0_490] : memref<1x2x2x8x4x8xf32, #tpu.memory_space<vmem>>, vector<1x1x1x1x4x7xf32>
    %288 = vector.shape_cast %287 : vector<1x1x1x1x4x7xf32> to vector<4x7xf32>
    %cst_491 = arith.constant dense<0.000000e+00> : vector<4x7xf32>
    %289 = tpu.matmul %15, %288, %cst_491 {dimension_numbers = #tpu.dot_dimension_numbers<[1], [0], [0], [1], [0, 0, 1, 1], [], []>} : vector<4x4xf32>, vector<4x7xf32>, vector<4x7xf32> -> vector<4x7xf32>
    %290 = arith.addf %286, %289 : vector<4x7xf32>
    %c0_492 = arith.constant 0 : index
    %c0_493 = arith.constant 0 : index
    %c0_494 = arith.constant 0 : index
    %c7_495 = arith.constant 7 : index
    %c0_496 = arith.constant 0 : index
    %c1_497 = arith.constant 1 : index
    %291 = vector.load %arg1[%c0_492, %c0_493, %c0_494, %c7_495, %c0_496, %c1_497] : memref<1x2x2x8x4x8xf32, #tpu.memory_space<vmem>>, vector<1x1x1x1x4x7xf32>
    %292 = vector.shape_cast %291 : vector<1x1x1x1x4x7xf32> to vector<4x7xf32>
    %cst_498 = arith.constant dense<0.000000e+00> : vector<4x7xf32>
    %293 = tpu.matmul %17, %292, %cst_498 {dimension_numbers = #tpu.dot_dimension_numbers<[1], [0], [0], [1], [0, 0, 1, 1], [], []>} : vector<4x4xf32>, vector<4x7xf32>, vector<4x7xf32> -> vector<4x7xf32>
    %294 = arith.addf %290, %293 : vector<4x7xf32>
    %c0_499 = arith.constant 0 : index
    %c0_500 = arith.constant 0 : index
    %c6_501 = arith.constant 6 : index
    %c0_502 = arith.constant 0 : index
    %295 = vector.load %arg3[%c0_499, %c0_500, %c6_501, %c0_502] : memref<1x4x7x7xf32, #tpu.memory_space<vmem>>, vector<1x4x1x7xf32>
    %296 = vector.shape_cast %295 : vector<1x4x1x7xf32> to vector<4x7xf32>
    %297 = vector.shape_cast %294 : vector<4x7xf32> to vector<1x4x1x7xf32>
    tpu.vector_store %arg3[%c0_499, %c0_500, %c6_501, %c0_502], %297 {strides = array<i32>} : memref<1x4x7x7xf32, #tpu.memory_space<vmem>>, vector<1x4x1x7xf32>,
    return
  }
  func.func @transform_0(%arg0: i32) -> (i32, i32, i32, i32, i32, i32) {
    %c0_i32 = arith.constant 0 : i32
    %c0_i32_0 = arith.constant 0 : i32
    %c0_i32_1 = arith.constant 0 : i32
    %c0_i32_2 = arith.constant 0 : i32
    %c0_i32_3 = arith.constant 0 : i32
    %c0_i32_4 = arith.constant 0 : i32
    return %arg0, %c0_i32, %c0_i32_0, %c0_i32_1, %c0_i32_2, %c0_i32_3 : i32, i32, i32, i32, i32, i32
  }
  func.func @transform_1(%arg0: i32) -> (i32, i32, i32, i32) {
    %c0_i32 = arith.constant 0 : i32
    %c0_i32_0 = arith.constant 0 : i32
    %c0_i32_1 = arith.constant 0 : i32
    %c0_i32_2 = arith.constant 0 : i32
    %c0_i32_3 = arith.constant 0 : i32
    return %c0_i32, %c0_i32_0, %c0_i32_1, %c0_i32_2 : i32, i32, i32, i32
  }
  func.func @transform_2(%arg0: i32) -> (i32, i32, i32, i32) {
    %c0_i32 = arith.constant 0 : i32
    %c0_i32_0 = arith.constant 0 : i32
    %c0_i32_1 = arith.constant 0 : i32
    %c0_i32_2 = arith.constant 0 : i32
    return %arg0, %c0_i32, %c0_i32_0, %c0_i32_1 : i32, i32, i32, i32
  }
}

</mosaic_0001>

<llo_original>
// kernel: tpu_custom_call.1
$region0: #{tpu_custom_call.1}
  #allocation0 [shape = 'u32[]', space=smem, size = 0x4, offset = 0x4, fixed_abs, tag = 'smem constant byte address 0x4 - core index']
  #allocation1 [shape = 'u32[144,128]{1,0:T(1,128)}', space=vmem, size = 0x12000, scoped, tag = 'internal scratch']
  %s0 = inlined_call_operand.hbm [shape: f32[2,2,2,8,4,8], index: 0, kind: input, shape index: {}]
  %s1 = inlined_call_operand.hbm [shape: f32[3,3,4,4], index: 1, kind: input, shape index: {}]
  %s2 = inlined_call_operand.vmem [shape: f32[2,4,7,7], index: 2, kind: output, shape index: {}]
  %s3 = sld [smem:[#allocation0]]
  $region49: #{tpu_custom_call.1} parent=0
    _
  %s5 = ssub.s32 1, %s3
  %s6 = scalar_select 0, %s5, %s3
  $region1: #{tpu_custom_call.1} parent=0
    #allocation2 [shape = 'u8[131072]{0}', space=vmem, size = 0x20000, scoped, tag = 'input window, operand 0']
    #allocation3 [shape = 's32[2]{0}', space=sflag, size = 0x8, scoped, tag = 'scoped memory for tpu_custom_call.1']
    #allocation4 [shape = 'u8[18432]{0}', space=vmem, size = 0x4800, scoped, tag = 'input window, operand 1, single buffered']
    #allocation5 [shape = 's32[1]{0}', space=sflag, size = 0x4, scoped, tag = 'scoped memory for tpu_custom_call.1']
    %7 = vsyncpa [#allocation3], 0
    %s8 = scalar_lea.sflag [#allocation3], 1
    %9 = vsyncpa %s8, 0
    %10 = vsyncpa [#allocation5], 0
    loop: start=0, step=1, limit=4
    $region2: #{tpu_custom_call.1} parent=1 // loop_pre_header
      _
    $region3: #{tpu_custom_call.1} parent=1 // loop_header
      %s12 = sphi 0, %s16
      %p13 = scmp.ge.s32.totalorder %s12, 4
      %s22 = sphi 0, %s24
      %s25 = sphi 0, %s22
      %s26 = sphi 0, %s25
      %s42 = sphi 0, %s26
      %s46 = sphi 0, %s46
      %s48 = sphi 0, %s46
      %s49 = sphi 0, %s48
      %s63 = sphi 0, %s49
      %s69 = sphi 0, %s71
      %s72 = sphi 0, %s69
      %s73 = sphi 0, %s72
      %s89 = sphi 0, %s73
    $region4: #{tpu_custom_call.1} parent=1 // loop_header_branch
      %15 = sbr.rel (%p13) target = $region8
    $region5: #{tpu_custom_call.1} parent=1 // loop_body
      %s17 = ssub.s32 %s12, 1
      %s18 = ssub.s32 %s12, 2
      %s19 = sadd.s32 %s12, 1
      %s20 = ssub.s32 %s12, %s19
      %p21 = scmp.eq.s32.totalorder %s20, 0
      %s23 = sadd.s32 %s22, 1
      %s24 = scalar_select %p21, %s22, %s23
      %p27 = pneg %p21
      %p28 = scmp.eq.s32.totalorder %s12, 1
      %p29 = por %p27, %p28
      %p30 = scmp.ne.s32.totalorder %s22, %s25
      %p31 = scmp.eq.s32.totalorder %s12, 0
      %p32 = por %p30, %p31
      %p33 = scmp.ne.s32.totalorder %s22, %s25
      %p34 = scmp.eq.s32.totalorder %s17, 1
      %p35 = por %p33, %p34
      %p36 = scmp.ne.s32.totalorder %s25, %s26
      %p37 = scmp.eq.s32.totalorder %s17, 0
      %p38 = por %p36, %p37
      %p39 = scmp.ne.s32.totalorder %s25, %s26
      %p40 = scmp.eq.s32.totalorder %s18, 1
      %p41 = por %p39, %p40
      %p43 = scmp.ne.s32.totalorder %s26, %s42
      %p44 = scmp.eq.s32.totalorder %s18, 0
      %p45 = por %p43, %p44
      %s47 = sadd.s32 %s46, 1
      %p50 = scmp.eq.s32.totalorder %s12, 1
      %p51 = scmp.ne.s32.totalorder %s46, %s48
      %p52 = scmp.eq.s32.totalorder %s12, 0
      %p53 = por %p51, %p52
      %p54 = scmp.ne.s32.totalorder %s46, %s48
      %p55 = scmp.eq.s32.totalorder %s17, 1
      %p56 = por %p54, %p55
      %p57 = scmp.ne.s32.totalorder %s48, %s49
      %p58 = scmp.eq.s32.totalorder %s17, 0
      %p59 = por %p57, %p58
      %p60 = scmp.ne.s32.totalorder %s48, %s49
      %p61 = scmp.eq.s32.totalorder %s18, 1
      %p62 = por %p60, %p61
      %p64 = scmp.ne.s32.totalorder %s49, %s63
      %p65 = scmp.eq.s32.totalorder %s18, 0
      %p66 = por %p64, %p65
      %s67 = ssub.s32 %s12, %s19
      %p68 = scmp.eq.s32.totalorder %s67, 0
      %s70 = sadd.s32 %s69, 1
      %s71 = scalar_select %p68, %s69, %s70
      %p74 = pneg %p68
      %p75 = scmp.eq.s32.totalorder %s12, 1
      %p76 = por %p74, %p75
      %p77 = scmp.ne.s32.totalorder %s69, %s72
      %p78 = scmp.eq.s32.totalorder %s12, 0
      %p79 = por %p77, %p78
      %p80 = scmp.ne.s32.totalorder %s69, %s72
      %p81 = scmp.eq.s32.totalorder %s17, 1
      %p82 = por %p80, %p81
      %p83 = scmp.ne.s32.totalorder %s72, %s73
      %p84 = scmp.eq.s32.totalorder %s17, 0
      %p85 = por %p83, %p84
      %p86 = scmp.ne.s32.totalorder %s72, %s73
      %p87 = scmp.eq.s32.totalorder %s18, 1
      %p88 = por %p86, %p87
      %p90 = scmp.ne.s32.totalorder %s73, %s89
      %p91 = scmp.eq.s32.totalorder %s18, 0
      %p92 = por %p90, %p91
      %p93 = scmp.le.s32.totalorder 1, %s12
      %p94 = scmp.lt.s32.totalorder %s12, 3
      %p95 = pnand %p93, %p94
      %p96 = pneg %p95
      // Predicated region
      $region9: #{tpu_custom_call.1} parent=5 // pred_check
        _
      $region10: #{tpu_custom_call.1} parent=5 // pred_check_branch
        %98 = sbr.rel (%p95) target = $region12
      $region11: #{tpu_custom_call.1} parent=5 // pred_region
        %s99 = ssub.s32 %s12, 1
        // Predicated region
        $region13: #{tpu_custom_call.1} parent=11 // pred_check
          %p100 = pneg %p59
        $region14: #{tpu_custom_call.1} parent=11 // pred_check_branch
          %102 = sbr.rel (%p100) target = $region16
        $region15: #{tpu_custom_call.1} parent=11 // pred_region
          %s104 = ssub.s32 576, 576
          %105 = vsyncadd [#allocation5], %s104
          %s106 = sshll.u32 [#allocation4], 4
          %s107 = int_to_ptr.vmem [resolvable:$true] %s106
          %112 = dma.hbm_to_vmem [thread:$0]  %s1, 576, %s107, [#allocation5], 64, 64, 4
        $region16: #{tpu_custom_call.1} parent=11 // pred_fallthru
          _
      $region12: #{tpu_custom_call.1} parent=5 // pred_fallthru
        _
      %p113 = scmp.lt.s32.totalorder %s12, 2
      // Predicated region
      $region17: #{tpu_custom_call.1} parent=5 // pred_check
        %p114 = pneg %p113
      $region18: #{tpu_custom_call.1} parent=5 // pred_check_branch
        %116 = sbr.rel (%p114) target = $region20
      $region19: #{tpu_custom_call.1} parent=5 // pred_region
        // Predicated region
        $region21: #{tpu_custom_call.1} parent=19 // pred_check
          %p117 = pneg %p32
        $region22: #{tpu_custom_call.1} parent=19 // pred_check_branch
          %119 = sbr.rel (%p117) target = $region24
        $region23: #{tpu_custom_call.1} parent=19 // pred_region
          %s120 = sand.u32 %s22, 1
          %s121 = scalar_lea.sflag [#allocation3], %s120
          %s122 = sand.u32 %s22, 1
          %s123 = smul.addr %s122, 128
          %s124 = scalar_lea.vmem [#allocation2], %s123
          %s126 = ssub.s32 2048, 2048
          %127 = vsyncadd %s121, %s126
          %s128 = smul.addr %s12, 32
          %s129 = smul.addr %s128, 64
          %s130 = scalar_lea.hbm %s0, %s129
          %s131 = sshll.u32 %s124, 4
          %s132 = int_to_ptr.vmem [resolvable:$true] %s131
          %137 = dma.hbm_to_vmem [thread:$0]  %s130, 2048, %s132, %s121, 64, 64, 4
        $region24: #{tpu_custom_call.1} parent=19 // pred_fallthru
          _
      $region20: #{tpu_custom_call.1} parent=5 // pred_fallthru
        _
      %p138 = scmp.le.s32.totalorder 1, %s12
      %p139 = scmp.lt.s32.totalorder %s12, 3
      %p140 = pnand %p138, %p139
      %p141 = pneg %p140
      // Predicated region
      $region25: #{tpu_custom_call.1} parent=5 // pred_check
        _
      $region26: #{tpu_custom_call.1} parent=5 // pred_check_branch
        %143 = sbr.rel (%p140) target = $region28
      $region27: #{tpu_custom_call.1} parent=5 // pred_region
        %s144 = ssub.s32 %s12, 1
        %s145 = sand.u32 %s25, 1
        %s146 = scalar_lea.sflag [#allocation3], %s145
        %s147 = sand.u32 %s25, 1
        %s148 = smul.addr %s147, 128
        %s149 = scalar_lea.vmem [#allocation2], %s148
        // Predicated region
        $region29: #{tpu_custom_call.1} parent=27 // pred_check
          %p150 = pneg %p38
        $region30: #{tpu_custom_call.1} parent=27 // pred_check_branch
          %152 = sbr.rel (%p150) target = $region32
        $region31: #{tpu_custom_call.1} parent=27 // pred_region
          %153 = dma.done %s146, 2048
        $region32: #{tpu_custom_call.1} parent=27 // pred_fallthru
          _
        // Predicated region
        $region33: #{tpu_custom_call.1} parent=27 // pred_check
          %p154 = pneg %p59
        $region34: #{tpu_custom_call.1} parent=27 // pred_check_branch
          %156 = sbr.rel (%p154) target = $region36
        $region35: #{tpu_custom_call.1} parent=27 // pred_region
          %157 = dma.done [#allocation5], 576
        $region36: #{tpu_custom_call.1} parent=27 // pred_fallthru
          _
        %s158 = sand.u32 %s25, 1
        %s159 = scalar_lea.sflag [#allocation3], %s158
        %s160 = sand.u32 %s25, 1
        %s161 = smul.addr %s160, 128
        %s162 = scalar_lea.vmem [#allocation2], %s161
        %p163 = pneg %p38
        %p164 = pneg %p35
        %p165 = pneg %p59
        %p166 = pneg %p56
        %p167 = pneg %p85
        %p168 = pneg %p82
        %p169 = scmp.lt.s32.totalorder %s17, 1
        %s170 = scalar_select %p169, %s17, 1
        %s171 = smul.addr %s170, 4
        %s172 = smul.addr %s171, 8
        %s173 = scalar_lea.vmem %s2, %s172
        %p174 = scmp.lt.s32.totalorder %s17, 1
        %s175 = scalar_select %p174, %s17, 1
        %s176 = smul.addr %s175, 4
        %s177 = smul.addr %s176, 8
        %s178 = scalar_lea.vmem %s2, %s177
        %v179 = vld [vmem:[#allocation4] sm:$0xf]
        %s180 = scalar_lea.vmem [#allocation4], 4
        %v181 = vld [vmem:[%s180] sm:$0xf]
        %s182 = scalar_lea.vmem [#allocation4], 8
        %v183 = vld [vmem:[%s182] sm:$0xf]
        %s184 = scalar_lea.vmem [#allocation4], 12
        %v185 = vld [vmem:[%s184] sm:$0xf]
        %s186 = scalar_lea.vmem [#allocation4], 16
        %v187 = vld [vmem:[%s186] sm:$0xf]
        %s188 = scalar_lea.vmem [#allocation4], 20
        %v189 = vld [vmem:[%s188] sm:$0xf]
        %s190 = scalar_lea.vmem [#allocation4], 24
        %v191 = vld [vmem:[%s190] sm:$0xf]
        %s192 = scalar_lea.vmem [#allocation4], 28
        %v193 = vld [vmem:[%s192] sm:$0xf]
        %s194 = scalar_lea.vmem [#allocation4], 32
        %v195 = vld [vmem:[%s194] sm:$0xf]
        %v196 = vld [vmem:[%s149] sm:$0xf]
        %s197 = scalar_lea.vmem %s149, 32 [#allocation2]
        %v198 = vld [vmem:[%s197] sm:$0xf]
        %vm199 = vcmask 31744
        %v201 = vsel %vm199, %v181, 0
        %vm203 = vcmask 1043456
        %v205 = vsel %vm203, %v198, 0
        %207 = vmatprep.subr.mxu0 0.0
        %208 = vmatpush1.msra.mxu0 %v205
        %209 = vmatprep.subr.mxu0 0.0
        %210 = vmatpush1.msra.mxu0 0.0
        %211 = vmatprep.subr.mxu0 0.0
        %212 = vmatpush1.msra.mxu0 0.0
        %213 = vmatprep.subr.mxu0 0.0
        %214 = vmatpush1.msra.mxu0 0.0
        %215 = vmatprep.subr.mxu0 0.0
        %216 = vmatpush1.msra.mxu0 0.0
        %217 = vmatprep.subr.mxu0 0.0
        %218 = vmatpush1.msra.mxu0 0.0
        %219 = vmatprep.subr.mxu0 0.0
        %220 = vmatpush1.msra.mxu0 0.0
        %221 = vmatprep.subr.mxu0 0.0
        %222 = vmatpush1.msra.mxu0 0.0
        %223 = vmatprep.subr.mxu0 0.0
        %224 = vmatpush1.msra.mxu0 0.0
        %225 = vmatprep.subr.mxu0 0.0
        %226 = vmatpush1.msra.mxu0 0.0
        %227 = vmatprep.subr.mxu0 0.0
        %228 = vmatpush1.msra.mxu0 0.0
        %229 = vmatprep.subr.mxu0 0.0
        %230 = vmatpush1.msra.mxu0 0.0
        %231 = vmatprep.subr.mxu0 0.0
        %232 = vmatpush1.msra.mxu0 0.0
        %233 = vmatprep.subr.mxu0 0.0
        %234 = vmatpush1.msra.mxu0 0.0
        %235 = vmatprep.subr.mxu0 0.0
        %236 = vmatpush1.msra.mxu0 0.0
        %237 = vmatprep.subr.mxu0 0.0
        %238 = vmatpush1.msra.mxu0 0.0
        %239 = vmatprep.subr.mxu0 0.0
        %240 = vmatpush1.msra.mxu0 0.0
        %241 = vmatprep.subr.mxu0 0.0
        %242 = vmatpush1.msra.mxu0 0.0
        %243 = vmatprep.subr.mxu0 0.0
        %244 = vmatpush1.msra.mxu0 0.0
        %245 = vmatprep.subr.mxu0 0.0
        %246 = vmatpush1.msra.mxu0 0.0
        %247 = vmatprep.subr.mxu0 0.0
        %248 = vmatpush1.msra.mxu0 0.0
        %249 = vmatprep.subr.mxu0 0.0
        %250 = vmatpush1.msra.mxu0 0.0
        %251 = vmatprep.subr.mxu0 0.0
        %252 = vmatpush1.msra.mxu0 0.0
        %253 = vmatprep.subr.mxu0 0.0
        %254 = vmatpush1.msra.mxu0 0.0
        %255 = vmatprep.subr.mxu0 0.0
        %256 = vmatpush1.msra.mxu0 0.0
        %257 = vmatprep.subr.mxu0 0.0
        %258 = vmatpush1.msra.mxu0 0.0
        %259 = vmatprep.subr.mxu0 0.0
        %260 = vmatpush1.msra.mxu0 0.0
        %261 = vmatprep.subr.mxu0 0.0
        %262 = vmatpush1.msra.mxu0 0.0
        %263 = vmatprep.subr.mxu0 0.0
        %264 = vmatpush1.msra.mxu0 0.0
        %265 = vmatprep.subr.mxu0 0.0
        %266 = vmatpush1.msra.mxu0 0.0
        %267 = vmatprep.subr.mxu0 0.0
        %268 = vmatpush1.msra.mxu0 0.0
        %269 = vmatprep.subr.mxu0 0.0
        %270 = vmatpush1.msra.mxu0 0.0
        %271 = vmatprep.mubr.f32.mxu0 0.0
        %272 = vmatmul.mubr.f32.gmra.mrb[0].mxu0 %v201
        %v273 = vpop.f32.mrb[0].mxu0
        %v274 = vadd.f32 0.0, %v273
        %v275 = vpop.f32.mrb[0].mxu0
        %276 = vdwg.mxu0
        %v278 = vsel %vm199, %v179, 0
        %v281 = vsel %vm203, %v196, 0
        %283 = vmatprep.subr.mxu0 0.0
        %284 = vmatpush1.msra.mxu0 %v281
        %285 = vmatprep.subr.mxu0 0.0
        %286 = vmatpush1.msra.mxu0 0.0
        %287 = vmatprep.subr.mxu0 0.0
        %288 = vmatpush1.msra.mxu0 0.0
        %289 = vmatprep.subr.mxu0 0.0
        %290 = vmatpush1.msra.mxu0 0.0
        %291 = vmatprep.subr.mxu0 0.0
        %292 = vmatpush1.msra.mxu0 0.0
        %293 = vmatprep.subr.mxu0 0.0
        %294 = vmatpush1.msra.mxu0 0.0
        %295 = vmatprep.subr.mxu0 0.0
        %296 = vmatpush1.msra.mxu0 0.0
        %297 = vmatprep.subr.mxu0 0.0
        %298 = vmatpush1.msra.mxu0 0.0
        %299 = vmatprep.subr.mxu0 0.0
        %300 = vmatpush1.msra.mxu0 0.0
        %301 = vmatprep.subr.mxu0 0.0
        %302 = vmatpush1.msra.mxu0 0.0
        %303 = vmatprep.subr.mxu0 0.0
        %304 = vmatpush1.msra.mxu0 0.0
        %305 = vmatprep.subr.mxu0 0.0
        %306 = vmatpush1.msra.mxu0 0.0
        %307 = vmatprep.subr.mxu0 0.0
        %308 = vmatpush1.msra.mxu0 0.0
        %309 = vmatprep.subr.mxu0 0.0
        %310 = vmatpush1.msra.mxu0 0.0
        %311 = vmatprep.subr.mxu0 0.0
        %312 = vmatpush1.msra.mxu0 0.0
        %313 = vmatprep.subr.mxu0 0.0
        %314 = vmatpush1.msra.mxu0 0.0
        %315 = vmatprep.subr.mxu0 0.0
        %316 = vmatpush1.msra.mxu0 0.0
        %317 = vmatprep.subr.mxu0 0.0
        %318 = vmatpush1.msra.mxu0 0.0
        %319 = vmatprep.subr.mxu0 0.0
        %320 = vmatpush1.msra.mxu0 0.0
        %321 = vmatprep.subr.mxu0 0.0
        %322 = vmatpush1.msra.mxu0 0.0
        %323 = vmatprep.subr.mxu0 0.0
        %324 = vmatpush1.msra.mxu0 0.0
        %325 = vmatprep.subr.mxu0 0.0
        %326 = vmatpush1.msra.mxu0 0.0
        %327 = vmatprep.subr.mxu0 0.0
        %328 = vmatpush1.msra.mxu0 0.0
        %329 = vmatprep.subr.mxu0 0.0
        %330 = vmatpush1.msra.mxu0 0.0
        %331 = vmatprep.subr.mxu0 0.0
        %332 = vmatpush1.msra.mxu0 0.0
        %333 = vmatprep.subr.mxu0 0.0
        %334 = vmatpush1.msra.mxu0 0.0
        %335 = vmatprep.subr.mxu0 0.0
        %336 = vmatpush1.msra.mxu0 0.0
        %337 = vmatprep.subr.mxu0 0.0
        %338 = vmatpush1.msra.mxu0 0.0
        %339 = vmatprep.subr.mxu0 0.0
        %340 = vmatpush1.msra.mxu0 0.0
        %341 = vmatprep.subr.mxu0 0.0
        %342 = vmatpush1.msra.mxu0 0.0
        %343 = vmatprep.subr.mxu0 0.0
        %344 = vmatpush1.msra.mxu0 0.0
        %345 = vmatprep.subr.mxu0 0.0
        %346 = vmatpush1.msra.mxu0 0.0
        %347 = vmatprep.mubr.f32.mxu0 0.0
        %348 = vmatmul.mubr.f32.gmra.mrb[0].mxu0 %v278
        %v349 = vpop.f32.mrb[0].mxu0
        %v350 = vadd.f32 %v274, %v349
        %v351 = vpop.f32.mrb[0].mxu0
        %352 = vdwg.mxu0
        %353 = vrot.lane.b32.xlu0 %v196, 127
        %v354 = vpop.permute.xlu0 %353
        %v356 = vsel %vm199, %v183, 0
        %v358 = vsel %vm203, %v354, 0
        %360 = vmatprep.subr.mxu0 0.0
        %361 = vmatpush1.msra.mxu0 %v358
        %362 = vmatprep.subr.mxu0 0.0
        %363 = vmatpush1.msra.mxu0 0.0
        %364 = vmatprep.subr.mxu0 0.0
        %365 = vmatpush1.msra.mxu0 0.0
        %366 = vmatprep.subr.mxu0 0.0
        %367 = vmatpush1.msra.mxu0 0.0
        %368 = vmatprep.subr.mxu0 0.0
        %369 = vmatpush1.msra.mxu0 0.0
        %370 = vmatprep.subr.mxu0 0.0
        %371 = vmatpush1.msra.mxu0 0.0
        %372 = vmatprep.subr.mxu0 0.0
        %373 = vmatpush1.msra.mxu0 0.0
        %374 = vmatprep.subr.mxu0 0.0
        %375 = vmatpush1.msra.mxu0 0.0
        %376 = vmatprep.subr.mxu0 0.0
        %377 = vmatpush1.msra.mxu0 0.0
        %378 = vmatprep.subr.mxu0 0.0
        %379 = vmatpush1.msra.mxu0 0.0
        %380 = vmatprep.subr.mxu0 0.0
        %381 = vmatpush1.msra.mxu0 0.0
        %382 = vmatprep.subr.mxu0 0.0
        %383 = vmatpush1.msra.mxu0 0.0
        %384 = vmatprep.subr.mxu0 0.0
        %385 = vmatpush1.msra.mxu0 0.0
        %386 = vmatprep.subr.mxu0 0.0
        %387 = vmatpush1.msra.mxu0 0.0
        %388 = vmatprep.subr.mxu0 0.0
        %389 = vmatpush1.msra.mxu0 0.0
        %390 = vmatprep.subr.mxu0 0.0
        %391 = vmatpush1.msra.mxu0 0.0
        %392 = vmatprep.subr.mxu0 0.0
        %393 = vmatpush1.msra.mxu0 0.0
        %394 = vmatprep.subr.mxu0 0.0
        %395 = vmatpush1.msra.mxu0 0.0
        %396 = vmatprep.subr.mxu0 0.0
        %397 = vmatpush1.msra.mxu0 0.0
        %398 = vmatprep.subr.mxu0 0.0
        %399 = vmatpush1.msra.mxu0 0.0
        %400 = vmatprep.subr.mxu0 0.0
        %401 = vmatpush1.msra.mxu0 0.0
        %402 = vmatprep.subr.mxu0 0.0
        %403 = vmatpush1.msra.mxu0 0.0
        %404 = vmatprep.subr.mxu0 0.0
        %405 = vmatpush1.msra.mxu0 0.0
        %406 = vmatprep.subr.mxu0 0.0
        %407 = vmatpush1.msra.mxu0 0.0
        %408 = vmatprep.subr.mxu0 0.0
        %409 = vmatpush1.msra.mxu0 0.0
        %410 = vmatprep.subr.mxu0 0.0
        %411 = vmatpush1.msra.mxu0 0.0
        %412 = vmatprep.subr.mxu0 0.0
        %413 = vmatpush1.msra.mxu0 0.0
        %414 = vmatprep.subr.mxu0 0.0
        %415 = vmatpush1.msra.mxu0 0.0
        %416 = vmatprep.subr.mxu0 0.0
        %417 = vmatpush1.msra.mxu0 0.0
        %418 = vmatprep.subr.mxu0 0.0
        %419 = vmatpush1.msra.mxu0 0.0
        %420 = vmatprep.subr.mxu0 0.0
        %421 = vmatpush1.msra.mxu0 0.0
        %422 = vmatprep.subr.mxu0 0.0
        %423 = vmatpush1.msra.mxu0 0.0
        %424 = vmatprep.mubr.f32.mxu0 0.0
        %425 = vmatmul.mubr.f32.gmra.mrb[0].mxu0 %v356
        %v426 = vpop.f32.mrb[0].mxu0
        %v427 = vadd.f32 0.0, %v426
        %v428 = vpop.f32.mrb[0].mxu0
        %429 = vdwg.mxu0
        %v430 = vadd.f32 %v350, %v427
        %s431 = scalar_lea.vmem %s149, 64 [#allocation2]
        %v432 = vld [vmem:[%s431] sm:$0xf]
        %v434 = vsel %vm199, %v185, 0
        %v437 = vsel %vm203, %v432, 0
        %439 = vmatprep.subr.mxu0 0.0
        %440 = vmatpush1.msra.mxu0 %v437
        %441 = vmatprep.subr.mxu0 0.0
        %442 = vmatpush1.msra.mxu0 0.0
        %443 = vmatprep.subr.mxu0 0.0
        %444 = vmatpush1.msra.mxu0 0.0
        %445 = vmatprep.subr.mxu0 0.0
        %446 = vmatpush1.msra.mxu0 0.0
        %447 = vmatprep.subr.mxu0 0.0
        %448 = vmatpush1.msra.mxu0 0.0
        %449 = vmatprep.subr.mxu0 0.0
        %450 = vmatpush1.msra.mxu0 0.0
        %451 = vmatprep.subr.mxu0 0.0
        %452 = vmatpush1.msra.mxu0 0.0
        %453 = vmatprep.subr.mxu0 0.0
        %454 = vmatpush1.msra.mxu0 0.0
        %455 = vmatprep.subr.mxu0 0.0
        %456 = vmatpush1.msra.mxu0 0.0
        %457 = vmatprep.subr.mxu0 0.0
        %458 = vmatpush1.msra.mxu0 0.0
        %459 = vmatprep.subr.mxu0 0.0
        %460 = vmatpush1.msra.mxu0 0.0
        %461 = vmatprep.subr.mxu0 0.0
        %462 = vmatpush1.msra.mxu0 0.0
        %463 = vmatprep.subr.mxu0 0.0
        %464 = vmatpush1.msra.mxu0 0.0
        %465 = vmatprep.subr.mxu0 0.0
        %466 = vmatpush1.msra.mxu0 0.0
        %467 = vmatprep.subr.mxu0 0.0
        %468 = vmatpush1.msra.mxu0 0.0
        %469 = vmatprep.subr.mxu0 0.0
        %470 = vmatpush1.msra.mxu0 0.0
        %471 = vmatprep.subr.mxu0 0.0
        %472 = vmatpush1.msra.mxu0 0.0
        %473 = vmatprep.subr.mxu0 0.0
        %474 = vmatpush1.msra.mxu0 0.0
        %475 = vmatprep.subr.mxu0 0.0
        %476 = vmatpush1.msra.mxu0 0.0
        %477 = vmatprep.subr.mxu0 0.0
        %478 = vmatpush1.msra.mxu0 0.0
        %479 = vmatprep.subr.mxu0 0.0
        %480 = vmatpush1.msra.mxu0 0.0
        %481 = vmatprep.subr.mxu0 0.0
        %482 = vmatpush1.msra.mxu0 0.0
        %483 = vmatprep.subr.mxu0 0.0
        %484 = vmatpush1.msra.mxu0 0.0
        %485 = vmatprep.subr.mxu0 0.0
        %486 = vmatpush1.msra.mxu0 0.0
        %487 = vmatprep.subr.mxu0 0.0
        %488 = vmatpush1.msra.mxu0 0.0
        %489 = vmatprep.subr.mxu0 0.0
        %490 = vmatpush1.msra.mxu0 0.0
        %491 = vmatprep.subr.mxu0 0.0
        %492 = vmatpush1.msra.mxu0 0.0
        %493 = vmatprep.subr.mxu0 0.0
        %494 = vmatpush1.msra.mxu0 0.0
        %495 = vmatprep.subr.mxu0 0.0
        %496 = vmatpush1.msra.mxu0 0.0
        %497 = vmatprep.subr.mxu0 0.0
        %498 = vmatpush1.msra.mxu0 0.0
        %499 = vmatprep.subr.mxu0 0.0
        %500 = vmatpush1.msra.mxu0 0.0
        %501 = vmatprep.subr.mxu0 0.0
        %502 = vmatpush1.msra.mxu0 0.0
        %503 = vmatprep.mubr.f32.mxu0 0.0
        %504 = vmatmul.mubr.f32.gmra.mrb[0].mxu0 %v434
        %v505 = vpop.f32.mrb[0].mxu0
        %v506 = vadd.f32 0.0, %v505
        %v507 = vpop.f32.mrb[0].mxu0
        %508 = vdwg.mxu0
        %v509 = vadd.f32 %v430, %v506
        %s510 = scalar_lea.vmem %s149, 96 [#allocation2]
        %v511 = vld [vmem:[%s510] sm:$0xf]
        %v513 = vsel %vm199, %v187, 0
        %v516 = vsel %vm203, %v511, 0
        %518 = vmatprep.subr.mxu0 0.0
        %519 = vmatpush1.msra.mxu0 %v516
        %520 = vmatprep.subr.mxu0 0.0
        %521 = vmatpush1.msra.mxu0 0.0
        %522 = vmatprep.subr.mxu0 0.0
        %523 = vmatpush1.msra.mxu0 0.0
        %524 = vmatprep.subr.mxu0 0.0
        %525 = vmatpush1.msra.mxu0 0.0
        %526 = vmatprep.subr.mxu0 0.0
        %527 = vmatpush1.msra.mxu0 0.0
        %528 = vmatprep.subr.mxu0 0.0
        %529 = vmatpush1.msra.mxu0 0.0
        %530 = vmatprep.subr.mxu0 0.0
        %531 = vmatpush1.msra.mxu0 0.0
        %532 = vmatprep.subr.mxu0 0.0
        %533 = vmatpush1.msra.mxu0 0.0
        %534 = vmatprep.subr.mxu0 0.0
        %535 = vmatpush1.msra.mxu0 0.0
        %536 = vmatprep.subr.mxu0 0.0
        %537 = vmatpush1.msra.mxu0 0.0
        %538 = vmatprep.subr.mxu0 0.0
        %539 = vmatpush1.msra.mxu0 0.0
        %540 = vmatprep.subr.mxu0 0.0
        %541 = vmatpush1.msra.mxu0 0.0
        %542 = vmatprep.subr.mxu0 0.0
        %543 = vmatpush1.msra.mxu0 0.0
        %544 = vmatprep.subr.mxu0 0.0
        %545 = vmatpush1.msra.mxu0 0.0
        %546 = vmatprep.subr.mxu0 0.0
        %547 = vmatpush1.msra.mxu0 0.0
        %548 = vmatprep.subr.mxu0 0.0
        %549 = vmatpush1.msra.mxu0 0.0
        %550 = vmatprep.subr.mxu0 0.0
        %551 = vmatpush1.msra.mxu0 0.0
        %552 = vmatprep.subr.mxu0 0.0
        %553 = vmatpush1.msra.mxu0 0.0
        %554 = vmatprep.subr.mxu0 0.0
        %555 = vmatpush1.msra.mxu0 0.0
        %556 = vmatprep.subr.mxu0 0.0
        %557 = vmatpush1.msra.mxu0 0.0
        %558 = vmatprep.subr.mxu0 0.0
        %559 = vmatpush1.msra.mxu0 0.0
        %560 = vmatprep.subr.mxu0 0.0
        %561 = vmatpush1.msra.mxu0 0.0
        %562 = vmatprep.subr.mxu0 0.0
        %563 = vmatpush1.msra.mxu0 0.0
        %564 = vmatprep.subr.mxu0 0.0
        %565 = vmatpush1.msra.mxu0 0.0
        %566 = vmatprep.subr.mxu0 0.0
        %567 = vmatpush1.msra.mxu0 0.0
        %568 = vmatprep.subr.mxu0 0.0
        %569 = vmatpush1.msra.mxu0 0.0
        %570 = vmatprep.subr.mxu0 0.0
        %571 = vmatpush1.msra.mxu0 0.0
        %572 = vmatprep.subr.mxu0 0.0
        %573 = vmatpush1.msra.mxu0 0.0
        %574 = vmatprep.subr.mxu0 0.0
        %575 = vmatpush1.msra.mxu0 0.0
        %576 = vmatprep.subr.mxu0 0.0
        %577 = vmatpush1.msra.mxu0 0.0
        %578 = vmatprep.subr.mxu0 0.0
        %579 = vmatpush1.msra.mxu0 0.0
        %580 = vmatprep.subr.mxu0 0.0
        %581 = vmatpush1.msra.mxu0 0.0
        %582 = vmatprep.mubr.f32.mxu0 0.0
        %583 = vmatmul.mubr.f32.gmra.mrb[0].mxu0 %v513
        %v584 = vpop.f32.mrb[0].mxu0
        %v585 = vadd.f32 0.0, %v584
        %v586 = vpop.f32.mrb[0].mxu0
        %587 = vdwg.mxu0
        %v588 = vadd.f32 %v509, %v585
        %589 = vrot.lane.b32.xlu0 %v432, 127
        %v590 = vpop.permute.xlu0 %589
        %v592 = vsel %vm199, %v189, 0
        %v594 = vsel %vm203, %v590, 0
        %596 = vmatprep.subr.mxu0 0.0
        %597 = vmatpush1.msra.mxu0 %v594
        %598 = vmatprep.subr.mxu0 0.0
        %599 = vmatpush1.msra.mxu0 0.0
        %600 = vmatprep.subr.mxu0 0.0
        %601 = vmatpush1.msra.mxu0 0.0
        %602 = vmatprep.subr.mxu0 0.0
        %603 = vmatpush1.msra.mxu0 0.0
        %604 = vmatprep.subr.mxu0 0.0
        %605 = vmatpush1.msra.mxu0 0.0
        %606 = vmatprep.subr.mxu0 0.0
        %607 = vmatpush1.msra.mxu0 0.0
        %608 = vmatprep.subr.mxu0 0.0
        %609 = vmatpush1.msra.mxu0 0.0
        %610 = vmatprep.subr.mxu0 0.0
        %611 = vmatpush1.msra.mxu0 0.0
        %612 = vmatprep.subr.mxu0 0.0
        %613 = vmatpush1.msra.mxu0 0.0
        %614 = vmatprep.subr.mxu0 0.0
        %615 = vmatpush1.msra.mxu0 0.0
        %616 = vmatprep.subr.mxu0 0.0
        %617 = vmatpush1.msra.mxu0 0.0
        %618 = vmatprep.subr.mxu0 0.0
        %619 = vmatpush1.msra.mxu0 0.0
        %620 = vmatprep.subr.mxu0 0.0
        %621 = vmatpush1.msra.mxu0 0.0
        %622 = vmatprep.subr.mxu0 0.0
        %623 = vmatpush1.msra.mxu0 0.0
        %624 = vmatprep.subr.mxu0 0.0
        %625 = vmatpush1.msra.mxu0 0.0
        %626 = vmatprep.subr.mxu0 0.0
        %627 = vmatpush1.msra.mxu0 0.0
        %628 = vmatprep.subr.mxu0 0.0
        %629 = vmatpush1.msra.mxu0 0.0
        %630 = vmatprep.subr.mxu0 0.0
        %631 = vmatpush1.msra.mxu0 0.0
        %632 = vmatprep.subr.mxu0 0.0
        %633 = vmatpush1.msra.mxu0 0.0
        %634 = vmatprep.subr.mxu0 0.0
        %635 = vmatpush1.msra.mxu0 0.0
        %636 = vmatprep.subr.mxu0 0.0
        %637 = vmatpush1.msra.mxu0 0.0
        %638 = vmatprep.subr.mxu0 0.0
        %639 = vmatpush1.msra.mxu0 0.0
        %640 = vmatprep.subr.mxu0 0.0
        %641 = vmatpush1.msra.mxu0 0.0
        %642 = vmatprep.subr.mxu0 0.0
        %643 = vmatpush1.msra.mxu0 0.0
        %644 = vmatprep.subr.mxu0 0.0
        %645 = vmatpush1.msra.mxu0 0.0
        %646 = vmatprep.subr.mxu0 0.0
        %647 = vmatpush1.msra.mxu0 0.0
        %648 = vmatprep.subr.mxu0 0.0
        %649 = vmatpush1.msra.mxu0 0.0
        %650 = vmatprep.subr.mxu0 0.0
        %651 = vmatpush1.msra.mxu0 0.0
        %652 = vmatprep.subr.mxu0 0.0
        %653 = vmatpush1.msra.mxu0 0.0
        %654 = vmatprep.subr.mxu0 0.0
        %655 = vmatpush1.msra.mxu0 0.0
        %656 = vmatprep.subr.mxu0 0.0
        %657 = vmatpush1.msra.mxu0 0.0
        %658 = vmatprep.subr.mxu0 0.0
        %659 = vmatpush1.msra.mxu0 0.0
        %660 = vmatprep.mubr.f32.mxu0 0.0
        %661 = vmatmul.mubr.f32.gmra.mrb[0].mxu0 %v592
        %v662 = vpop.f32.mrb[0].mxu0
        %v663 = vadd.f32 0.0, %v662
        %v664 = vpop.f32.mrb[0].mxu0
        %665 = vdwg.mxu0
        %v666 = vadd.f32 %v588, %v663
        %s667 = scalar_lea.vmem %s149, 4 [#allocation2]
        %v668 = vld [vmem:[%s667] sm:$0xf]
        %v670 = vsel %vm199, %v191, 0
        %v673 = vsel %vm203, %v668, 0
        %675 = vmatprep.subr.mxu0 0.0
        %676 = vmatpush1.msra.mxu0 %v673
        %677 = vmatprep.subr.mxu0 0.0
        %678 = vmatpush1.msra.mxu0 0.0
        %679 = vmatprep.subr.mxu0 0.0
        %680 = vmatpush1.msra.mxu0 0.0
        %681 = vmatprep.subr.mxu0 0.0
        %682 = vmatpush1.msra.mxu0 0.0
        %683 = vmatprep.subr.mxu0 0.0
        %684 = vmatpush1.msra.mxu0 0.0
        %685 = vmatprep.subr.mxu0 0.0
        %686 = vmatpush1.msra.mxu0 0.0
        %687 = vmatprep.subr.mxu0 0.0
        %688 = vmatpush1.msra.mxu0 0.0
        %689 = vmatprep.subr.mxu0 0.0
        %690 = vmatpush1.msra.mxu0 0.0
        %691 = vmatprep.subr.mxu0 0.0
        %692 = vmatpush1.msra.mxu0 0.0
        %693 = vmatprep.subr.mxu0 0.0
        %694 = vmatpush1.msra.mxu0 0.0
        %695 = vmatprep.subr.mxu0 0.0
        %696 = vmatpush1.msra.mxu0 0.0
        %697 = vmatprep.subr.mxu0 0.0
        %698 = vmatpush1.msra.mxu0 0.0
        %699 = vmatprep.subr.mxu0 0.0
        %700 = vmatpush1.msra.mxu0 0.0
        %701 = vmatprep.subr.mxu0 0.0
        %702 = vmatpush1.msra.mxu0 0.0
        %703 = vmatprep.subr.mxu0 0.0
        %704 = vmatpush1.msra.mxu0 0.0
        %705 = vmatprep.subr.mxu0 0.0
        %706 = vmatpush1.msra.mxu0 0.0
        %707 = vmatprep.subr.mxu0 0.0
        %708 = vmatpush1.msra.mxu0 0.0
        %709 = vmatprep.subr.mxu0 0.0
        %710 = vmatpush1.msra.mxu0 0.0
        %711 = vmatprep.subr.mxu0 0.0
        %712 = vmatpush1.msra.mxu0 0.0
        %713 = vmatprep.subr.mxu0 0.0
        %714 = vmatpush1.msra.mxu0 0.0
        %715 = vmatprep.subr.mxu0 0.0
        %716 = vmatpush1.msra.mxu0 0.0
        %717 = vmatprep.subr.mxu0 0.0
        %718 = vmatpush1.msra.mxu0 0.0
        %719 = vmatprep.subr.mxu0 0.0
        %720 = vmatpush1.msra.mxu0 0.0
        %721 = vmatprep.subr.mxu0 0.0
        %722 = vmatpush1.msra.mxu0 0.0
        %723 = vmatprep.subr.mxu0 0.0
        %724 = vmatpush1.msra.mxu0 0.0
        %725 = vmatprep.subr.mxu0 0.0
        %726 = vmatpush1.msra.mxu0 0.0
        %727 = vmatprep.subr.mxu0 0.0
        %728 = vmatpush1.msra.mxu0 0.0
        %729 = vmatprep.subr.mxu0 0.0
        %730 = vmatpush1.msra.mxu0 0.0
        %731 = vmatprep.subr.mxu0 0.0
        %732 = vmatpush1.msra.mxu0 0.0
        %733 = vmatprep.subr.mxu0 0.0
        %734 = vmatpush1.msra.mxu0 0.0
        %735 = vmatprep.subr.mxu0 0.0
        %736 = vmatpush1.msra.mxu0 0.0
        %737 = vmatprep.subr.mxu0 0.0
        %738 = vmatpush1.msra.mxu0 0.0
        %739 = vmatprep.mubr.f32.mxu0 0.0
        %740 = vmatmul.mubr.f32.gmra.mrb[0].mxu0 %v670
        %v741 = vpop.f32.mrb[0].mxu0
        %v742 = vadd.f32 0.0, %v741
        %v743 = vpop.f32.mrb[0].mxu0
        %744 = vdwg.mxu0
        %v745 = vadd.f32 %v666, %v742
        %s746 = scalar_lea.vmem %s149, 36 [#allocation2]
        %v747 = vld [vmem:[%s746] sm:$0xf]
        %v749 = vsel %vm199, %v193, 0
        %v752 = vsel %vm203, %v747, 0
        %754 = vmatprep.subr.mxu0 0.0
        %755 = vmatpush1.msra.mxu0 %v752
        %756 = vmatprep.subr.mxu0 0.0
        %757 = vmatpush1.msra.mxu0 0.0
        %758 = vmatprep.subr.mxu0 0.0
        %759 = vmatpush1.msra.mxu0 0.0
        %760 = vmatprep.subr.mxu0 0.0
        %761 = vmatpush1.msra.mxu0 0.0
        %762 = vmatprep.subr.mxu0 0.0
        %763 = vmatpush1.msra.mxu0 0.0
        %764 = vmatprep.subr.mxu0 0.0
        %765 = vmatpush1.msra.mxu0 0.0
        %766 = vmatprep.subr.mxu0 0.0
        %767 = vmatpush1.msra.mxu0 0.0
        %768 = vmatprep.subr.mxu0 0.0
        %769 = vmatpush1.msra.mxu0 0.0
        %770 = vmatprep.subr.mxu0 0.0
        %771 = vmatpush1.msra.mxu0 0.0
        %772 = vmatprep.subr.mxu0 0.0
        %773 = vmatpush1.msra.mxu0 0.0
        %774 = vmatprep.subr.mxu0 0.0
        %775 = vmatpush1.msra.mxu0 0.0
        %776 = vmatprep.subr.mxu0 0.0
        %777 = vmatpush1.msra.mxu0 0.0
        %778 = vmatprep.subr.mxu0 0.0
        %779 = vmatpush1.msra.mxu0 0.0
        %780 = vmatprep.subr.mxu0 0.0
        %781 = vmatpush1.msra.mxu0 0.0
        %782 = vmatprep.subr.mxu0 0.0
        %783 = vmatpush1.msra.mxu0 0.0
        %784 = vmatprep.subr.mxu0 0.0
        %785 = vmatpush1.msra.mxu0 0.0
        %786 = vmatprep.subr.mxu0 0.0
        %787 = vmatpush1.msra.mxu0 0.0
        %788 = vmatprep.subr.mxu0 0.0
        %789 = vmatpush1.msra.mxu0 0.0
        %790 = vmatprep.subr.mxu0 0.0
        %791 = vmatpush1.msra.mxu0 0.0
        %792 = vmatprep.subr.mxu0 0.0
        %793 = vmatpush1.msra.mxu0 0.0
        %794 = vmatprep.subr.mxu0 0.0
        %795 = vmatpush1.msra.mxu0 0.0
        %796 = vmatprep.subr.mxu0 0.0
        %797 = vmatpush1.msra.mxu0 0.0
        %798 = vmatprep.subr.mxu0 0.0
        %799 = vmatpush1.msra.mxu0 0.0
        %800 = vmatprep.subr.mxu0 0.0
        %801 = vmatpush1.msra.mxu0 0.0
        %802 = vmatprep.subr.mxu0 0.0
        %803 = vmatpush1.msra.mxu0 0.0
        %804 = vmatprep.subr.mxu0 0.0
        %805 = vmatpush1.msra.mxu0 0.0
        %806 = vmatprep.subr.mxu0 0.0
        %807 = vmatpush1.msra.mxu0 0.0
        %808 = vmatprep.subr.mxu0 0.0
        %809 = vmatpush1.msra.mxu0 0.0
        %810 = vmatprep.subr.mxu0 0.0
        %811 = vmatpush1.msra.mxu0 0.0
        %812 = vmatprep.subr.mxu0 0.0
        %813 = vmatpush1.msra.mxu0 0.0
        %814 = vmatprep.subr.mxu0 0.0
        %815 = vmatpush1.msra.mxu0 0.0
        %816 = vmatprep.subr.mxu0 0.0
        %817 = vmatpush1.msra.mxu0 0.0
        %818 = vmatprep.mubr.f32.mxu0 0.0
        %819 = vmatmul.mubr.f32.gmra.mrb[0].mxu0 %v749
        %v820 = vpop.f32.mrb[0].mxu0
        %v821 = vadd.f32 0.0, %v820
        %v822 = vpop.f32.mrb[0].mxu0
        %823 = vdwg.mxu0
        %v824 = vadd.f32 %v745, %v821
        %825 = vrot.lane.b32.xlu0 %v668, 127
        %v826 = vpop.permute.xlu0 %825
        %v828 = vsel %vm199, %v195, 0
        %v830 = vsel %vm203, %v826, 0
        %832 = vmatprep.subr.mxu0 0.0
        %833 = vmatpush1.msra.mxu0 %v830
        %834 = vmatprep.subr.mxu0 0.0
        %835 = vmatpush1.msra.mxu0 0.0
        %836 = vmatprep.subr.mxu0 0.0
        %837 = vmatpush1.msra.mxu0 0.0
        %838 = vmatprep.subr.mxu0 0.0
        %839 = vmatpush1.msra.mxu0 0.0
        %840 = vmatprep.subr.mxu0 0.0
        %841 = vmatpush1.msra.mxu0 0.0
        %842 = vmatprep.subr.mxu0 0.0
        %843 = vmatpush1.msra.mxu0 0.0
        %844 = vmatprep.subr.mxu0 0.0
        %845 = vmatpush1.msra.mxu0 0.0
        %846 = vmatprep.subr.mxu0 0.0
        %847 = vmatpush1.msra.mxu0 0.0
        %848 = vmatprep.subr.mxu0 0.0
        %849 = vmatpush1.msra.mxu0 0.0
        %850 = vmatprep.subr.mxu0 0.0
        %851 = vmatpush1.msra.mxu0 0.0
        %852 = vmatprep.subr.mxu0 0.0
        %853 = vmatpush1.msra.mxu0 0.0
        %854 = vmatprep.subr.mxu0 0.0
        %855 = vmatpush1.msra.mxu0 0.0
        %856 = vmatprep.subr.mxu0 0.0
        %857 = vmatpush1.msra.mxu0 0.0
        %858 = vmatprep.subr.mxu0 0.0
        %859 = vmatpush1.msra.mxu0 0.0
        %860 = vmatprep.subr.mxu0 0.0
        %861 = vmatpush1.msra.mxu0 0.0
        %862 = vmatprep.subr.mxu0 0.0
        %863 = vmatpush1.msra.mxu0 0.0
        %864 = vmatprep.subr.mxu0 0.0
        %865 = vmatpush1.msra.mxu0 0.0
        %866 = vmatprep.subr.mxu0 0.0
        %867 = vmatpush1.msra.mxu0 0.0
        %868 = vmatprep.subr.mxu0 0.0
        %869 = vmatpush1.msra.mxu0 0.0
        %870 = vmatprep.subr.mxu0 0.0
        %871 = vmatpush1.msra.mxu0 0.0
        %872 = vmatprep.subr.mxu0 0.0
        %873 = vmatpush1.msra.mxu0 0.0
        %874 = vmatprep.subr.mxu0 0.0
        %875 = vmatpush1.msra.mxu0 0.0
        %876 = vmatprep.subr.mxu0 0.0
        %877 = vmatpush1.msra.mxu0 0.0
        %878 = vmatprep.subr.mxu0 0.0
        %879 = vmatpush1.msra.mxu0 0.0
        %880 = vmatprep.subr.mxu0 0.0
        %881 = vmatpush1.msra.mxu0 0.0
        %882 = vmatprep.subr.mxu0 0.0
        %883 = vmatpush1.msra.mxu0 0.0
        %884 = vmatprep.subr.mxu0 0.0
        %885 = vmatpush1.msra.mxu0 0.0
        %886 = vmatprep.subr.mxu0 0.0
        %887 = vmatpush1.msra.mxu0 0.0
        %888 = vmatprep.subr.mxu0 0.0
        %889 = vmatpush1.msra.mxu0 0.0
        %890 = vmatprep.subr.mxu0 0.0
        %891 = vmatpush1.msra.mxu0 0.0
        %892 = vmatprep.subr.mxu0 0.0
        %893 = vmatpush1.msra.mxu0 0.0
        %894 = vmatprep.subr.mxu0 0.0
        %895 = vmatpush1.msra.mxu0 0.0
        %896 = vmatprep.mubr.f32.mxu0 0.0
        %897 = vmatmul.mubr.f32.gmra.mrb[0].mxu0 %v828
        %v898 = vpop.f32.mrb[0].mxu0
        %v899 = vadd.f32 0.0, %v898
        %v900 = vpop.f32.mrb[0].mxu0
        %901 = vdwg.mxu0
        %v902 = vadd.f32 %v824, %v899
        %v905 = vunpack.c.l.s4 1966171168
        %v906 = vunpack.c.0.s8 %v905
        %v907 = vlaneseq
        %v908 = vshrl.u32 %v907, 7
        %v909 = vsub.s32 %v906, %v908
        %v910 = vrot.slane %v902, %v909
        %v911 = vcombine.high %v910, %v910
        %v913 = vunpack.c.l.s4 1966171168
        %v914 = vunpack.c.0.s8 %v913
        %v915 = vlaneseq
        %v916 = vshrl.u32 %v915, 7
        %v917 = vsub.s32 %v914, %v916
        %v918 = vrot.slane %v910, %v917
        %v920 = vunpack.c.l.s4 1966171168
        %v921 = vunpack.c.0.s8 %v920
        %v922 = vlaneseq
        %v923 = vshrl.u32 %v922, 7
        %v924 = vsub.s32 %v921, %v923
        %v925 = vrot.slane %v911, %v924
        %v926 = vcombine.high %v918, %v918
        %v927 = vcombine.high %v925, %v925
        %vm932 = vcmask 49152
        %933 = vst.msk [vmem:[%s178] sm:$0x1] %vm932, %v918
        %934 = vst.msk [vmem:[%s178 + $0x8] sm:$0x1] %vm932, %v925
        %935 = vst.msk [vmem:[%s178 + $0x10] sm:$0x1] %vm932, %v926
        %936 = vst.msk [vmem:[%s178 + $0x18] sm:$0x1] %vm932, %v927
        %v937 = vld [vmem:[%s667] sm:$0xf]
        %v938 = vld [vmem:[%s746] sm:$0xf]
        %v940 = vsel %vm203, %v938, 0
        %942 = vmatprep.subr.mxu0 0.0
        %943 = vmatpush1.msra.mxu0 %v940
        %944 = vmatprep.subr.mxu0 0.0
        %945 = vmatpush1.msra.mxu0 0.0
        %946 = vmatprep.subr.mxu0 0.0
        %947 = vmatpush1.msra.mxu0 0.0
        %948 = vmatprep.subr.mxu0 0.0
        %949 = vmatpush1.msra.mxu0 0.0
        %950 = vmatprep.subr.mxu0 0.0
        %951 = vmatpush1.msra.mxu0 0.0
        %952 = vmatprep.subr.mxu0 0.0
        %953 = vmatpush1.msra.mxu0 0.0
        %954 = vmatprep.subr.mxu0 0.0
        %955 = vmatpush1.msra.mxu0 0.0
        %956 = vmatprep.subr.mxu0 0.0
        %957 = vmatpush1.msra.mxu0 0.0
        %958 = vmatprep.subr.mxu0 0.0
        %959 = vmatpush1.msra.mxu0 0.0
        %960 = vmatprep.subr.mxu0 0.0
        %961 = vmatpush1.msra.mxu0 0.0
        %962 = vmatprep.subr.mxu0 0.0
        %963 = vmatpush1.msra.mxu0 0.0
        %964 = vmatprep.subr.mxu0 0.0
        %965 = vmatpush1.msra.mxu0 0.0
        %966 = vmatprep.subr.mxu0 0.0
        %967 = vmatpush1.msra.mxu0 0.0
        %968 = vmatprep.subr.mxu0 0.0
        %969 = vmatpush1.msra.mxu0 0.0
        %970 = vmatprep.subr.mxu0 0.0
        %971 = vmatpush1.msra.mxu0 0.0
        %972 = vmatprep.subr.mxu0 0.0
        %973 = vmatpush1.msra.mxu0 0.0
        %974 = vmatprep.subr.mxu0 0.0
        %975 = vmatpush1.msra.mxu0 0.0
        %976 = vmatprep.subr.mxu0 0.0
        %977 = vmatpush1.msra.mxu0 0.0
        %978 = vmatprep.subr.mxu0 0.0
        %979 = vmatpush1.msra.mxu0 0.0
        %980 = vmatprep.subr.mxu0 0.0
        %981 = vmatpush1.msra.mxu0 0.0
        %982 = vmatprep.subr.mxu0 0.0
        %983 = vmatpush1.msra.mxu0 0.0
        %984 = vmatprep.subr.mxu0 0.0
        %985 = vmatpush1.msra.mxu0 0.0
        %986 = vmatprep.subr.mxu0 0.0
        %987 = vmatpush1.msra.mxu0 0.0
        %988 = vmatprep.subr.mxu0 0.0
        %989 = vmatpush1.msra.mxu0 0.0
        %990 = vmatprep.subr.mxu0 0.0
        %991 = vmatpush1.msra.mxu0 0.0
        %992 = vmatprep.subr.mxu0 0.0
        %993 = vmatpush1.msra.mxu0 0.0
        %994 = vmatprep.subr.mxu0 0.0
        %995 = vmatpush1.msra.mxu0 0.0
        %996 = vmatprep.subr.mxu0 0.0
        %997 = vmatpush1.msra.mxu0 0.0
        %998 = vmatprep.subr.mxu0 0.0
        %999 = vmatpush1.msra.mxu0 0.0
        %1000 = vmatprep.subr.mxu0 0.0
        %1001 = vmatpush1.msra.mxu0 0.0
        %1002 = vmatprep.subr.mxu0 0.0
        %1003 = vmatpush1.msra.mxu0 0.0
        %1004 = vmatprep.subr.mxu0 0.0
        %1005 = vmatpush1.msra.mxu0 0.0
        %1006 = vmatprep.mubr.f32.mxu0 0.0
        %1007 = vmatmul.mubr.f32.gmra.mrb[0].mxu0 %v201
        %v1008 = vpop.f32.mrb[0].mxu0
        %v1009 = vadd.f32 0.0, %v1008
        %v1010 = vpop.f32.mrb[0].mxu0
        %1011 = vdwg.mxu0
        %v1013 = vsel %vm203, %v937, 0
        %1015 = vmatprep.subr.mxu0 0.0
        %1016 = vmatpush1.msra.mxu0 %v1013
        %1017 = vmatprep.subr.mxu0 0.0
        %1018 = vmatpush1.msra.mxu0 0.0
        %1019 = vmatprep.subr.mxu0 0.0
        %1020 = vmatpush1.msra.mxu0 0.0
        %1021 = vmatprep.subr.mxu0 0.0
        %1022 = vmatpush1.msra.mxu0 0.0
        %1023 = vmatprep.subr.mxu0 0.0
        %1024 = vmatpush1.msra.mxu0 0.0
        %1025 = vmatprep.subr.mxu0 0.0
        %1026 = vmatpush1.msra.mxu0 0.0
        %1027 = vmatprep.subr.mxu0 0.0
        %1028 = vmatpush1.msra.mxu0 0.0
        %1029 = vmatprep.subr.mxu0 0.0
        %1030 = vmatpush1.msra.mxu0 0.0
        %1031 = vmatprep.subr.mxu0 0.0
        %1032 = vmatpush1.msra.mxu0 0.0
        %1033 = vmatprep.subr.mxu0 0.0
        %1034 = vmatpush1.msra.mxu0 0.0
        %1035 = vmatprep.subr.mxu0 0.0
        %1036 = vmatpush1.msra.mxu0 0.0
        %1037 = vmatprep.subr.mxu0 0.0
        %1038 = vmatpush1.msra.mxu0 0.0
        %1039 = vmatprep.subr.mxu0 0.0
        %1040 = vmatpush1.msra.mxu0 0.0
        %1041 = vmatprep.subr.mxu0 0.0
        %1042 = vmatpush1.msra.mxu0 0.0
        %1043 = vmatprep.subr.mxu0 0.0
        %1044 = vmatpush1.msra.mxu0 0.0
        %1045 = vmatprep.subr.mxu0 0.0
        %1046 = vmatpush1.msra.mxu0 0.0
        %1047 = vmatprep.subr.mxu0 0.0
        %1048 = vmatpush1.msra.mxu0 0.0
        %1049 = vmatprep.subr.mxu0 0.0
        %1050 = vmatpush1.msra.mxu0 0.0
        %1051 = vmatprep.subr.mxu0 0.0
        %1052 = vmatpush1.msra.mxu0 0.0
        %1053 = vmatprep.subr.mxu0 0.0
        %1054 = vmatpush1.msra.mxu0 0.0
        %1055 = vmatprep.subr.mxu0 0.0
        %1056 = vmatpush1.msra.mxu0 0.0
        %1057 = vmatprep.subr.mxu0 0.0
        %1058 = vmatpush1.msra.mxu0 0.0
        %1059 = vmatprep.subr.mxu0 0.0
        %1060 = vmatpush1.msra.mxu0 0.0
        %1061 = vmatprep.subr.mxu0 0.0
        %1062 = vmatpush1.msra.mxu0 0.0
        %1063 = vmatprep.subr.mxu0 0.0
        %1064 = vmatpush1.msra.mxu0 0.0
        %1065 = vmatprep.subr.mxu0 0.0
        %1066 = vmatpush1.msra.mxu0 0.0
        %1067 = vmatprep.subr.mxu0 0.0
        %1068 = vmatpush1.msra.mxu0 0.0
        %1069 = vmatprep.subr.mxu0 0.0
        %1070 = vmatpush1.msra.mxu0 0.0
        %1071 = vmatprep.subr.mxu0 0.0
        %1072 = vmatpush1.msra.mxu0 0.0
        %1073 = vmatprep.subr.mxu0 0.0
        %1074 = vmatpush1.msra.mxu0 0.0
        %1075 = vmatprep.subr.mxu0 0.0
        %1076 = vmatpush1.msra.mxu0 0.0
        %1077 = vmatprep.subr.mxu0 0.0
        %1078 = vmatpush1.msra.mxu0 0.0
        %1079 = vmatprep.mubr.f32.mxu0 0.0
        %1080 = vmatmul.mubr.f32.gmra.mrb[0].mxu0 %v278
        %v1081 = vpop.f32.mrb[0].mxu0
        %v1082 = vadd.f32 %v1009, %v1081
        %v1083 = vpop.f32.mrb[0].mxu0
        %1084 = vdwg.mxu0
        %1085 = vrot.lane.b32.xlu0 %v937, 127
        %v1086 = vpop.permute.xlu0 %1085
        %v1087 = vsel %vm203, %v1086, 0
        %1089 = vmatprep.subr.mxu0 0.0
        %1090 = vmatpush1.msra.mxu0 %v1087
        %1091 = vmatprep.subr.mxu0 0.0
        %1092 = vmatpush1.msra.mxu0 0.0
        %1093 = vmatprep.subr.mxu0 0.0
        %1094 = vmatpush1.msra.mxu0 0.0
        %1095 = vmatprep.subr.mxu0 0.0
        %1096 = vmatpush1.msra.mxu0 0.0
        %1097 = vmatprep.subr.mxu0 0.0
        %1098 = vmatpush1.msra.mxu0 0.0
        %1099 = vmatprep.subr.mxu0 0.0
        %1100 = vmatpush1.msra.mxu0 0.0
        %1101 = vmatprep.subr.mxu0 0.0
        %1102 = vmatpush1.msra.mxu0 0.0
        %1103 = vmatprep.subr.mxu0 0.0
        %1104 = vmatpush1.msra.mxu0 0.0
        %1105 = vmatprep.subr.mxu0 0.0
        %1106 = vmatpush1.msra.mxu0 0.0
        %1107 = vmatprep.subr.mxu0 0.0
        %1108 = vmatpush1.msra.mxu0 0.0
        %1109 = vmatprep.subr.mxu0 0.0
        %1110 = vmatpush1.msra.mxu0 0.0
        %1111 = vmatprep.subr.mxu0 0.0
        %1112 = vmatpush1.msra.mxu0 0.0
        %1113 = vmatprep.subr.mxu0 0.0
        %1114 = vmatpush1.msra.mxu0 0.0
        %1115 = vmatprep.subr.mxu0 0.0
        %1116 = vmatpush1.msra.mxu0 0.0
        %1117 = vmatprep.subr.mxu0 0.0
        %1118 = vmatpush1.msra.mxu0 0.0
        %1119 = vmatprep.subr.mxu0 0.0
        %1120 = vmatpush1.msra.mxu0 0.0
        %1121 = vmatprep.subr.mxu0 0.0
        %1122 = vmatpush1.msra.mxu0 0.0
        %1123 = vmatprep.subr.mxu0 0.0
        %1124 = vmatpush1.msra.mxu0 0.0
        %1125 = vmatprep.subr.mxu0 0.0
        %1126 = vmatpush1.msra.mxu0 0.0
        %1127 = vmatprep.subr.mxu0 0.0
        %1128 = vmatpush1.msra.mxu0 0.0
        %1129 = vmatprep.subr.mxu0 0.0
        %1130 = vmatpush1.msra.mxu0 0.0
        %1131 = vmatprep.subr.mxu0 0.0
        %1132 = vmatpush1.msra.mxu0 0.0
        %1133 = vmatprep.subr.mxu0 0.0
        %1134 = vmatpush1.msra.mxu0 0.0
        %1135 = vmatprep.subr.mxu0 0.0
        %1136 = vmatpush1.msra.mxu0 0.0
        %1137 = vmatprep.subr.mxu0 0.0
        %1138 = vmatpush1.msra.mxu0 0.0
        %1139 = vmatprep.subr.mxu0 0.0
        %1140 = vmatpush1.msra.mxu0 0.0
        %1141 = vmatprep.subr.mxu0 0.0
        %1142 = vmatpush1.msra.mxu0 0.0
        %1143 = vmatprep.subr.mxu0 0.0
        %1144 = vmatpush1.msra.mxu0 0.0
        %1145 = vmatprep.subr.mxu0 0.0
        %1146 = vmatpush1.msra.mxu0 0.0
        %1147 = vmatprep.subr.mxu0 0.0
        %1148 = vmatpush1.msra.mxu0 0.0
        %1149 = vmatprep.subr.mxu0 0.0
        %1150 = vmatpush1.msra.mxu0 0.0
        %1151 = vmatprep.subr.mxu0 0.0
        %1152 = vmatpush1.msra.mxu0 0.0
        %1153 = vmatprep.mubr.f32.mxu0 0.0
        %1154 = vmatmul.mubr.f32.gmra.mrb[0].mxu0 %v356
        %v1155 = vpop.f32.mrb[0].mxu0
        %v1156 = vadd.f32 0.0, %v1155
        %v1157 = vpop.f32.mrb[0].mxu0
        %1158 = vdwg.mxu0
        %v1159 = vadd.f32 %v1082, %v1156
        %s1160 = scalar_lea.vmem %s149, 68 [#allocation2]
        %v1161 = vld [vmem:[%s1160] sm:$0xf]
        %v1163 = vsel %vm203, %v1161, 0
        %1165 = vmatprep.subr.mxu0 0.0
        %1166 = vmatpush1.msra.mxu0 %v1163
        %1167 = vmatprep.subr.mxu0 0.0
        %1168 = vmatpush1.msra.mxu0 0.0
        %1169 = vmatprep.subr.mxu0 0.0
        %1170 = vmatpush1.msra.mxu0 0.0
        %1171 = vmatprep.subr.mxu0 0.0
        %1172 = vmatpush1.msra.mxu0 0.0
        %1173 = vmatprep.subr.mxu0 0.0
        %1174 = vmatpush1.msra.mxu0 0.0
        %1175 = vmatprep.subr.mxu0 0.0
        %1176 = vmatpush1.msra.mxu0 0.0
        %1177 = vmatprep.subr.mxu0 0.0
        %1178 = vmatpush1.msra.mxu0 0.0
        %1179 = vmatprep.subr.mxu0 0.0
        %1180 = vmatpush1.msra.mxu0 0.0
        %1181 = vmatprep.subr.mxu0 0.0
        %1182 = vmatpush1.msra.mxu0 0.0
        %1183 = vmatprep.subr.mxu0 0.0
        %1184 = vmatpush1.msra.mxu0 0.0
        %1185 = vmatprep.subr.mxu0 0.0
        %1186 = vmatpush1.msra.mxu0 0.0
        %1187 = vmatprep.subr.mxu0 0.0
        %1188 = vmatpush1.msra.mxu0 0.0
        %1189 = vmatprep.subr.mxu0 0.0
        %1190 = vmatpush1.msra.mxu0 0.0
        %1191 = vmatprep.subr.mxu0 0.0
        %1192 = vmatpush1.msra.mxu0 0.0
        %1193 = vmatprep.subr.mxu0 0.0
        %1194 = vmatpush1.msra.mxu0 0.0
        %1195 = vmatprep.subr.mxu0 0.0
        %1196 = vmatpush1.msra.mxu0 0.0
        %1197 = vmatprep.subr.mxu0 0.0
        %1198 = vmatpush1.msra.mxu0 0.0
        %1199 = vmatprep.subr.mxu0 0.0
        %1200 = vmatpush1.msra.mxu0 0.0
        %1201 = vmatprep.subr.mxu0 0.0
        %1202 = vmatpush1.msra.mxu0 0.0
        %1203 = vmatprep.subr.mxu0 0.0
        %1204 = vmatpush1.msra.mxu0 0.0
        %1205 = vmatprep.subr.mxu0 0.0
        %1206 = vmatpush1.msra.mxu0 0.0
        %1207 = vmatprep.subr.mxu0 0.0
        %1208 = vmatpush1.msra.mxu0 0.0
        %1209 = vmatprep.subr.mxu0 0.0
        %1210 = vmatpush1.msra.mxu0 0.0
        %1211 = vmatprep.subr.mxu0 0.0
        %1212 = vmatpush1.msra.mxu0 0.0
        %1213 = vmatprep.subr.mxu0 0.0
        %1214 = vmatpush1.msra.mxu0 0.0
        %1215 = vmatprep.subr.mxu0 0.0
        %1216 = vmatpush1.msra.mxu0 0.0
        %1217 = vmatprep.subr.mxu0 0.0
        %1218 = vmatpush1.msra.mxu0 0.0
        %1219 = vmatprep.subr.mxu0 0.0
        %1220 = vmatpush1.msra.mxu0 0.0
        %1221 = vmatprep.subr.mxu0 0.0
        %1222 = vmatpush1.msra.mxu0 0.0
        %1223 = vmatprep.subr.mxu0 0.0
        %1224 = vmatpush1.msra.mxu0 0.0
        %1225 = vmatprep.subr.mxu0 0.0
        %1226 = vmatpush1.msra.mxu0 0.0
        %1227 = vmatprep.subr.mxu0 0.0
        %1228 = vmatpush1.msra.mxu0 0.0
        %1229 = vmatprep.mubr.f32.mxu0 0.0
        %1230 = vmatmul.mubr.f32.gmra.mrb[0].mxu0 %v434
        %v1231 = vpop.f32.mrb[0].mxu0
        %v1232 = vadd.f32 0.0, %v1231
        %v1233 = vpop.f32.mrb[0].mxu0
        %1234 = vdwg.mxu0
        %v1235 = vadd.f32 %v1159, %v1232
        %s1236 = scalar_lea.vmem %s149, 100 [#allocation2]
        %v1237 = vld [vmem:[%s1236] sm:$0xf]
        %v1239 = vsel %vm203, %v1237, 0
        %1241 = vmatprep.subr.mxu0 0.0
        %1242 = vmatpush1.msra.mxu0 %v1239
        %1243 = vmatprep.subr.mxu0 0.0
        %1244 = vmatpush1.msra.mxu0 0.0
        %1245 = vmatprep.subr.mxu0 0.0
        %1246 = vmatpush1.msra.mxu0 0.0
        %1247 = vmatprep.subr.mxu0 0.0
        %1248 = vmatpush1.msra.mxu0 0.0
        %1249 = vmatprep.subr.mxu0 0.0
        %1250 = vmatpush1.msra.mxu0 0.0
        %1251 = vmatprep.subr.mxu0 0.0
        %1252 = vmatpush1.msra.mxu0 0.0
        %1253 = vmatprep.subr.mxu0 0.0
        %1254 = vmatpush1.msra.mxu0 0.0
        %1255 = vmatprep.subr.mxu0 0.0
        %1256 = vmatpush1.msra.mxu0 0.0
        %1257 = vmatprep.subr.mxu0 0.0
        %1258 = vmatpush1.msra.mxu0 0.0
        %1259 = vmatprep.subr.mxu0 0.0
        %1260 = vmatpush1.msra.mxu0 0.0
        %1261 = vmatprep.subr.mxu0 0.0
        %1262 = vmatpush1.msra.mxu0 0.0
        %1263 = vmatprep.subr.mxu0 0.0
        %1264 = vmatpush1.msra.mxu0 0.0
        %1265 = vmatprep.subr.mxu0 0.0
        %1266 = vmatpush1.msra.mxu0 0.0
        %1267 = vmatprep.subr.mxu0 0.0
        %1268 = vmatpush1.msra.mxu0 0.0
        %1269 = vmatprep.subr.mxu0 0.0
        %1270 = vmatpush1.msra.mxu0 0.0
        %1271 = vmatprep.subr.mxu0 0.0
        %1272 = vmatpush1.msra.mxu0 0.0
        %1273 = vmatprep.subr.mxu0 0.0
        %1274 = vmatpush1.msra.mxu0 0.0
        %1275 = vmatprep.subr.mxu0 0.0
        %1276 = vmatpush1.msra.mxu0 0.0
        %1277 = vmatprep.subr.mxu0 0.0
        %1278 = vmatpush1.msra.mxu0 0.0
        %1279 = vmatprep.subr.mxu0 0.0
        %1280 = vmatpush1.msra.mxu0 0.0
        %1281 = vmatprep.subr.mxu0 0.0
        %1282 = vmatpush1.msra.mxu0 0.0
        %1283 = vmatprep.subr.mxu0 0.0
        %1284 = vmatpush1.msra.mxu0 0.0
        %1285 = vmatprep.subr.mxu0 0.0
        %1286 = vmatpush1.msra.mxu0 0.0
        %1287 = vmatprep.subr.mxu0 0.0
        %1288 = vmatpush1.msra.mxu0 0.0
        %1289 = vmatprep.subr.mxu0 0.0
        %1290 = vmatpush1.msra.mxu0 0.0
        %1291 = vmatprep.subr.mxu0 0.0
        %1292 = vmatpush1.msra.mxu0 0.0
        %1293 = vmatprep.subr.mxu0 0.0
        %1294 = vmatpush1.msra.mxu0 0.0
        %1295 = vmatprep.subr.mxu0 0.0
        %1296 = vmatpush1.msra.mxu0 0.0
        %1297 = vmatprep.subr.mxu0 0.0
        %1298 = vmatpush1.msra.mxu0 0.0
        %1299 = vmatprep.subr.mxu0 0.0
        %1300 = vmatpush1.msra.mxu0 0.0
        %1301 = vmatprep.subr.mxu0 0.0
        %1302 = vmatpush1.msra.mxu0 0.0
        %1303 = vmatprep.subr.mxu0 0.0
        %1304 = vmatpush1.msra.mxu0 0.0
        %1305 = vmatprep.mubr.f32.mxu0 0.0
        %1306 = vmatmul.mubr.f32.gmra.mrb[0].mxu0 %v513
        %v1307 = vpop.f32.mrb[0].mxu0
        %v1308 = vadd.f32 0.0, %v1307
        %v1309 = vpop.f32.mrb[0].mxu0
        %1310 = vdwg.mxu0
        %v1311 = vadd.f32 %v1235, %v1308
        %1312 = vrot.lane.b32.xlu0 %v1161, 127
        %v1313 = vpop.permute.xlu0 %1312
        %v1314 = vsel %vm203, %v1313, 0
        %1316 = vmatprep.subr.mxu0 0.0
        %1317 = vmatpush1.msra.mxu0 %v1314
        %1318 = vmatprep.subr.mxu0 0.0
        %1319 = vmatpush1.msra.mxu0 0.0
        %1320 = vmatprep.subr.mxu0 0.0
        %1321 = vmatpush1.msra.mxu0 0.0
        %1322 = vmatprep.subr.mxu0 0.0
        %1323 = vmatpush1.msra.mxu0 0.0
        %1324 = vmatprep.subr.mxu0 0.0
        %1325 = vmatpush1.msra.mxu0 0.0
        %1326 = vmatprep.subr.mxu0 0.0
        %1327 = vmatpush1.msra.mxu0 0.0
        %1328 = vmatprep.subr.mxu0 0.0
        %1329 = vmatpush1.msra.mxu0 0.0
        %1330 = vmatprep.subr.mxu0 0.0
        %1331 = vmatpush1.msra.mxu0 0.0
        %1332 = vmatprep.subr.mxu0 0.0
        %1333 = vmatpush1.msra.mxu0 0.0
        %1334 = vmatprep.subr.mxu0 0.0
        %1335 = vmatpush1.msra.mxu0 0.0
        %1336 = vmatprep.subr.mxu0 0.0
        %1337 = vmatpush1.msra.mxu0 0.0
        %1338 = vmatprep.subr.mxu0 0.0
        %1339 = vmatpush1.msra.mxu0 0.0
        %1340 = vmatprep.subr.mxu0 0.0
        %1341 = vmatpush1.msra.mxu0 0.0
        %1342 = vmatprep.subr.mxu0 0.0
        %1343 = vmatpush1.msra.mxu0 0.0
        %1344 = vmatprep.subr.mxu0 0.0
        %1345 = vmatpush1.msra.mxu0 0.0
        %1346 = vmatprep.subr.mxu0 0.0
        %1347 = vmatpush1.msra.mxu0 0.0
        %1348 = vmatprep.subr.mxu0 0.0
        %1349 = vmatpush1.msra.mxu0 0.0
        %1350 = vmatprep.subr.mxu0 0.0
        %1351 = vmatpush1.msra.mxu0 0.0
        %1352 = vmatprep.subr.mxu0 0.0
        %1353 = vmatpush1.msra.mxu0 0.0
        %1354 = vmatprep.subr.mxu0 0.0
        %1355 = vmatpush1.msra.mxu0 0.0
        %1356 = vmatprep.subr.mxu0 0.0
        %1357 = vmatpush1.msra.mxu0 0.0
        %1358 = vmatprep.subr.mxu0 0.0
        %1359 = vmatpush1.msra.mxu0 0.0
        %1360 = vmatprep.subr.mxu0 0.0
        %1361 = vmatpush1.msra.mxu0 0.0
        %1362 = vmatprep.subr.mxu0 0.0
        %1363 = vmatpush1.msra.mxu0 0.0
        %1364 = vmatprep.subr.mxu0 0.0
        %1365 = vmatpush1.msra.mxu0 0.0
        %1366 = vmatprep.subr.mxu0 0.0
        %1367 = vmatpush1.msra.mxu0 0.0
        %1368 = vmatprep.subr.mxu0 0.0
        %1369 = vmatpush1.msra.mxu0 0.0
        %1370 = vmatprep.subr.mxu0 0.0
        %1371 = vmatpush1.msra.mxu0 0.0
        %1372 = vmatprep.subr.mxu0 0.0
        %1373 = vmatpush1.msra.mxu0 0.0
        %1374 = vmatprep.subr.mxu0 0.0
        %1375 = vmatpush1.msra.mxu0 0.0
        %1376 = vmatprep.subr.mxu0 0.0
        %1377 = vmatpush1.msra.mxu0 0.0
        %1378 = vmatprep.subr.mxu0 0.0
        %1379 = vmatpush1.msra.mxu0 0.0
        %1380 = vmatprep.mubr.f32.mxu0 0.0
        %1381 = vmatmul.mubr.f32.gmra.mrb[0].mxu0 %v592
        %v1382 = vpop.f32.mrb[0].mxu0
        %v1383 = vadd.f32 0.0, %v1382
        %v1384 = vpop.f32.mrb[0].mxu0
        %1385 = vdwg.mxu0
        %v1386 = vadd.f32 %v1311, %v1383
        %s1387 = scalar_lea.vmem %s149, 8 [#allocation2]
        %v1388 = vld [vmem:[%s1387] sm:$0xf]
        %v1390 = vsel %vm203, %v1388, 0
        %1392 = vmatprep.subr.mxu0 0.0
        %1393 = vmatpush1.msra.mxu0 %v1390
        %1394 = vmatprep.subr.mxu0 0.0
        %1395 = vmatpush1.msra.mxu0 0.0
        %1396 = vmatprep.subr.mxu0 0.0
        %1397 = vmatpush1.msra.mxu0 0.0
        %1398 = vmatprep.subr.mxu0 0.0
        %1399 = vmatpush1.msra.mxu0 0.0
        %1400 = vmatprep.subr.mxu0 0.0
        %1401 = vmatpush1.msra.mxu0 0.0
        %1402 = vmatprep.subr.mxu0 0.0
        %1403 = vmatpush1.msra.mxu0 0.0
        %1404 = vmatprep.subr.mxu0 0.0
        %1405 = vmatpush1.msra.mxu0 0.0
        %1406 = vmatprep.subr.mxu0 0.0
        %1407 = vmatpush1.msra.mxu0 0.0
        %1408 = vmatprep.subr.mxu0 0.0
        %1409 = vmatpush1.msra.mxu0 0.0
        %1410 = vmatprep.subr.mxu0 0.0
        %1411 = vmatpush1.msra.mxu0 0.0
        %1412 = vmatprep.subr.mxu0 0.0
        %1413 = vmatpush1.msra.mxu0 0.0
        %1414 = vmatprep.subr.mxu0 0.0
        %1415 = vmatpush1.msra.mxu0 0.0
        %1416 = vmatprep.subr.mxu0 0.0
        %1417 = vmatpush1.msra.mxu0 0.0
        %1418 = vmatprep.subr.mxu0 0.0
        %1419 = vmatpush1.msra.mxu0 0.0
        %1420 = vmatprep.subr.mxu0 0.0
        %1421 = vmatpush1.msra.mxu0 0.0
        %1422 = vmatprep.subr.mxu0 0.0
        %1423 = vmatpush1.msra.mxu0 0.0
        %1424 = vmatprep.subr.mxu0 0.0
        %1425 = vmatpush1.msra.mxu0 0.0
        %1426 = vmatprep.subr.mxu0 0.0
        %1427 = vmatpush1.msra.mxu0 0.0
        %1428 = vmatprep.subr.mxu0 0.0
        %1429 = vmatpush1.msra.mxu0 0.0
        %1430 = vmatprep.subr.mxu0 0.0
        %1431 = vmatpush1.msra.mxu0 0.0
        %1432 = vmatprep.subr.mxu0 0.0
        %1433 = vmatpush1.msra.mxu0 0.0
        %1434 = vmatprep.subr.mxu0 0.0
        %1435 = vmatpush1.msra.mxu0 0.0
        %1436 = vmatprep.subr.mxu0 0.0
        %1437 = vmatpush1.msra.mxu0 0.0
        %1438 = vmatprep.subr.mxu0 0.0
        %1439 = vmatpush1.msra.mxu0 0.0
        %1440 = vmatprep.subr.mxu0 0.0
        %1441 = vmatpush1.msra.mxu0 0.0
        %1442 = vmatprep.subr.mxu0 0.0
        %1443 = vmatpush1.msra.mxu0 0.0
        %1444 = vmatprep.subr.mxu0 0.0
        %1445 = vmatpush1.msra.mxu0 0.0
        %1446 = vmatprep.subr.mxu0 0.0
        %1447 = vmatpush1.msra.mxu0 0.0
        %1448 = vmatprep.subr.mxu0 0.0
        %1449 = vmatpush1.msra.mxu0 0.0
        %1450 = vmatprep.subr.mxu0 0.0
        %1451 = vmatpush1.msra.mxu0 0.0
        %1452 = vmatprep.subr.mxu0 0.0
        %1453 = vmatpush1.msra.mxu0 0.0
        %1454 = vmatprep.subr.mxu0 0.0
        %1455 = vmatpush1.msra.mxu0 0.0
        %1456 = vmatprep.mubr.f32.mxu0 0.0
        %1457 = vmatmul.mubr.f32.gmra.mrb[0].mxu0 %v670
        %v1458 = vpop.f32.mrb[0].mxu0
        %v1459 = vadd.f32 0.0, %v1458
        %v1460 = vpop.f32.mrb[0].mxu0
        %1461 = vdwg.mxu0
        %v1462 = vadd.f32 %v1386, %v1459
        %s1463 = scalar_lea.vmem %s149, 40 [#allocation2]
        %v1464 = vld [vmem:[%s1463] sm:$0xf]
        %v1466 = vsel %vm203, %v1464, 0
        %1468 = vmatprep.subr.mxu0 0.0
        %1469 = vmatpush1.msra.mxu0 %v1466
        %1470 = vmatprep.subr.mxu0 0.0
        %1471 = vmatpush1.msra.mxu0 0.0
        %1472 = vmatprep.subr.mxu0 0.0
        %1473 = vmatpush1.msra.mxu0 0.0
        %1474 = vmatprep.subr.mxu0 0.0
        %1475 = vmatpush1.msra.mxu0 0.0
        %1476 = vmatprep.subr.mxu0 0.0
        %1477 = vmatpush1.msra.mxu0 0.0
        %1478 = vmatprep.subr.mxu0 0.0
        %1479 = vmatpush1.msra.mxu0 0.0
        %1480 = vmatprep.subr.mxu0 0.0
        %1481 = vmatpush1.msra.mxu0 0.0
        %1482 = vmatprep.subr.mxu0 0.0
        %1483 = vmatpush1.msra.mxu0 0.0
        %1484 = vmatprep.subr.mxu0 0.0
        %1485 = vmatpush1.msra.mxu0 0.0
        %1486 = vmatprep.subr.mxu0 0.0
        %1487 = vmatpush1.msra.mxu0 0.0
        %1488 = vmatprep.subr.mxu0 0.0
        %1489 = vmatpush1.msra.mxu0 0.0
        %1490 = vmatprep.subr.mxu0 0.0
        %1491 = vmatpush1.msra.mxu0 0.0
        %1492 = vmatprep.subr.mxu0 0.0
        %1493 = vmatpush1.msra.mxu0 0.0
        %1494 = vmatprep.subr.mxu0 0.0
        %1495 = vmatpush1.msra.mxu0 0.0
        %1496 = vmatprep.subr.mxu0 0.0
        %1497 = vmatpush1.msra.mxu0 0.0
        %1498 = vmatprep.subr.mxu0 0.0
        %1499 = vmatpush1.msra.mxu0 0.0
        %1500 = vmatprep.subr.mxu0 0.0
        %1501 = vmatpush1.msra.mxu0 0.0
        %1502 = vmatprep.subr.mxu0 0.0
        %1503 = vmatpush1.msra.mxu0 0.0
        %1504 = vmatprep.subr.mxu0 0.0
        %1505 = vmatpush1.msra.mxu0 0.0
        %1506 = vmatprep.subr.mxu0 0.0
        %1507 = vmatpush1.msra.mxu0 0.0
        %1508 = vmatprep.subr.mxu0 0.0
        %1509 = vmatpush1.msra.mxu0 0.0
        %1510 = vmatprep.subr.mxu0 0.0
        %1511 = vmatpush1.msra.mxu0 0.0
        %1512 = vmatprep.subr.mxu0 0.0
        %1513 = vmatpush1.msra.mxu0 0.0
        %1514 = vmatprep.subr.mxu0 0.0
        %1515 = vmatpush1.msra.mxu0 0.0
        %1516 = vmatprep.subr.mxu0 0.0
        %1517 = vmatpush1.msra.mxu0 0.0
        %1518 = vmatprep.subr.mxu0 0.0
        %1519 = vmatpush1.msra.mxu0 0.0
        %1520 = vmatprep.subr.mxu0 0.0
        %1521 = vmatpush1.msra.mxu0 0.0
        %1522 = vmatprep.subr.mxu0 0.0
        %1523 = vmatpush1.msra.mxu0 0.0
        %1524 = vmatprep.subr.mxu0 0.0
        %1525 = vmatpush1.msra.mxu0 0.0
        %1526 = vmatprep.subr.mxu0 0.0
        %1527 = vmatpush1.msra.mxu0 0.0
        %1528 = vmatprep.subr.mxu0 0.0
        %1529 = vmatpush1.msra.mxu0 0.0
        %1530 = vmatprep.subr.mxu0 0.0
        %1531 = vmatpush1.msra.mxu0 0.0
        %1532 = vmatprep.mubr.f32.mxu0 0.0
        %1533 = vmatmul.mubr.f32.gmra.mrb[0].mxu0 %v749
        %v1534 = vpop.f32.mrb[0].mxu0
        %v1535 = vadd.f32 0.0, %v1534
        %v1536 = vpop.f32.mrb[0].mxu0
        %1537 = vdwg.mxu0
        %v1538 = vadd.f32 %v1462, %v1535
        %1539 = vrot.lane.b32.xlu0 %v1388, 127
        %v1540 = vpop.permute.xlu0 %1539
        %v1541 = vsel %vm203, %v1540, 0
        %1543 = vmatprep.subr.mxu0 0.0
        %1544 = vmatpush1.msra.mxu0 %v1541
        %1545 = vmatprep.subr.mxu0 0.0
        %1546 = vmatpush1.msra.mxu0 0.0
        %1547 = vmatprep.subr.mxu0 0.0
        %1548 = vmatpush1.msra.mxu0 0.0
        %1549 = vmatprep.subr.mxu0 0.0
        %1550 = vmatpush1.msra.mxu0 0.0
        %1551 = vmatprep.subr.mxu0 0.0
        %1552 = vmatpush1.msra.mxu0 0.0
        %1553 = vmatprep.subr.mxu0 0.0
        %1554 = vmatpush1.msra.mxu0 0.0
        %1555 = vmatprep.subr.mxu0 0.0
        %1556 = vmatpush1.msra.mxu0 0.0
        %1557 = vmatprep.subr.mxu0 0.0
        %1558 = vmatpush1.msra.mxu0 0.0
        %1559 = vmatprep.subr.mxu0 0.0
        %1560 = vmatpush1.msra.mxu0 0.0
        %1561 = vmatprep.subr.mxu0 0.0
        %1562 = vmatpush1.msra.mxu0 0.0
        %1563 = vmatprep.subr.mxu0 0.0
        %1564 = vmatpush1.msra.mxu0 0.0
        %1565 = vmatprep.subr.mxu0 0.0
        %1566 = vmatpush1.msra.mxu0 0.0
        %1567 = vmatprep.subr.mxu0 0.0
        %1568 = vmatpush1.msra.mxu0 0.0
        %1569 = vmatprep.subr.mxu0 0.0
        %1570 = vmatpush1.msra.mxu0 0.0
        %1571 = vmatprep.subr.mxu0 0.0
        %1572 = vmatpush1.msra.mxu0 0.0
        %1573 = vmatprep.subr.mxu0 0.0
        %1574 = vmatpush1.msra.mxu0 0.0
        %1575 = vmatprep.subr.mxu0 0.0
        %1576 = vmatpush1.msra.mxu0 0.0
        %1577 = vmatprep.subr.mxu0 0.0
        %1578 = vmatpush1.msra.mxu0 0.0
        %1579 = vmatprep.subr.mxu0 0.0
        %1580 = vmatpush1.msra.mxu0 0.0
        %1581 = vmatprep.subr.mxu0 0.0
        %1582 = vmatpush1.msra.mxu0 0.0
        %1583 = vmatprep.subr.mxu0 0.0
        %1584 = vmatpush1.msra.mxu0 0.0
        %1585 = vmatprep.subr.mxu0 0.0
        %1586 = vmatpush1.msra.mxu0 0.0
        %1587 = vmatprep.subr.mxu0 0.0
        %1588 = vmatpush1.msra.mxu0 0.0
        %1589 = vmatprep.subr.mxu0 0.0
        %1590 = vmatpush1.msra.mxu0 0.0
        %1591 = vmatprep.subr.mxu0 0.0
        %1592 = vmatpush1.msra.mxu0 0.0
        %1593 = vmatprep.subr.mxu0 0.0
        %1594 = vmatpush1.msra.mxu0 0.0
        %1595 = vmatprep.subr.mxu0 0.0
        %1596 = vmatpush1.msra.mxu0 0.0
        %1597 = vmatprep.subr.mxu0 0.0
        %1598 = vmatpush1.msra.mxu0 0.0
        %1599 = vmatprep.subr.mxu0 0.0
        %1600 = vmatpush1.msra.mxu0 0.0
        %1601 = vmatprep.subr.mxu0 0.0
        %1602 = vmatpush1.msra.mxu0 0.0
        %1603 = vmatprep.subr.mxu0 0.0
        %1604 = vmatpush1.msra.mxu0 0.0
        %1605 = vmatprep.subr.mxu0 0.0
        %1606 = vmatpush1.msra.mxu0 0.0
        %1607 = vmatprep.mubr.f32.mxu0 0.0
        %1608 = vmatmul.mubr.f32.gmra.mrb[0].mxu0 %v828
        %v1609 = vpop.f32.mrb[0].mxu0
        %v1610 = vadd.f32 0.0, %v1609
        %v1611 = vpop.f32.mrb[0].mxu0
        %1612 = vdwg.mxu0
        %v1613 = vadd.f32 %v1538, %v1610
        %v1616 = vunpack.c.l.s4 1966171168
        %v1617 = vunpack.c.0.s8 %v1616
        %v1618 = vlaneseq
        %v1619 = vshrl.u32 %v1618, 7
        %v1620 = vsub.s32 %v1617, %v1619
        %v1621 = vrot.slane %v1613, %v1620
        %v1622 = vcombine.high %v1621, %v1621
        %v1624 = vunpack.c.l.s4 1966171168
        %v1625 = vunpack.c.0.s8 %v1624
        %v1626 = vlaneseq
        %v1627 = vshrl.u32 %v1626, 7
        %v1628 = vsub.s32 %v1625, %v1627
        %v1629 = vrot.slane %v1621, %v1628
        %v1631 = vunpack.c.l.s4 1966171168
        %v1632 = vunpack.c.0.s8 %v1631
        %v1633 = vlaneseq
        %v1634 = vshrl.u32 %v1633, 7
        %v1635 = vsub.s32 %v1632, %v1634
        %v1636 = vrot.slane %v1622, %v1635
        %v1637 = vcombine.high %v1629, %v1629
        %v1638 = vcombine.high %v1636, %v1636
        %1643 = vst.msk [vmem:[%s178 + $0x1] sm:$0x1] %vm932, %v1629
        %1644 = vst.msk [vmem:[%s178 + $0x9] sm:$0x1] %vm932, %v1636
        %1645 = vst.msk [vmem:[%s178 + $0x11] sm:$0x1] %vm932, %v1637
        %1646 = vst.msk [vmem:[%s178 + $0x19] sm:$0x1] %vm932, %v1638
        %v1647 = vld [vmem:[%s1387] sm:$0xf]
        %v1648 = vld [vmem:[%s1463] sm:$0xf]
        %v1650 = vsel %vm203, %v1648, 0
        %1652 = vmatprep.subr.mxu0 0.0
        %1653 = vmatpush1.msra.mxu0 %v1650
        %1654 = vmatprep.subr.mxu0 0.0
        %1655 = vmatpush1.msra.mxu0 0.0
        %1656 = vmatprep.subr.mxu0 0.0
        %1657 = vmatpush1.msra.mxu0 0.0
        %1658 = vmatprep.subr.mxu0 0.0
        %1659 = vmatpush1.msra.mxu0 0.0
        %1660 = vmatprep.subr.mxu0 0.0
        %1661 = vmatpush1.msra.mxu0 0.0
        %1662 = vmatprep.subr.mxu0 0.0
        %1663 = vmatpush1.msra.mxu0 0.0
        %1664 = vmatprep.subr.mxu0 0.0
        %1665 = vmatpush1.msra.mxu0 0.0
        %1666 = vmatprep.subr.mxu0 0.0
        %1667 = vmatpush1.msra.mxu0 0.0
        %1668 = vmatprep.subr.mxu0 0.0
        %1669 = vmatpush1.msra.mxu0 0.0
        %1670 = vmatprep.subr.mxu0 0.0
        %1671 = vmatpush1.msra.mxu0 0.0
        %1672 = vmatprep.subr.mxu0 0.0
        %1673 = vmatpush1.msra.mxu0 0.0
        %1674 = vmatprep.subr.mxu0 0.0
        %1675 = vmatpush1.msra.mxu0 0.0
        %1676 = vmatprep.subr.mxu0 0.0
        %1677 = vmatpush1.msra.mxu0 0.0
        %1678 = vmatprep.subr.mxu0 0.0
        %1679 = vmatpush1.msra.mxu0 0.0
        %1680 = vmatprep.subr.mxu0 0.0
        %1681 = vmatpush1.msra.mxu0 0.0
        %1682 = vmatprep.subr.mxu0 0.0
        %1683 = vmatpush1.msra.mxu0 0.0
        %1684 = vmatprep.subr.mxu0 0.0
        %1685 = vmatpush1.msra.mxu0 0.0
        %1686 = vmatprep.subr.mxu0 0.0
        %1687 = vmatpush1.msra.mxu0 0.0
        %1688 = vmatprep.subr.mxu0 0.0
        %1689 = vmatpush1.msra.mxu0 0.0
        %1690 = vmatprep.subr.mxu0 0.0
        %1691 = vmatpush1.msra.mxu0 0.0
        %1692 = vmatprep.subr.mxu0 0.0
        %1693 = vmatpush1.msra.mxu0 0.0
        %1694 = vmatprep.subr.mxu0 0.0
        %1695 = vmatpush1.msra.mxu0 0.0
        %1696 = vmatprep.subr.mxu0 0.0
        %1697 = vmatpush1.msra.mxu0 0.0
        %1698 = vmatprep.subr.mxu0 0.0
        %1699 = vmatpush1.msra.mxu0 0.0
        %1700 = vmatprep.subr.mxu0 0.0
        %1701 = vmatpush1.msra.mxu0 0.0
        %1702 = vmatprep.subr.mxu0 0.0
        %1703 = vmatpush1.msra.mxu0 0.0
        %1704 = vmatprep.subr.mxu0 0.0
        %1705 = vmatpush1.msra.mxu0 0.0
        %1706 = vmatprep.subr.mxu0 0.0
        %1707 = vmatpush1.msra.mxu0 0.0
        %1708 = vmatprep.subr.mxu0 0.0
        %1709 = vmatpush1.msra.mxu0 0.0
        %1710 = vmatprep.subr.mxu0 0.0
        %1711 = vmatpush1.msra.mxu0 0.0
        %1712 = vmatprep.subr.mxu0 0.0
        %1713 = vmatpush1.msra.mxu0 0.0
        %1714 = vmatprep.subr.mxu0 0.0
        %1715 = vmatpush1.msra.mxu0 0.0
        %1716 = vmatprep.mubr.f32.mxu0 0.0
        %1717 = vmatmul.mubr.f32.gmra.mrb[0].mxu0 %v201
        %v1718 = vpop.f32.mrb[0].mxu0
        %v1719 = vadd.f32 0.0, %v1718
        %v1720 = vpop.f32.mrb[0].mxu0
        %1721 = vdwg.mxu0
        %v1723 = vsel %vm203, %v1647, 0
        %1725 = vmatprep.subr.mxu0 0.0
        %1726 = vmatpush1.msra.mxu0 %v1723
        %1727 = vmatprep.subr.mxu0 0.0
        %1728 = vmatpush1.msra.mxu0 0.0
        %1729 = vmatprep.subr.mxu0 0.0
        %1730 = vmatpush1.msra.mxu0 0.0
        %1731 = vmatprep.subr.mxu0 0.0
        %1732 = vmatpush1.msra.mxu0 0.0
        %1733 = vmatprep.subr.mxu0 0.0
        %1734 = vmatpush1.msra.mxu0 0.0
        %1735 = vmatprep.subr.mxu0 0.0
        %1736 = vmatpush1.msra.mxu0 0.0
        %1737 = vmatprep.subr.mxu0 0.0
        %1738 = vmatpush1.msra.mxu0 0.0
        %1739 = vmatprep.subr.mxu0 0.0
        %1740 = vmatpush1.msra.mxu0 0.0
        %1741 = vmatprep.subr.mxu0 0.0
        %1742 = vmatpush1.msra.mxu0 0.0
        %1743 = vmatprep.subr.mxu0 0.0
        %1744 = vmatpush1.msra.mxu0 0.0
        %1745 = vmatprep.subr.mxu0 0.0
        %1746 = vmatpush1.msra.mxu0 0.0
        %1747 = vmatprep.subr.mxu0 0.0
        %1748 = vmatpush1.msra.mxu0 0.0
        %1749 = vmatprep.subr.mxu0 0.0
        %1750 = vmatpush1.msra.mxu0 0.0
        %1751 = vmatprep.subr.mxu0 0.0
        %1752 = vmatpush1.msra.mxu0 0.0
        %1753 = vmatprep.subr.mxu0 0.0
        %1754 = vmatpush1.msra.mxu0 0.0
        %1755 = vmatprep.subr.mxu0 0.0
        %1756 = vmatpush1.msra.mxu0 0.0
        %1757 = vmatprep.subr.mxu0 0.0
        %1758 = vmatpush1.msra.mxu0 0.0
        %1759 = vmatprep.subr.mxu0 0.0
        %1760 = vmatpush1.msra.mxu0 0.0
        %1761 = vmatprep.subr.mxu0 0.0
        %1762 = vmatpush1.msra.mxu0 0.0
        %1763 = vmatprep.subr.mxu0 0.0
        %1764 = vmatpush1.msra.mxu0 0.0
        %1765 = vmatprep.subr.mxu0 0.0
        %1766 = vmatpush1.msra.mxu0 0.0
        %1767 = vmatprep.subr.mxu0 0.0
        %1768 = vmatpush1.msra.mxu0 0.0
        %1769 = vmatprep.subr.mxu0 0.0
        %1770 = vmatpush1.msra.mxu0 0.0
        %1771 = vmatprep.subr.mxu0 0.0
        %1772 = vmatpush1.msra.mxu0 0.0
        %1773 = vmatprep.subr.mxu0 0.0
        %1774 = vmatpush1.msra.mxu0 0.0
        %1775 = vmatprep.subr.mxu0 0.0
        %1776 = vmatpush1.msra.mxu0 0.0
        %1777 = vmatprep.subr.mxu0 0.0
        %1778 = vmatpush1.msra.mxu0 0.0
        %1779 = vmatprep.subr.mxu0 0.0
        %1780 = vmatpush1.msra.mxu0 0.0
        %1781 = vmatprep.subr.mxu0 0.0
        %1782 = vmatpush1.msra.mxu0 0.0
        %1783 = vmatprep.subr.mxu0 0.0
        %1784 = vmatpush1.msra.mxu0 0.0
        %1785 = vmatprep.subr.mxu0 0.0
        %1786 = vmatpush1.msra.mxu0 0.0
        %1787 = vmatprep.subr.mxu0 0.0
        %1788 = vmatpush1.msra.mxu0 0.0
        %1789 = vmatprep.mubr.f32.mxu0 0.0
        %1790 = vmatmul.mubr.f32.gmra.mrb[0].mxu0 %v278
        %v1791 = vpop.f32.mrb[0].mxu0
        %v1792 = vadd.f32 %v1719, %v1791
        %v1793 = vpop.f32.mrb[0].mxu0
        %1794 = vdwg.mxu0
        %1795 = vrot.lane.b32.xlu0 %v1647, 127
        %v1796 = vpop.permute.xlu0 %1795
        %v1797 = vsel %vm203, %v1796, 0
        %1799 = vmatprep.subr.mxu0 0.0
        %1800 = vmatpush1.msra.mxu0 %v1797
        %1801 = vmatprep.subr.mxu0 0.0
        %1802 = vmatpush1.msra.mxu0 0.0
        %1803 = vmatprep.subr.mxu0 0.0
        %1804 = vmatpush1.msra.mxu0 0.0
        %1805 = vmatprep.subr.mxu0 0.0
        %1806 = vmatpush1.msra.mxu0 0.0
        %1807 = vmatprep.subr.mxu0 0.0
        %1808 = vmatpush1.msra.mxu0 0.0
        %1809 = vmatprep.subr.mxu0 0.0
        %1810 = vmatpush1.msra.mxu0 0.0
        %1811 = vmatprep.subr.mxu0 0.0
        %1812 = vmatpush1.msra.mxu0 0.0
        %1813 = vmatprep.subr.mxu0 0.0
        %1814 = vmatpush1.msra.mxu0 0.0
        %1815 = vmatprep.subr.mxu0 0.0
        %1816 = vmatpush1.msra.mxu0 0.0
        %1817 = vmatprep.subr.mxu0 0.0
        %1818 = vmatpush1.msra.mxu0 0.0
        %1819 = vmatprep.subr.mxu0 0.0
        %1820 = vmatpush1.msra.mxu0 0.0
        %1821 = vmatprep.subr.mxu0 0.0
        %1822 = vmatpush1.msra.mxu0 0.0
        %1823 = vmatprep.subr.mxu0 0.0
        %1824 = vmatpush1.msra.mxu0 0.0
        %1825 = vmatprep.subr.mxu0 0.0
        %1826 = vmatpush1.msra.mxu0 0.0
        %1827 = vmatprep.subr.mxu0 0.0
        %1828 = vmatpush1.msra.mxu0 0.0
        %1829 = vmatprep.subr.mxu0 0.0
        %1830 = vmatpush1.msra.mxu0 0.0
        %1831 = vmatprep.subr.mxu0 0.0
        %1832 = vmatpush1.msra.mxu0 0.0
        %1833 = vmatprep.subr.mxu0 0.0
        %1834 = vmatpush1.msra.mxu0 0.0
        %1835 = vmatprep.subr.mxu0 0.0
        %1836 = vmatpush1.msra.mxu0 0.0
        %1837 = vmatprep.subr.mxu0 0.0
        %1838 = vmatpush1.msra.mxu0 0.0
        %1839 = vmatprep.subr.mxu0 0.0
        %1840 = vmatpush1.msra.mxu0 0.0
        %1841 = vmatprep.subr.mxu0 0.0
        %1842 = vmatpush1.msra.mxu0 0.0
        %1843 = vmatprep.subr.mxu0 0.0
        %1844 = vmatpush1.msra.mxu0 0.0
        %1845 = vmatprep.subr.mxu0 0.0
        %1846 = vmatpush1.msra.mxu0 0.0
        %1847 = vmatprep.subr.mxu0 0.0
        %1848 = vmatpush1.msra.mxu0 0.0
        %1849 = vmatprep.subr.mxu0 0.0
        %1850 = vmatpush1.msra.mxu0 0.0
        %1851 = vmatprep.subr.mxu0 0.0
        %1852 = vmatpush1.msra.mxu0 0.0
        %1853 = vmatprep.subr.mxu0 0.0
        %1854 = vmatpush1.msra.mxu0 0.0
        %1855 = vmatprep.subr.mxu0 0.0
        %1856 = vmatpush1.msra.mxu0 0.0
        %1857 = vmatprep.subr.mxu0 0.0
        %1858 = vmatpush1.msra.mxu0 0.0
        %1859 = vmatprep.subr.mxu0 0.0
        %1860 = vmatpush1.msra.mxu0 0.0
        %1861 = vmatprep.subr.mxu0 0.0
        %1862 = vmatpush1.msra.mxu0 0.0
        %1863 = vmatprep.mubr.f32.mxu0 0.0
        %1864 = vmatmul.mubr.f32.gmra.mrb[0].mxu0 %v356
        %v1865 = vpop.f32.mrb[0].mxu0
        %v1866 = vadd.f32 0.0, %v1865
        %v1867 = vpop.f32.mrb[0].mxu0
        %1868 = vdwg.mxu0
        %v1869 = vadd.f32 %v1792, %v1866
        %s1870 = scalar_lea.vmem %s149, 72 [#allocation2]
        %v1871 = vld [vmem:[%s1870] sm:$0xf]
        %v1873 = vsel %vm203, %v1871, 0
        %1875 = vmatprep.subr.mxu0 0.0
        %1876 = vmatpush1.msra.mxu0 %v1873
        %1877 = vmatprep.subr.mxu0 0.0
        %1878 = vmatpush1.msra.mxu0 0.0
        %1879 = vmatprep.subr.mxu0 0.0
        %1880 = vmatpush1.msra.mxu0 0.0
        %1881 = vmatprep.subr.mxu0 0.0
        %1882 = vmatpush1.msra.mxu0 0.0
        %1883 = vmatprep.subr.mxu0 0.0
        %1884 = vmatpush1.msra.mxu0 0.0
        %1885 = vmatprep.subr.mxu0 0.0
        %1886 = vmatpush1.msra.mxu0 0.0
        %1887 = vmatprep.subr.mxu0 0.0
        %1888 = vmatpush1.msra.mxu0 0.0
        %1889 = vmatprep.subr.mxu0 0.0
        %1890 = vmatpush1.msra.mxu0 0.0
        %1891 = vmatprep.subr.mxu0 0.0
        %1892 = vmatpush1.msra.mxu0 0.0
        %1893 = vmatprep.subr.mxu0 0.0
        %1894 = vmatpush1.msra.mxu0 0.0
        %1895 = vmatprep.subr.mxu0 0.0
        %1896 = vmatpush1.msra.mxu0 0.0
        %1897 = vmatprep.subr.mxu0 0.0
        %1898 = vmatpush1.msra.mxu0 0.0
        %1899 = vmatprep.subr.mxu0 0.0
        %1900 = vmatpush1.msra.mxu0 0.0
        %1901 = vmatprep.subr.mxu0 0.0
        %1902 = vmatpush1.msra.mxu0 0.0
        %1903 = vmatprep.subr.mxu0 0.0
        %1904 = vmatpush1.msra.mxu0 0.0
        %1905 = vmatprep.subr.mxu0 0.0
        %1906 = vmatpush1.msra.mxu0 0.0
        %1907 = vmatprep.subr.mxu0 0.0
        %1908 = vmatpush1.msra.mxu0 0.0
        %1909 = vmatprep.subr.mxu0 0.0
        %1910 = vmatpush1.msra.mxu0 0.0
        %1911 = vmatprep.subr.mxu0 0.0
        %1912 = vmatpush1.msra.mxu0 0.0
        %1913 = vmatprep.subr.mxu0 0.0
        %1914 = vmatpush1.msra.mxu0 0.0
        %1915 = vmatprep.subr.mxu0 0.0
        %1916 = vmatpush1.msra.mxu0 0.0
        %1917 = vmatprep.subr.mxu0 0.0
        %1918 = vmatpush1.msra.mxu0 0.0
        %1919 = vmatprep.subr.mxu0 0.0
        %1920 = vmatpush1.msra.mxu0 0.0
        %1921 = vmatprep.subr.mxu0 0.0
        %1922 = vmatpush1.msra.mxu0 0.0
        %1923 = vmatprep.subr.mxu0 0.0
        %1924 = vmatpush1.msra.mxu0 0.0
        %1925 = vmatprep.subr.mxu0 0.0
        %1926 = vmatpush1.msra.mxu0 0.0
        %1927 = vmatprep.subr.mxu0 0.0
        %1928 = vmatpush1.msra.mxu0 0.0
        %1929 = vmatprep.subr.mxu0 0.0
        %1930 = vmatpush1.msra.mxu0 0.0
        %1931 = vmatprep.subr.mxu0 0.0
        %1932 = vmatpush1.msra.mxu0 0.0
        %1933 = vmatprep.subr.mxu0 0.0
        %1934 = vmatpush1.msra.mxu0 0.0
        %1935 = vmatprep.subr.mxu0 0.0
        %1936 = vmatpush1.msra.mxu0 0.0
        %1937 = vmatprep.subr.mxu0 0.0
        %1938 = vmatpush1.msra.mxu0 0.0
        %1939 = vmatprep.mubr.f32.mxu0 0.0
        %1940 = vmatmul.mubr.f32.gmra.mrb[0].mxu0 %v434
        %v1941 = vpop.f32.mrb[0].mxu0
        %v1942 = vadd.f32 0.0, %v1941
        %v1943 = vpop.f32.mrb[0].mxu0
        %1944 = vdwg.mxu0
        %v1945 = vadd.f32 %v1869, %v1942
        %s1946 = scalar_lea.vmem %s149, 104 [#allocation2]
        %v1947 = vld [vmem:[%s1946] sm:$0xf]
        %v1949 = vsel %vm203, %v1947, 0
        %1951 = vmatprep.subr.mxu0 0.0
        %1952 = vmatpush1.msra.mxu0 %v1949
        %1953 = vmatprep.subr.mxu0 0.0
        %1954 = vmatpush1.msra.mxu0 0.0
        %1955 = vmatprep.subr.mxu0 0.0
        %1956 = vmatpush1.msra.mxu0 0.0
        %1957 = vmatprep.subr.mxu0 0.0
        %1958 = vmatpush1.msra.mxu0 0.0
        %1959 = vmatprep.subr.mxu0 0.0
        %1960 = vmatpush1.msra.mxu0 0.0
        %1961 = vmatprep.subr.mxu0 0.0
        %1962 = vmatpush1.msra.mxu0 0.0
        %1963 = vmatprep.subr.mxu0 0.0
        %1964 = vmatpush1.msra.mxu0 0.0
        %1965 = vmatprep.subr.mxu0 0.0
        %1966 = vmatpush1.msra.mxu0 0.0
        %1967 = vmatprep.subr.mxu0 0.0
        %1968 = vmatpush1.msra.mxu0 0.0
        %1969 = vmatprep.subr.mxu0 0.0
        %1970 = vmatpush1.msra.mxu0 0.0
        %1971 = vmatprep.subr.mxu0 0.0
        %1972 = vmatpush1.msra.mxu0 0.0
        %1973 = vmatprep.subr.mxu0 0.0
        %1974 = vmatpush1.msra.mxu0 0.0
        %1975 = vmatprep.subr.mxu0 0.0
        %1976 = vmatpush1.msra.mxu0 0.0
        %1977 = vmatprep.subr.mxu0 0.0
        %1978 = vmatpush1.msra.mxu0 0.0
        %1979 = vmatprep.subr.mxu0 0.0
        %1980 = vmatpush1.msra.mxu0 0.0
        %1981 = vmatprep.subr.mxu0 0.0
        %1982 = vmatpush1.msra.mxu0 0.0
        %1983 = vmatprep.subr.mxu0 0.0
        %1984 = vmatpush1.msra.mxu0 0.0
        %1985 = vmatprep.subr.mxu0 0.0
        %1986 = vmatpush1.msra.mxu0 0.0
        %1987 = vmatprep.subr.mxu0 0.0
        %1988 = vmatpush1.msra.mxu0 0.0
        %1989 = vmatprep.subr.mxu0 0.0
        %1990 = vmatpush1.msra.mxu0 0.0
        %1991 = vmatprep.subr.mxu0 0.0
        %1992 = vmatpush1.msra.mxu0 0.0
        %1993 = vmatprep.subr.mxu0 0.0
        %1994 = vmatpush1.msra.mxu0 0.0
        %1995 = vmatprep.subr.mxu0 0.0
        %1996 = vmatpush1.msra.mxu0 0.0
        %1997 = vmatprep.subr.mxu0 0.0
        %1998 = vmatpush1.msra.mxu0 0.0
        %1999 = vmatprep.subr.mxu0 0.0
        %2000 = vmatpush1.msra.mxu0 0.0
        %2001 = vmatprep.subr.mxu0 0.0
        %2002 = vmatpush1.msra.mxu0 0.0
        %2003 = vmatprep.subr.mxu0 0.0
        %2004 = vmatpush1.msra.mxu0 0.0
        %2005 = vmatprep.subr.mxu0 0.0
        %2006 = vmatpush1.msra.mxu0 0.0
        %2007 = vmatprep.subr.mxu0 0.0
        %2008 = vmatpush1.msra.mxu0 0.0
        %2009 = vmatprep.subr.mxu0 0.0
        %2010 = vmatpush1.msra.mxu0 0.0
        %2011 = vmatprep.subr.mxu0 0.0
        %2012 = vmatpush1.msra.mxu0 0.0
        %2013 = vmatprep.subr.mxu0 0.0
        %2014 = vmatpush1.msra.mxu0 0.0
        %2015 = vmatprep.mubr.f32.mxu0 0.0
        %2016 = vmatmul.mubr.f32.gmra.mrb[0].mxu0 %v513
        %v2017 = vpop.f32.mrb[0].mxu0
        %v2018 = vadd.f32 0.0, %v2017
        %v2019 = vpop.f32.mrb[0].mxu0
        %2020 = vdwg.mxu0
        %v2021 = vadd.f32 %v1945, %v2018
        %2022 = vrot.lane.b32.xlu0 %v1871, 127
        %v2023 = vpop.permute.xlu0 %2022
        %v2024 = vsel %vm203, %v2023, 0
        %2026 = vmatprep.subr.mxu0 0.0
        %2027 = vmatpush1.msra.mxu0 %v2024
        %2028 = vmatprep.subr.mxu0 0.0
        %2029 = vmatpush1.msra.mxu0 0.0
        %2030 = vmatprep.subr.mxu0 0.0
        %2031 = vmatpush1.msra.mxu0 0.0
        %2032 = vmatprep.subr.mxu0 0.0
        %2033 = vmatpush1.msra.mxu0 0.0
        %2034 = vmatprep.subr.mxu0 0.0
        %2035 = vmatpush1.msra.mxu0 0.0
        %2036 = vmatprep.subr.mxu0 0.0
        %2037 = vmatpush1.msra.mxu0 0.0
        %2038 = vmatprep.subr.mxu0 0.0
        %2039 = vmatpush1.msra.mxu0 0.0
        %2040 = vmatprep.subr.mxu0 0.0
        %2041 = vmatpush1.msra.mxu0 0.0
        %2042 = vmatprep.subr.mxu0 0.0
        %2043 = vmatpush1.msra.mxu0 0.0
        %2044 = vmatprep.subr.mxu0 0.0
        %2045 = vmatpush1.msra.mxu0 0.0
        %2046 = vmatprep.subr.mxu0 0.0
        %2047 = vmatpush1.msra.mxu0 0.0
        %2048 = vmatprep.subr.mxu0 0.0
        %2049 = vmatpush1.msra.mxu0 0.0
        %2050 = vmatprep.subr.mxu0 0.0
        %2051 = vmatpush1.msra.mxu0 0.0
        %2052 = vmatprep.subr.mxu0 0.0
        %2053 = vmatpush1.msra.mxu0 0.0
        %2054 = vmatprep.subr.mxu0 0.0
        %2055 = vmatpush1.msra.mxu0 0.0
        %2056 = vmatprep.subr.mxu0 0.0
        %2057 = vmatpush1.msra.mxu0 0.0
        %2058 = vmatprep.subr.mxu0 0.0
        %2059 = vmatpush1.msra.mxu0 0.0
        %2060 = vmatprep.subr.mxu0 0.0
        %2061 = vmatpush1.msra.mxu0 0.0
        %2062 = vmatprep.subr.mxu0 0.0
        %2063 = vmatpush1.msra.mxu0 0.0
        %2064 = vmatprep.subr.mxu0 0.0
        %2065 = vmatpush1.msra.mxu0 0.0
        %2066 = vmatprep.subr.mxu0 0.0
        %2067 = vmatpush1.msra.mxu0 0.0
        %2068 = vmatprep.subr.mxu0 0.0
        %2069 = vmatpush1.msra.mxu0 0.0
        %2070 = vmatprep.subr.mxu0 0.0
        %2071 = vmatpush1.msra.mxu0 0.0
        %2072 = vmatprep.subr.mxu0 0.0
        %2073 = vmatpush1.msra.mxu0 0.0
        %2074 = vmatprep.subr.mxu0 0.0
        %2075 = vmatpush1.msra.mxu0 0.0
        %2076 = vmatprep.subr.mxu0 0.0
        %2077 = vmatpush1.msra.mxu0 0.0
        %2078 = vmatprep.subr.mxu0 0.0
        %2079 = vmatpush1.msra.mxu0 0.0
        %2080 = vmatprep.subr.mxu0 0.0
        %2081 = vmatpush1.msra.mxu0 0.0
        %2082 = vmatprep.subr.mxu0 0.0
        %2083 = vmatpush1.msra.mxu0 0.0
        %2084 = vmatprep.subr.mxu0 0.0
        %2085 = vmatpush1.msra.mxu0 0.0
        %2086 = vmatprep.subr.mxu0 0.0
        %2087 = vmatpush1.msra.mxu0 0.0
        %2088 = vmatprep.subr.mxu0 0.0
        %2089 = vmatpush1.msra.mxu0 0.0
        %2090 = vmatprep.mubr.f32.mxu0 0.0
        %2091 = vmatmul.mubr.f32.gmra.mrb[0].mxu0 %v592
        %v2092 = vpop.f32.mrb[0].mxu0
        %v2093 = vadd.f32 0.0, %v2092
        %v2094 = vpop.f32.mrb[0].mxu0
        %2095 = vdwg.mxu0
        %v2096 = vadd.f32 %v2021, %v2093
        %s2097 = scalar_lea.vmem %s149, 12 [#allocation2]
        %v2098 = vld [vmem:[%s2097] sm:$0xf]
        %v2100 = vsel %vm203, %v2098, 0
        %2102 = vmatprep.subr.mxu0 0.0
        %2103 = vmatpush1.msra.mxu0 %v2100
        %2104 = vmatprep.subr.mxu0 0.0
        %2105 = vmatpush1.msra.mxu0 0.0
        %2106 = vmatprep.subr.mxu0 0.0
        %2107 = vmatpush1.msra.mxu0 0.0
        %2108 = vmatprep.subr.mxu0 0.0
        %2109 = vmatpush1.msra.mxu0 0.0
        %2110 = vmatprep.subr.mxu0 0.0
        %2111 = vmatpush1.msra.mxu0 0.0
        %2112 = vmatprep.subr.mxu0 0.0
        %2113 = vmatpush1.msra.mxu0 0.0
        %2114 = vmatprep.subr.mxu0 0.0
        %2115 = vmatpush1.msra.mxu0 0.0
        %2116 = vmatprep.subr.mxu0 0.0
        %2117 = vmatpush1.msra.mxu0 0.0
        %2118 = vmatprep.subr.mxu0 0.0
        %2119 = vmatpush1.msra.mxu0 0.0
        %2120 = vmatprep.subr.mxu0 0.0
        %2121 = vmatpush1.msra.mxu0 0.0
        %2122 = vmatprep.subr.mxu0 0.0
        %2123 = vmatpush1.msra.mxu0 0.0
        %2124 = vmatprep.subr.mxu0 0.0
        %2125 = vmatpush1.msra.mxu0 0.0
        %2126 = vmatprep.subr.mxu0 0.0
        %2127 = vmatpush1.msra.mxu0 0.0
        %2128 = vmatprep.subr.mxu0 0.0
        %2129 = vmatpush1.msra.mxu0 0.0
        %2130 = vmatprep.subr.mxu0 0.0
        %2131 = vmatpush1.msra.mxu0 0.0
        %2132 = vmatprep.subr.mxu0 0.0
        %2133 = vmatpush1.msra.mxu0 0.0
        %2134 = vmatprep.subr.mxu0 0.0
        %2135 = vmatpush1.msra.mxu0 0.0
        %2136 = vmatprep.subr.mxu0 0.0
        %2137 = vmatpush1.msra.mxu0 0.0
        %2138 = vmatprep.subr.mxu0 0.0
        %2139 = vmatpush1.msra.mxu0 0.0
        %2140 = vmatprep.subr.mxu0 0.0
        %2141 = vmatpush1.msra.mxu0 0.0
        %2142 = vmatprep.subr.mxu0 0.0
        %2143 = vmatpush1.msra.mxu0 0.0
        %2144 = vmatprep.subr.mxu0 0.0
        %2145 = vmatpush1.msra.mxu0 0.0
        %2146 = vmatprep.subr.mxu0 0.0
        %2147 = vmatpush1.msra.mxu0 0.0
        %2148 = vmatprep.subr.mxu0 0.0
        %2149 = vmatpush1.msra.mxu0 0.0
        %2150 = vmatprep.subr.mxu0 0.0
        %2151 = vmatpush1.msra.mxu0 0.0
        %2152 = vmatprep.subr.mxu0 0.0
        %2153 = vmatpush1.msra.mxu0 0.0
        %2154 = vmatprep.subr.mxu0 0.0
        %2155 = vmatpush1.msra.mxu0 0.0
        %2156 = vmatprep.subr.mxu0 0.0
        %2157 = vmatpush1.msra.mxu0 0.0
        %2158 = vmatprep.subr.mxu0 0.0
        %2159 = vmatpush1.msra.mxu0 0.0
        %2160 = vmatprep.subr.mxu0 0.0
        %2161 = vmatpush1.msra.mxu0 0.0
        %2162 = vmatprep.subr.mxu0 0.0
        %2163 = vmatpush1.msra.mxu0 0.0
        %2164 = vmatprep.subr.mxu0 0.0
        %2165 = vmatpush1.msra.mxu0 0.0
        %2166 = vmatprep.mubr.f32.mxu0 0.0
        %2167 = vmatmul.mubr.f32.gmra.mrb[0].mxu0 %v670
        %v2168 = vpop.f32.mrb[0].mxu0
        %v2169 = vadd.f32 0.0, %v2168
        %v2170 = vpop.f32.mrb[0].mxu0
        %2171 = vdwg.mxu0
        %v2172 = vadd.f32 %v2096, %v2169
        %s2173 = scalar_lea.vmem %s149, 44 [#allocation2]
        %v2174 = vld [vmem:[%s2173] sm:$0xf]
        %v2176 = vsel %vm203, %v2174, 0
        %2178 = vmatprep.subr.mxu0 0.0
        %2179 = vmatpush1.msra.mxu0 %v2176
        %2180 = vmatprep.subr.mxu0 0.0
        %2181 = vmatpush1.msra.mxu0 0.0
        %2182 = vmatprep.subr.mxu0 0.0
        %2183 = vmatpush1.msra.mxu0 0.0
        %2184 = vmatprep.subr.mxu0 0.0
        %2185 = vmatpush1.msra.mxu0 0.0
        %2186 = vmatprep.subr.mxu0 0.0
        %2187 = vmatpush1.msra.mxu0 0.0
        %2188 = vmatprep.subr.mxu0 0.0
        %2189 = vmatpush1.msra.mxu0 0.0
        %2190 = vmatprep.subr.mxu0 0.0
        %2191 = vmatpush1.msra.mxu0 0.0
        %2192 = vmatprep.subr.mxu0 0.0
        %2193 = vmatpush1.msra.mxu0 0.0
        %2194 = vmatprep.subr.mxu0 0.0
        %2195 = vmatpush1.msra.mxu0 0.0
        %2196 = vmatprep.subr.mxu0 0.0
        %2197 = vmatpush1.msra.mxu0 0.0
        %2198 = vmatprep.subr.mxu0 0.0
        %2199 = vmatpush1.msra.mxu0 0.0
        %2200 = vmatprep.subr.mxu0 0.0
        %2201 = vmatpush1.msra.mxu0 0.0
        %2202 = vmatprep.subr.mxu0 0.0
        %2203 = vmatpush1.msra.mxu0 0.0
        %2204 = vmatprep.subr.mxu0 0.0
        %2205 = vmatpush1.msra.mxu0 0.0
        %2206 = vmatprep.subr.mxu0 0.0
        %2207 = vmatpush1.msra.mxu0 0.0
        %2208 = vmatprep.subr.mxu0 0.0
        %2209 = vmatpush1.msra.mxu0 0.0
        %2210 = vmatprep.subr.mxu0 0.0
        %2211 = vmatpush1.msra.mxu0 0.0
        %2212 = vmatprep.subr.mxu0 0.0
        %2213 = vmatpush1.msra.mxu0 0.0
        %2214 = vmatprep.subr.mxu0 0.0
        %2215 = vmatpush1.msra.mxu0 0.0
        %2216 = vmatprep.subr.mxu0 0.0
        %2217 = vmatpush1.msra.mxu0 0.0
        %2218 = vmatprep.subr.mxu0 0.0
        %2219 = vmatpush1.msra.mxu0 0.0
        %2220 = vmatprep.subr.mxu0 0.0
        %2221 = vmatpush1.msra.mxu0 0.0
        %2222 = vmatprep.subr.mxu0 0.0
        %2223 = vmatpush1.msra.mxu0 0.0
        %2224 = vmatprep.subr.mxu0 0.0
        %2225 = vmatpush1.msra.mxu0 0.0
        %2226 = vmatprep.subr.mxu0 0.0
        %2227 = vmatpush1.msra.mxu0 0.0
        %2228 = vmatprep.subr.mxu0 0.0
        %2229 = vmatpush1.msra.mxu0 0.0
        %2230 = vmatprep.subr.mxu0 0.0
        %2231 = vmatpush1.msra.mxu0 0.0
        %2232 = vmatprep.subr.mxu0 0.0
        %2233 = vmatpush1.msra.mxu0 0.0
        %2234 = vmatprep.subr.mxu0 0.0
        %2235 = vmatpush1.msra.mxu0 0.0
        %2236 = vmatprep.subr.mxu0 0.0
        %2237 = vmatpush1.msra.mxu0 0.0
        %2238 = vmatprep.subr.mxu0 0.0
        %2239 = vmatpush1.msra.mxu0 0.0
        %2240 = vmatprep.subr.mxu0 0.0
        %2241 = vmatpush1.msra.mxu0 0.0
        %2242 = vmatprep.mubr.f32.mxu0 0.0
        %2243 = vmatmul.mubr.f32.gmra.mrb[0].mxu0 %v749
        %v2244 = vpop.f32.mrb[0].mxu0
        %v2245 = vadd.f32 0.0, %v2244
        %v2246 = vpop.f32.mrb[0].mxu0
        %2247 = vdwg.mxu0
        %v2248 = vadd.f32 %v2172, %v2245
        %2249 = vrot.lane.b32.xlu0 %v2098, 127
        %v2250 = vpop.permute.xlu0 %2249
        %v2251 = vsel %vm203, %v2250, 0
        %2253 = vmatprep.subr.mxu0 0.0
        %2254 = vmatpush1.msra.mxu0 %v2251
        %2255 = vmatprep.subr.mxu0 0.0
        %2256 = vmatpush1.msra.mxu0 0.0
        %2257 = vmatprep.subr.mxu0 0.0
        %2258 = vmatpush1.msra.mxu0 0.0
        %2259 = vmatprep.subr.mxu0 0.0
        %2260 = vmatpush1.msra.mxu0 0.0
        %2261 = vmatprep.subr.mxu0 0.0
        %2262 = vmatpush1.msra.mxu0 0.0
        %2263 = vmatprep.subr.mxu0 0.0
        %2264 = vmatpush1.msra.mxu0 0.0
        %2265 = vmatprep.subr.mxu0 0.0
        %2266 = vmatpush1.msra.mxu0 0.0
        %2267 = vmatprep.subr.mxu0 0.0
        %2268 = vmatpush1.msra.mxu0 0.0
        %2269 = vmatprep.subr.mxu0 0.0
        %2270 = vmatpush1.msra.mxu0 0.0
        %2271 = vmatprep.subr.mxu0 0.0
        %2272 = vmatpush1.msra.mxu0 0.0
        %2273 = vmatprep.subr.mxu0 0.0
        %2274 = vmatpush1.msra.mxu0 0.0
        %2275 = vmatprep.subr.mxu0 0.0
        %2276 = vmatpush1.msra.mxu0 0.0
        %2277 = vmatprep.subr.mxu0 0.0
        %2278 = vmatpush1.msra.mxu0 0.0
        %2279 = vmatprep.subr.mxu0 0.0
        %2280 = vmatpush1.msra.mxu0 0.0
        %2281 = vmatprep.subr.mxu0 0.0
        %2282 = vmatpush1.msra.mxu0 0.0
        %2283 = vmatprep.subr.mxu0 0.0
        %2284 = vmatpush1.msra.mxu0 0.0
        %2285 = vmatprep.subr.mxu0 0.0
        %2286 = vmatpush1.msra.mxu0 0.0
        %2287 = vmatprep.subr.mxu0 0.0
        %2288 = vmatpush1.msra.mxu0 0.0
        %2289 = vmatprep.subr.mxu0 0.0
        %2290 = vmatpush1.msra.mxu0 0.0
        %2291 = vmatprep.subr.mxu0 0.0
        %2292 = vmatpush1.msra.mxu0 0.0
        %2293 = vmatprep.subr.mxu0 0.0
        %2294 = vmatpush1.msra.mxu0 0.0
        %2295 = vmatprep.subr.mxu0 0.0
        %2296 = vmatpush1.msra.mxu0 0.0
        %2297 = vmatprep.subr.mxu0 0.0
        %2298 = vmatpush1.msra.mxu0 0.0
        %2299 = vmatprep.subr.mxu0 0.0
        %2300 = vmatpush1.msra.mxu0 0.0
        %2301 = vmatprep.subr.mxu0 0.0
        %2302 = vmatpush1.msra.mxu0 0.0
        %2303 = vmatprep.subr.mxu0 0.0
        %2304 = vmatpush1.msra.mxu0 0.0
        %2305 = vmatprep.subr.mxu0 0.0
        %2306 = vmatpush1.msra.mxu0 0.0
        %2307 = vmatprep.subr.mxu0 0.0
        %2308 = vmatpush1.msra.mxu0 0.0
        %2309 = vmatprep.subr.mxu0 0.0
        %2310 = vmatpush1.msra.mxu0 0.0
        %2311 = vmatprep.subr.mxu0 0.0
        %2312 = vmatpush1.msra.mxu0 0.0
        %2313 = vmatprep.subr.mxu0 0.0
        %2314 = vmatpush1.msra.mxu0 0.0
        %2315 = vmatprep.subr.mxu0 0.0
        %2316 = vmatpush1.msra.mxu0 0.0
        %2317 = vmatprep.mubr.f32.mxu0 0.0
        %2318 = vmatmul.mubr.f32.gmra.mrb[0].mxu0 %v828
        %v2319 = vpop.f32.mrb[0].mxu0
        %v2320 = vadd.f32 0.0, %v2319
        %v2321 = vpop.f32.mrb[0].mxu0
        %2322 = vdwg.mxu0
        %v2323 = vadd.f32 %v2248, %v2320
        %v2326 = vunpack.c.l.s4 1966171168
        %v2327 = vunpack.c.0.s8 %v2326
        %v2328 = vlaneseq
        %v2329 = vshrl.u32 %v2328, 7
        %v2330 = vsub.s32 %v2327, %v2329
        %v2331 = vrot.slane %v2323, %v2330
        %v2332 = vcombine.high %v2331, %v2331
        %v2334 = vunpack.c.l.s4 1966171168
        %v2335 = vunpack.c.0.s8 %v2334
        %v2336 = vlaneseq
        %v2337 = vshrl.u32 %v2336, 7
        %v2338 = vsub.s32 %v2335, %v2337
        %v2339 = vrot.slane %v2331, %v2338
        %v2341 = vunpack.c.l.s4 1966171168
        %v2342 = vunpack.c.0.s8 %v2341
        %v2343 = vlaneseq
        %v2344 = vshrl.u32 %v2343, 7
        %v2345 = vsub.s32 %v2342, %v2344
        %v2346 = vrot.slane %v2332, %v2345
        %v2347 = vcombine.high %v2339, %v2339
        %v2348 = vcombine.high %v2346, %v2346
        %2353 = vst.msk [vmem:[%s178 + $0x2] sm:$0x1] %vm932, %v2339
        %2354 = vst.msk [vmem:[%s178 + $0xa] sm:$0x1] %vm932, %v2346
        %2355 = vst.msk [vmem:[%s178 + $0x12] sm:$0x1] %vm932, %v2347
        %2356 = vst.msk [vmem:[%s178 + $0x1a] sm:$0x1] %vm932, %v2348
        %v2357 = vld [vmem:[%s2097] sm:$0xf]
        %v2358 = vld [vmem:[%s2173] sm:$0xf]
        %v2360 = vsel %vm203, %v2358, 0
        %2362 = vmatprep.subr.mxu0 0.0
        %2363 = vmatpush1.msra.mxu0 %v2360
        %2364 = vmatprep.subr.mxu0 0.0
        %2365 = vmatpush1.msra.mxu0 0.0
        %2366 = vmatprep.subr.mxu0 0.0
        %2367 = vmatpush1.msra.mxu0 0.0
        %2368 = vmatprep.subr.mxu0 0.0
        %2369 = vmatpush1.msra.mxu0 0.0
        %2370 = vmatprep.subr.mxu0 0.0
        %2371 = vmatpush1.msra.mxu0 0.0
        %2372 = vmatprep.subr.mxu0 0.0
        %2373 = vmatpush1.msra.mxu0 0.0
        %2374 = vmatprep.subr.mxu0 0.0
        %2375 = vmatpush1.msra.mxu0 0.0
        %2376 = vmatprep.subr.mxu0 0.0
        %2377 = vmatpush1.msra.mxu0 0.0
        %2378 = vmatprep.subr.mxu0 0.0
        %2379 = vmatpush1.msra.mxu0 0.0
        %2380 = vmatprep.subr.mxu0 0.0
        %2381 = vmatpush1.msra.mxu0 0.0
        %2382 = vmatprep.subr.mxu0 0.0
        %2383 = vmatpush1.msra.mxu0 0.0
        %2384 = vmatprep.subr.mxu0 0.0
        %2385 = vmatpush1.msra.mxu0 0.0
        %2386 = vmatprep.subr.mxu0 0.0
        %2387 = vmatpush1.msra.mxu0 0.0
        %2388 = vmatprep.subr.mxu0 0.0
        %2389 = vmatpush1.msra.mxu0 0.0
        %2390 = vmatprep.subr.mxu0 0.0
        %2391 = vmatpush1.msra.mxu0 0.0
        %2392 = vmatprep.subr.mxu0 0.0
        %2393 = vmatpush1.msra.mxu0 0.0
        %2394 = vmatprep.subr.mxu0 0.0
        %2395 = vmatpush1.msra.mxu0 0.0
        %2396 = vmatprep.subr.mxu0 0.0
        %2397 = vmatpush1.msra.mxu0 0.0
        %2398 = vmatprep.subr.mxu0 0.0
        %2399 = vmatpush1.msra.mxu0 0.0
        %2400 = vmatprep.subr.mxu0 0.0
        %2401 = vmatpush1.msra.mxu0 0.0
        %2402 = vmatprep.subr.mxu0 0.0
        %2403 = vmatpush1.msra.mxu0 0.0
        %2404 = vmatprep.subr.mxu0 0.0
        %2405 = vmatpush1.msra.mxu0 0.0
        %2406 = vmatprep.subr.mxu0 0.0
        %2407 = vmatpush1.msra.mxu0 0.0
        %2408 = vmatprep.subr.mxu0 0.0
        %2409 = vmatpush1.msra.mxu0 0.0
        %2410 = vmatprep.subr.mxu0 0.0
        %2411 = vmatpush1.msra.mxu0 0.0
        %2412 = vmatprep.subr.mxu0 0.0
        %2413 = vmatpush1.msra.mxu0 0.0
        %2414 = vmatprep.subr.mxu0 0.0
        %2415 = vmatpush1.msra.mxu0 0.0
        %2416 = vmatprep.subr.mxu0 0.0
        %2417 = vmatpush1.msra.mxu0 0.0
        %2418 = vmatprep.subr.mxu0 0.0
        %2419 = vmatpush1.msra.mxu0 0.0
        %2420 = vmatprep.subr.mxu0 0.0
        %2421 = vmatpush1.msra.mxu0 0.0
        %2422 = vmatprep.subr.mxu0 0.0
        %2423 = vmatpush1.msra.mxu0 0.0
        %2424 = vmatprep.subr.mxu0 0.0
        %2425 = vmatpush1.msra.mxu0 0.0
        %2426 = vmatprep.mubr.f32.mxu0 0.0
        %2427 = vmatmul.mubr.f32.gmra.mrb[0].mxu0 %v201
        %v2428 = vpop.f32.mrb[0].mxu0
        %v2429 = vadd.f32 0.0, %v2428
        %v2430 = vpop.f32.mrb[0].mxu0
        %2431 = vdwg.mxu0
        %v2433 = vsel %vm203, %v2357, 0
        %2435 = vmatprep.subr.mxu0 0.0
        %2436 = vmatpush1.msra.mxu0 %v2433
        %2437 = vmatprep.subr.mxu0 0.0
        %2438 = vmatpush1.msra.mxu0 0.0
        %2439 = vmatprep.subr.mxu0 0.0
        %2440 = vmatpush1.msra.mxu0 0.0
        %2441 = vmatprep.subr.mxu0 0.0
        %2442 = vmatpush1.msra.mxu0 0.0
        %2443 = vmatprep.subr.mxu0 0.0
        %2444 = vmatpush1.msra.mxu0 0.0
        %2445 = vmatprep.subr.mxu0 0.0
        %2446 = vmatpush1.msra.mxu0 0.0
        %2447 = vmatprep.subr.mxu0 0.0
        %2448 = vmatpush1.msra.mxu0 0.0
        %2449 = vmatprep.subr.mxu0 0.0
        %2450 = vmatpush1.msra.mxu0 0.0
        %2451 = vmatprep.subr.mxu0 0.0
        %2452 = vmatpush1.msra.mxu0 0.0
        %2453 = vmatprep.subr.mxu0 0.0
        %2454 = vmatpush1.msra.mxu0 0.0
        %2455 = vmatprep.subr.mxu0 0.0
        %2456 = vmatpush1.msra.mxu0 0.0
        %2457 = vmatprep.subr.mxu0 0.0
        %2458 = vmatpush1.msra.mxu0 0.0
        %2459 = vmatprep.subr.mxu0 0.0
        %2460 = vmatpush1.msra.mxu0 0.0
        %2461 = vmatprep.subr.mxu0 0.0
        %2462 = vmatpush1.msra.mxu0 0.0
        %2463 = vmatprep.subr.mxu0 0.0
        %2464 = vmatpush1.msra.mxu0 0.0
        %2465 = vmatprep.subr.mxu0 0.0
        %2466 = vmatpush1.msra.mxu0 0.0
        %2467 = vmatprep.subr.mxu0 0.0
        %2468 = vmatpush1.msra.mxu0 0.0
        %2469 = vmatprep.subr.mxu0 0.0
        %2470 = vmatpush1.msra.mxu0 0.0
        %2471 = vmatprep.subr.mxu0 0.0
        %2472 = vmatpush1.msra.mxu0 0.0
        %2473 = vmatprep.subr.mxu0 0.0
        %2474 = vmatpush1.msra.mxu0 0.0
        %2475 = vmatprep.subr.mxu0 0.0
        %2476 = vmatpush1.msra.mxu0 0.0
        %2477 = vmatprep.subr.mxu0 0.0
        %2478 = vmatpush1.msra.mxu0 0.0
        %2479 = vmatprep.subr.mxu0 0.0
        %2480 = vmatpush1.msra.mxu0 0.0
        %2481 = vmatprep.subr.mxu0 0.0
        %2482 = vmatpush1.msra.mxu0 0.0
        %2483 = vmatprep.subr.mxu0 0.0
        %2484 = vmatpush1.msra.mxu0 0.0
        %2485 = vmatprep.subr.mxu0 0.0
        %2486 = vmatpush1.msra.mxu0 0.0
        %2487 = vmatprep.subr.mxu0 0.0
        %2488 = vmatpush1.msra.mxu0 0.0
        %2489 = vmatprep.subr.mxu0 0.0
        %2490 = vmatpush1.msra.mxu0 0.0
        %2491 = vmatprep.subr.mxu0 0.0
        %2492 = vmatpush1.msra.mxu0 0.0
        %2493 = vmatprep.subr.mxu0 0.0
        %2494 = vmatpush1.msra.mxu0 0.0
        %2495 = vmatprep.subr.mxu0 0.0
        %2496 = vmatpush1.msra.mxu0 0.0
        %2497 = vmatprep.subr.mxu0 0.0
        %2498 = vmatpush1.msra.mxu0 0.0
        %2499 = vmatprep.mubr.f32.mxu0 0.0
        %2500 = vmatmul.mubr.f32.gmra.mrb[0].mxu0 %v278
        %v2501 = vpop.f32.mrb[0].mxu0
        %v2502 = vadd.f32 %v2429, %v2501
        %v2503 = vpop.f32.mrb[0].mxu0
        %2504 = vdwg.mxu0
        %2505 = vrot.lane.b32.xlu0 %v2357, 127
        %v2506 = vpop.permute.xlu0 %2505
        %v2507 = vsel %vm203, %v2506, 0
        %2509 = vmatprep.subr.mxu0 0.0
        %2510 = vmatpush1.msra.mxu0 %v2507
        %2511 = vmatprep.subr.mxu0 0.0
        %2512 = vmatpush1.msra.mxu0 0.0
        %2513 = vmatprep.subr.mxu0 0.0
        %2514 = vmatpush1.msra.mxu0 0.0
        %2515 = vmatprep.subr.mxu0 0.0
        %2516 = vmatpush1.msra.mxu0 0.0
        %2517 = vmatprep.subr.mxu0 0.0
        %2518 = vmatpush1.msra.mxu0 0.0
        %2519 = vmatprep.subr.mxu0 0.0
        %2520 = vmatpush1.msra.mxu0 0.0
        %2521 = vmatprep.subr.mxu0 0.0
        %2522 = vmatpush1.msra.mxu0 0.0
        %2523 = vmatprep.subr.mxu0 0.0
        %2524 = vmatpush1.msra.mxu0 0.0
        %2525 = vmatprep.subr.mxu0 0.0
        %2526 = vmatpush1.msra.mxu0 0.0
        %2527 = vmatprep.subr.mxu0 0.0
        %2528 = vmatpush1.msra.mxu0 0.0
        %2529 = vmatprep.subr.mxu0 0.0
        %2530 = vmatpush1.msra.mxu0 0.0
        %2531 = vmatprep.subr.mxu0 0.0
        %2532 = vmatpush1.msra.mxu0 0.0
        %2533 = vmatprep.subr.mxu0 0.0
        %2534 = vmatpush1.msra.mxu0 0.0
        %2535 = vmatprep.subr.mxu0 0.0
        %2536 = vmatpush1.msra.mxu0 0.0
        %2537 = vmatprep.subr.mxu0 0.0
        %2538 = vmatpush1.msra.mxu0 0.0
        %2539 = vmatprep.subr.mxu0 0.0
        %2540 = vmatpush1.msra.mxu0 0.0
        %2541 = vmatprep.subr.mxu0 0.0
        %2542 = vmatpush1.msra.mxu0 0.0
        %2543 = vmatprep.subr.mxu0 0.0
        %2544 = vmatpush1.msra.mxu0 0.0
        %2545 = vmatprep.subr.mxu0 0.0
        %2546 = vmatpush1.msra.mxu0 0.0
        %2547 = vmatprep.subr.mxu0 0.0
        %2548 = vmatpush1.msra.mxu0 0.0
        %2549 = vmatprep.subr.mxu0 0.0
        %2550 = vmatpush1.msra.mxu0 0.0
        %2551 = vmatprep.subr.mxu0 0.0
        %2552 = vmatpush1.msra.mxu0 0.0
        %2553 = vmatprep.subr.mxu0 0.0
        %2554 = vmatpush1.msra.mxu0 0.0
        %2555 = vmatprep.subr.mxu0 0.0
        %2556 = vmatpush1.msra.mxu0 0.0
        %2557 = vmatprep.subr.mxu0 0.0
        %2558 = vmatpush1.msra.mxu0 0.0
        %2559 = vmatprep.subr.mxu0 0.0
        %2560 = vmatpush1.msra.mxu0 0.0
        %2561 = vmatprep.subr.mxu0 0.0
        %2562 = vmatpush1.msra.mxu0 0.0
        %2563 = vmatprep.subr.mxu0 0.0
        %2564 = vmatpush1.msra.mxu0 0.0
        %2565 = vmatprep.subr.mxu0 0.0
        %2566 = vmatpush1.msra.mxu0 0.0
        %2567 = vmatprep.subr.mxu0 0.0
        %2568 = vmatpush1.msra.mxu0 0.0
        %2569 = vmatprep.subr.mxu0 0.0
        %2570 = vmatpush1.msra.mxu0 0.0
        %2571 = vmatprep.subr.mxu0 0.0
        %2572 = vmatpush1.msra.mxu0 0.0
        %2573 = vmatprep.mubr.f32.mxu0 0.0
        %2574 = vmatmul.mubr.f32.gmra.mrb[0].mxu0 %v356
        %v2575 = vpop.f32.mrb[0].mxu0
        %v2576 = vadd.f32 0.0, %v2575
        %v2577 = vpop.f32.mrb[0].mxu0
        %2578 = vdwg.mxu0
        %v2579 = vadd.f32 %v2502, %v2576
        %s2580 = scalar_lea.vmem %s149, 76 [#allocation2]
        %v2581 = vld [vmem:[%s2580] sm:$0xf]
        %v2583 = vsel %vm203, %v2581, 0
        %2585 = vmatprep.subr.mxu0 0.0
        %2586 = vmatpush1.msra.mxu0 %v2583
        %2587 = vmatprep.subr.mxu0 0.0
        %2588 = vmatpush1.msra.mxu0 0.0
        %2589 = vmatprep.subr.mxu0 0.0
        %2590 = vmatpush1.msra.mxu0 0.0
        %2591 = vmatprep.subr.mxu0 0.0
        %2592 = vmatpush1.msra.mxu0 0.0
        %2593 = vmatprep.subr.mxu0 0.0
        %2594 = vmatpush1.msra.mxu0 0.0
        %2595 = vmatprep.subr.mxu0 0.0
        %2596 = vmatpush1.msra.mxu0 0.0
        %2597 = vmatprep.subr.mxu0 0.0
        %2598 = vmatpush1.msra.mxu0 0.0
        %2599 = vmatprep.subr.mxu0 0.0
        %2600 = vmatpush1.msra.mxu0 0.0
        %2601 = vmatprep.subr.mxu0 0.0
        %2602 = vmatpush1.msra.mxu0 0.0
        %2603 = vmatprep.subr.mxu0 0.0
        %2604 = vmatpush1.msra.mxu0 0.0
        %2605 = vmatprep.subr.mxu0 0.0
        %2606 = vmatpush1.msra.mxu0 0.0
        %2607 = vmatprep.subr.mxu0 0.0
        %2608 = vmatpush1.msra.mxu0 0.0
        %2609 = vmatprep.subr.mxu0 0.0
        %2610 = vmatpush1.msra.mxu0 0.0
        %2611 = vmatprep.subr.mxu0 0.0
        %2612 = vmatpush1.msra.mxu0 0.0
        %2613 = vmatprep.subr.mxu0 0.0
        %2614 = vmatpush1.msra.mxu0 0.0
        %2615 = vmatprep.subr.mxu0 0.0
        %2616 = vmatpush1.msra.mxu0 0.0
        %2617 = vmatprep.subr.mxu0 0.0
        %2618 = vmatpush1.msra.mxu0 0.0
        %2619 = vmatprep.subr.mxu0 0.0
        %2620 = vmatpush1.msra.mxu0 0.0
        %2621 = vmatprep.subr.mxu0 0.0
        %2622 = vmatpush1.msra.mxu0 0.0
        %2623 = vmatprep.subr.mxu0 0.0
        %2624 = vmatpush1.msra.mxu0 0.0
        %2625 = vmatprep.subr.mxu0 0.0
        %2626 = vmatpush1.msra.mxu0 0.0
        %2627 = vmatprep.subr.mxu0 0.0
        %2628 = vmatpush1.msra.mxu0 0.0
        %2629 = vmatprep.subr.mxu0 0.0
        %2630 = vmatpush1.msra.mxu0 0.0
        %2631 = vmatprep.subr.mxu0 0.0
        %2632 = vmatpush1.msra.mxu0 0.0
        %2633 = vmatprep.subr.mxu0 0.0
        %2634 = vmatpush1.msra.mxu0 0.0
        %2635 = vmatprep.subr.mxu0 0.0
        %2636 = vmatpush1.msra.mxu0 0.0
        %2637 = vmatprep.subr.mxu0 0.0
        %2638 = vmatpush1.msra.mxu0 0.0
        %2639 = vmatprep.subr.mxu0 0.0
        %2640 = vmatpush1.msra.mxu0 0.0
        %2641 = vmatprep.subr.mxu0 0.0
        %2642 = vmatpush1.msra.mxu0 0.0
        %2643 = vmatprep.subr.mxu0 0.0
        %2644 = vmatpush1.msra.mxu0 0.0
        %2645 = vmatprep.subr.mxu0 0.0
        %2646 = vmatpush1.msra.mxu0 0.0
        %2647 = vmatprep.subr.mxu0 0.0
        %2648 = vmatpush1.msra.mxu0 0.0
        %2649 = vmatprep.mubr.f32.mxu0 0.0
        %2650 = vmatmul.mubr.f32.gmra.mrb[0].mxu0 %v434
        %v2651 = vpop.f32.mrb[0].mxu0
        %v2652 = vadd.f32 0.0, %v2651
        %v2653 = vpop.f32.mrb[0].mxu0
        %2654 = vdwg.mxu0
        %v2655 = vadd.f32 %v2579, %v2652
        %s2656 = scalar_lea.vmem %s149, 108 [#allocation2]
        %v2657 = vld [vmem:[%s2656] sm:$0xf]
        %v2659 = vsel %vm203, %v2657, 0
        %2661 = vmatprep.subr.mxu0 0.0
        %2662 = vmatpush1.msra.mxu0 %v2659
        %2663 = vmatprep.subr.mxu0 0.0
        %2664 = vmatpush1.msra.mxu0 0.0
        %2665 = vmatprep.subr.mxu0 0.0
        %2666 = vmatpush1.msra.mxu0 0.0
        %2667 = vmatprep.subr.mxu0 0.0
        %2668 = vmatpush1.msra.mxu0 0.0
        %2669 = vmatprep.subr.mxu0 0.0
        %2670 = vmatpush1.msra.mxu0 0.0
        %2671 = vmatprep.subr.mxu0 0.0
        %2672 = vmatpush1.msra.mxu0 0.0
        %2673 = vmatprep.subr.mxu0 0.0
        %2674 = vmatpush1.msra.mxu0 0.0
        %2675 = vmatprep.subr.mxu0 0.0
        %2676 = vmatpush1.msra.mxu0 0.0
        %2677 = vmatprep.subr.mxu0 0.0
        %2678 = vmatpush1.msra.mxu0 0.0
        %2679 = vmatprep.subr.mxu0 0.0
        %2680 = vmatpush1.msra.mxu0 0.0
        %2681 = vmatprep.subr.mxu0 0.0
        %2682 = vmatpush1.msra.mxu0 0.0
        %2683 = vmatprep.subr.mxu0 0.0
        %2684 = vmatpush1.msra.mxu0 0.0
        %2685 = vmatprep.subr.mxu0 0.0
        %2686 = vmatpush1.msra.mxu0 0.0
        %2687 = vmatprep.subr.mxu0 0.0
        %2688 = vmatpush1.msra.mxu0 0.0
        %2689 = vmatprep.subr.mxu0 0.0
        %2690 = vmatpush1.msra.mxu0 0.0
        %2691 = vmatprep.subr.mxu0 0.0
        %2692 = vmatpush1.msra.mxu0 0.0
        %2693 = vmatprep.subr.mxu0 0.0
        %2694 = vmatpush1.msra.mxu0 0.0
        %2695 = vmatprep.subr.mxu0 0.0
        %2696 = vmatpush1.msra.mxu0 0.0
        %2697 = vmatprep.subr.mxu0 0.0
        %2698 = vmatpush1.msra.mxu0 0.0
        %2699 = vmatprep.subr.mxu0 0.0
        %2700 = vmatpush1.msra.mxu0 0.0
        %2701 = vmatprep.subr.mxu0 0.0
        %2702 = vmatpush1.msra.mxu0 0.0
        %2703 = vmatprep.subr.mxu0 0.0
        %2704 = vmatpush1.msra.mxu0 0.0
        %2705 = vmatprep.subr.mxu0 0.0
        %2706 = vmatpush1.msra.mxu0 0.0
        %2707 = vmatprep.subr.mxu0 0.0
        %2708 = vmatpush1.msra.mxu0 0.0
        %2709 = vmatprep.subr.mxu0 0.0
        %2710 = vmatpush1.msra.mxu0 0.0
        %2711 = vmatprep.subr.mxu0 0.0
        %2712 = vmatpush1.msra.mxu0 0.0
        %2713 = vmatprep.subr.mxu0 0.0
        %2714 = vmatpush1.msra.mxu0 0.0
        %2715 = vmatprep.subr.mxu0 0.0
        %2716 = vmatpush1.msra.mxu0 0.0
        %2717 = vmatprep.subr.mxu0 0.0
        %2718 = vmatpush1.msra.mxu0 0.0
        %2719 = vmatprep.subr.mxu0 0.0
        %2720 = vmatpush1.msra.mxu0 0.0
        %2721 = vmatprep.subr.mxu0 0.0
        %2722 = vmatpush1.msra.mxu0 0.0
        %2723 = vmatprep.subr.mxu0 0.0
        %2724 = vmatpush1.msra.mxu0 0.0
        %2725 = vmatprep.mubr.f32.mxu0 0.0
        %2726 = vmatmul.mubr.f32.gmra.mrb[0].mxu0 %v513
        %v2727 = vpop.f32.mrb[0].mxu0
        %v2728 = vadd.f32 0.0, %v2727
        %v2729 = vpop.f32.mrb[0].mxu0
        %2730 = vdwg.mxu0
        %v2731 = vadd.f32 %v2655, %v2728
        %2732 = vrot.lane.b32.xlu0 %v2581, 127
        %v2733 = vpop.permute.xlu0 %2732
        %v2734 = vsel %vm203, %v2733, 0
        %2736 = vmatprep.subr.mxu0 0.0
        %2737 = vmatpush1.msra.mxu0 %v2734
        %2738 = vmatprep.subr.mxu0 0.0
        %2739 = vmatpush1.msra.mxu0 0.0
        %2740 = vmatprep.subr.mxu0 0.0
        %2741 = vmatpush1.msra.mxu0 0.0
        %2742 = vmatprep.subr.mxu0 0.0
        %2743 = vmatpush1.msra.mxu0 0.0
        %2744 = vmatprep.subr.mxu0 0.0
        %2745 = vmatpush1.msra.mxu0 0.0
        %2746 = vmatprep.subr.mxu0 0.0
        %2747 = vmatpush1.msra.mxu0 0.0
        %2748 = vmatprep.subr.mxu0 0.0
        %2749 = vmatpush1.msra.mxu0 0.0
        %2750 = vmatprep.subr.mxu0 0.0
        %2751 = vmatpush1.msra.mxu0 0.0
        %2752 = vmatprep.subr.mxu0 0.0
        %2753 = vmatpush1.msra.mxu0 0.0
        %2754 = vmatprep.subr.mxu0 0.0
        %2755 = vmatpush1.msra.mxu0 0.0
        %2756 = vmatprep.subr.mxu0 0.0
        %2757 = vmatpush1.msra.mxu0 0.0
        %2758 = vmatprep.subr.mxu0 0.0
        %2759 = vmatpush1.msra.mxu0 0.0
        %2760 = vmatprep.subr.mxu0 0.0
        %2761 = vmatpush1.msra.mxu0 0.0
        %2762 = vmatprep.subr.mxu0 0.0
        %2763 = vmatpush1.msra.mxu0 0.0
        %2764 = vmatprep.subr.mxu0 0.0
        %2765 = vmatpush1.msra.mxu0 0.0
        %2766 = vmatprep.subr.mxu0 0.0
        %2767 = vmatpush1.msra.mxu0 0.0
        %2768 = vmatprep.subr.mxu0 0.0
        %2769 = vmatpush1.msra.mxu0 0.0
        %2770 = vmatprep.subr.mxu0 0.0
        %2771 = vmatpush1.msra.mxu0 0.0
        %2772 = vmatprep.subr.mxu0 0.0
        %2773 = vmatpush1.msra.mxu0 0.0
        %2774 = vmatprep.subr.mxu0 0.0
        %2775 = vmatpush1.msra.mxu0 0.0
        %2776 = vmatprep.subr.mxu0 0.0
        %2777 = vmatpush1.msra.mxu0 0.0
        %2778 = vmatprep.subr.mxu0 0.0
        %2779 = vmatpush1.msra.mxu0 0.0
        %2780 = vmatprep.subr.mxu0 0.0
        %2781 = vmatpush1.msra.mxu0 0.0
        %2782 = vmatprep.subr.mxu0 0.0
        %2783 = vmatpush1.msra.mxu0 0.0
        %2784 = vmatprep.subr.mxu0 0.0
        %2785 = vmatpush1.msra.mxu0 0.0
        %2786 = vmatprep.subr.mxu0 0.0
        %2787 = vmatpush1.msra.mxu0 0.0
        %2788 = vmatprep.subr.mxu0 0.0
        %2789 = vmatpush1.msra.mxu0 0.0
        %2790 = vmatprep.subr.mxu0 0.0
        %2791 = vmatpush1.msra.mxu0 0.0
        %2792 = vmatprep.subr.mxu0 0.0
        %2793 = vmatpush1.msra.mxu0 0.0
        %2794 = vmatprep.subr.mxu0 0.0
        %2795 = vmatpush1.msra.mxu0 0.0
        %2796 = vmatprep.subr.mxu0 0.0
        %2797 = vmatpush1.msra.mxu0 0.0
        %2798 = vmatprep.subr.mxu0 0.0
        %2799 = vmatpush1.msra.mxu0 0.0
        %2800 = vmatprep.mubr.f32.mxu0 0.0
        %2801 = vmatmul.mubr.f32.gmra.mrb[0].mxu0 %v592
        %v2802 = vpop.f32.mrb[0].mxu0
        %v2803 = vadd.f32 0.0, %v2802
        %v2804 = vpop.f32.mrb[0].mxu0
        %2805 = vdwg.mxu0
        %v2806 = vadd.f32 %v2731, %v2803
        %s2807 = scalar_lea.vmem %s149, 16 [#allocation2]
        %v2808 = vld [vmem:[%s2807] sm:$0xf]
        %v2810 = vsel %vm203, %v2808, 0
        %2812 = vmatprep.subr.mxu0 0.0
        %2813 = vmatpush1.msra.mxu0 %v2810
        %2814 = vmatprep.subr.mxu0 0.0
        %2815 = vmatpush1.msra.mxu0 0.0
        %2816 = vmatprep.subr.mxu0 0.0
        %2817 = vmatpush1.msra.mxu0 0.0
        %2818 = vmatprep.subr.mxu0 0.0
        %2819 = vmatpush1.msra.mxu0 0.0
        %2820 = vmatprep.subr.mxu0 0.0
        %2821 = vmatpush1.msra.mxu0 0.0
        %2822 = vmatprep.subr.mxu0 0.0
        %2823 = vmatpush1.msra.mxu0 0.0
        %2824 = vmatprep.subr.mxu0 0.0
        %2825 = vmatpush1.msra.mxu0 0.0
        %2826 = vmatprep.subr.mxu0 0.0
        %2827 = vmatpush1.msra.mxu0 0.0
        %2828 = vmatprep.subr.mxu0 0.0
        %2829 = vmatpush1.msra.mxu0 0.0
        %2830 = vmatprep.subr.mxu0 0.0
        %2831 = vmatpush1.msra.mxu0 0.0
        %2832 = vmatprep.subr.mxu0 0.0
        %2833 = vmatpush1.msra.mxu0 0.0
        %2834 = vmatprep.subr.mxu0 0.0
        %2835 = vmatpush1.msra.mxu0 0.0
        %2836 = vmatprep.subr.mxu0 0.0
        %2837 = vmatpush1.msra.mxu0 0.0
        %2838 = vmatprep.subr.mxu0 0.0
        %2839 = vmatpush1.msra.mxu0 0.0
        %2840 = vmatprep.subr.mxu0 0.0
        %2841 = vmatpush1.msra.mxu0 0.0
        %2842 = vmatprep.subr.mxu0 0.0
        %2843 = vmatpush1.msra.mxu0 0.0
        %2844 = vmatprep.subr.mxu0 0.0
        %2845 = vmatpush1.msra.mxu0 0.0
        %2846 = vmatprep.subr.mxu0 0.0
        %2847 = vmatpush1.msra.mxu0 0.0
        %2848 = vmatprep.subr.mxu0 0.0
        %2849 = vmatpush1.msra.mxu0 0.0
        %2850 = vmatprep.subr.mxu0 0.0
        %2851 = vmatpush1.msra.mxu0 0.0
        %2852 = vmatprep.subr.mxu0 0.0
        %2853 = vmatpush1.msra.mxu0 0.0
        %2854 = vmatprep.subr.mxu0 0.0
        %2855 = vmatpush1.msra.mxu0 0.0
        %2856 = vmatprep.subr.mxu0 0.0
        %2857 = vmatpush1.msra.mxu0 0.0
        %2858 = vmatprep.subr.mxu0 0.0
        %2859 = vmatpush1.msra.mxu0 0.0
        %2860 = vmatprep.subr.mxu0 0.0
        %2861 = vmatpush1.msra.mxu0 0.0
        %2862 = vmatprep.subr.mxu0 0.0
        %2863 = vmatpush1.msra.mxu0 0.0
        %2864 = vmatprep.subr.mxu0 0.0
        %2865 = vmatpush1.msra.mxu0 0.0
        %2866 = vmatprep.subr.mxu0 0.0
        %2867 = vmatpush1.msra.mxu0 0.0
        %2868 = vmatprep.subr.mxu0 0.0
        %2869 = vmatpush1.msra.mxu0 0.0
        %2870 = vmatprep.subr.mxu0 0.0
        %2871 = vmatpush1.msra.mxu0 0.0
        %2872 = vmatprep.subr.mxu0 0.0
        %2873 = vmatpush1.msra.mxu0 0.0
        %2874 = vmatprep.subr.mxu0 0.0
        %2875 = vmatpush1.msra.mxu0 0.0
        %2876 = vmatprep.mubr.f32.mxu0 0.0
        %2877 = vmatmul.mubr.f32.gmra.mrb[0].mxu0 %v670
        %v2878 = vpop.f32.mrb[0].mxu0
        %v2879 = vadd.f32 0.0, %v2878
        %v2880 = vpop.f32.mrb[0].mxu0
        %2881 = vdwg.mxu0
        %v2882 = vadd.f32 %v2806, %v2879
        %s2883 = scalar_lea.vmem %s149, 48 [#allocation2]
        %v2884 = vld [vmem:[%s2883] sm:$0xf]
        %v2886 = vsel %vm203, %v2884, 0
        %2888 = vmatprep.subr.mxu0 0.0
        %2889 = vmatpush1.msra.mxu0 %v2886
        %2890 = vmatprep.subr.mxu0 0.0
        %2891 = vmatpush1.msra.mxu0 0.0
        %2892 = vmatprep.subr.mxu0 0.0
        %2893 = vmatpush1.msra.mxu0 0.0
        %2894 = vmatprep.subr.mxu0 0.0
        %2895 = vmatpush1.msra.mxu0 0.0
        %2896 = vmatprep.subr.mxu0 0.0
        %2897 = vmatpush1.msra.mxu0 0.0
        %2898 = vmatprep.subr.mxu0 0.0
        %2899 = vmatpush1.msra.mxu0 0.0
        %2900 = vmatprep.subr.mxu0 0.0
        %2901 = vmatpush1.msra.mxu0 0.0
        %2902 = vmatprep.subr.mxu0 0.0
        %2903 = vmatpush1.msra.mxu0 0.0
        %2904 = vmatprep.subr.mxu0 0.0
        %2905 = vmatpush1.msra.mxu0 0.0
        %2906 = vmatprep.subr.mxu0 0.0
        %2907 = vmatpush1.msra.mxu0 0.0
        %2908 = vmatprep.subr.mxu0 0.0
        %2909 = vmatpush1.msra.mxu0 0.0
        %2910 = vmatprep.subr.mxu0 0.0
        %2911 = vmatpush1.msra.mxu0 0.0
        %2912 = vmatprep.subr.mxu0 0.0
        %2913 = vmatpush1.msra.mxu0 0.0
        %2914 = vmatprep.subr.mxu0 0.0
        %2915 = vmatpush1.msra.mxu0 0.0
        %2916 = vmatprep.subr.mxu0 0.0
        %2917 = vmatpush1.msra.mxu0 0.0
        %2918 = vmatprep.subr.mxu0 0.0
        %2919 = vmatpush1.msra.mxu0 0.0
        %2920 = vmatprep.subr.mxu0 0.0
        %2921 = vmatpush1.msra.mxu0 0.0
        %2922 = vmatprep.subr.mxu0 0.0
        %2923 = vmatpush1.msra.mxu0 0.0
        %2924 = vmatprep.subr.mxu0 0.0
        %2925 = vmatpush1.msra.mxu0 0.0
        %2926 = vmatprep.subr.mxu0 0.0
        %2927 = vmatpush1.msra.mxu0 0.0
        %2928 = vmatprep.subr.mxu0 0.0
        %2929 = vmatpush1.msra.mxu0 0.0
        %2930 = vmatprep.subr.mxu0 0.0
        %2931 = vmatpush1.msra.mxu0 0.0
        %2932 = vmatprep.subr.mxu0 0.0
        %2933 = vmatpush1.msra.mxu0 0.0
        %2934 = vmatprep.subr.mxu0 0.0
        %2935 = vmatpush1.msra.mxu0 0.0
        %2936 = vmatprep.subr.mxu0 0.0
        %2937 = vmatpush1.msra.mxu0 0.0
        %2938 = vmatprep.subr.mxu0 0.0
        %2939 = vmatpush1.msra.mxu0 0.0
        %2940 = vmatprep.subr.mxu0 0.0
        %2941 = vmatpush1.msra.mxu0 0.0
        %2942 = vmatprep.subr.mxu0 0.0
        %2943 = vmatpush1.msra.mxu0 0.0
        %2944 = vmatprep.subr.mxu0 0.0
        %2945 = vmatpush1.msra.mxu0 0.0
        %2946 = vmatprep.subr.mxu0 0.0
        %2947 = vmatpush1.msra.mxu0 0.0
        %2948 = vmatprep.subr.mxu0 0.0
        %2949 = vmatpush1.msra.mxu0 0.0
        %2950 = vmatprep.subr.mxu0 0.0
        %2951 = vmatpush1.msra.mxu0 0.0
        %2952 = vmatprep.mubr.f32.mxu0 0.0
        %2953 = vmatmul.mubr.f32.gmra.mrb[0].mxu0 %v749
        %v2954 = vpop.f32.mrb[0].mxu0
        %v2955 = vadd.f32 0.0, %v2954
        %v2956 = vpop.f32.mrb[0].mxu0
        %2957 = vdwg.mxu0
        %v2958 = vadd.f32 %v2882, %v2955
        %2959 = vrot.lane.b32.xlu0 %v2808, 127
        %v2960 = vpop.permute.xlu0 %2959
        %v2961 = vsel %vm203, %v2960, 0
        %2963 = vmatprep.subr.mxu0 0.0
        %2964 = vmatpush1.msra.mxu0 %v2961
        %2965 = vmatprep.subr.mxu0 0.0
        %2966 = vmatpush1.msra.mxu0 0.0
        %2967 = vmatprep.subr.mxu0 0.0
        %2968 = vmatpush1.msra.mxu0 0.0
        %2969 = vmatprep.subr.mxu0 0.0
        %2970 = vmatpush1.msra.mxu0 0.0
        %2971 = vmatprep.subr.mxu0 0.0
        %2972 = vmatpush1.msra.mxu0 0.0
        %2973 = vmatprep.subr.mxu0 0.0
        %2974 = vmatpush1.msra.mxu0 0.0
        %2975 = vmatprep.subr.mxu0 0.0
        %2976 = vmatpush1.msra.mxu0 0.0
        %2977 = vmatprep.subr.mxu0 0.0
        %2978 = vmatpush1.msra.mxu0 0.0
        %2979 = vmatprep.subr.mxu0 0.0
        %2980 = vmatpush1.msra.mxu0 0.0
        %2981 = vmatprep.subr.mxu0 0.0
        %2982 = vmatpush1.msra.mxu0 0.0
        %2983 = vmatprep.subr.mxu0 0.0
        %2984 = vmatpush1.msra.mxu0 0.0
        %2985 = vmatprep.subr.mxu0 0.0
        %2986 = vmatpush1.msra.mxu0 0.0
        %2987 = vmatprep.subr.mxu0 0.0
        %2988 = vmatpush1.msra.mxu0 0.0
        %2989 = vmatprep.subr.mxu0 0.0
        %2990 = vmatpush1.msra.mxu0 0.0
        %2991 = vmatprep.subr.mxu0 0.0
        %2992 = vmatpush1.msra.mxu0 0.0
        %2993 = vmatprep.subr.mxu0 0.0
        %2994 = vmatpush1.msra.mxu0 0.0
        %2995 = vmatprep.subr.mxu0 0.0
        %2996 = vmatpush1.msra.mxu0 0.0
        %2997 = vmatprep.subr.mxu0 0.0
        %2998 = vmatpush1.msra.mxu0 0.0
        %2999 = vmatprep.subr.mxu0 0.0
        %3000 = vmatpush1.msra.mxu0 0.0
        %3001 = vmatprep.subr.mxu0 0.0
        %3002 = vmatpush1.msra.mxu0 0.0
        %3003 = vmatprep.subr.mxu0 0.0
        %3004 = vmatpush1.msra.mxu0 0.0
        %3005 = vmatprep.subr.mxu0 0.0
        %3006 = vmatpush1.msra.mxu0 0.0
        %3007 = vmatprep.subr.mxu0 0.0
        %3008 = vmatpush1.msra.mxu0 0.0
        %3009 = vmatprep.subr.mxu0 0.0
        %3010 = vmatpush1.msra.mxu0 0.0
        %3011 = vmatprep.subr.mxu0 0.0
        %3012 = vmatpush1.msra.mxu0 0.0
        %3013 = vmatprep.subr.mxu0 0.0
        %3014 = vmatpush1.msra.mxu0 0.0
        %3015 = vmatprep.subr.mxu0 0.0
        %3016 = vmatpush1.msra.mxu0 0.0
        %3017 = vmatprep.subr.mxu0 0.0
        %3018 = vmatpush1.msra.mxu0 0.0
        %3019 = vmatprep.subr.mxu0 0.0
        %3020 = vmatpush1.msra.mxu0 0.0
        %3021 = vmatprep.subr.mxu0 0.0
        %3022 = vmatpush1.msra.mxu0 0.0
        %3023 = vmatprep.subr.mxu0 0.0
        %3024 = vmatpush1.msra.mxu0 0.0
        %3025 = vmatprep.subr.mxu0 0.0
        %3026 = vmatpush1.msra.mxu0 0.0
        %3027 = vmatprep.mubr.f32.mxu0 0.0
        %3028 = vmatmul.mubr.f32.gmra.mrb[0].mxu0 %v828
        %v3029 = vpop.f32.mrb[0].mxu0
        %v3030 = vadd.f32 0.0, %v3029
        %v3031 = vpop.f32.mrb[0].mxu0
        %3032 = vdwg.mxu0
        %v3033 = vadd.f32 %v2958, %v3030
        %v3036 = vunpack.c.l.s4 1966171168
        %v3037 = vunpack.c.0.s8 %v3036
        %v3038 = vlaneseq
        %v3039 = vshrl.u32 %v3038, 7
        %v3040 = vsub.s32 %v3037, %v3039
        %v3041 = vrot.slane %v3033, %v3040
        %v3042 = vcombine.high %v3041, %v3041
        %v3044 = vunpack.c.l.s4 1966171168
        %v3045 = vunpack.c.0.s8 %v3044
        %v3046 = vlaneseq
        %v3047 = vshrl.u32 %v3046, 7
        %v3048 = vsub.s32 %v3045, %v3047
        %v3049 = vrot.slane %v3041, %v3048
        %v3051 = vunpack.c.l.s4 1966171168
        %v3052 = vunpack.c.0.s8 %v3051
        %v3053 = vlaneseq
        %v3054 = vshrl.u32 %v3053, 7
        %v3055 = vsub.s32 %v3052, %v3054
        %v3056 = vrot.slane %v3042, %v3055
        %v3057 = vcombine.high %v3049, %v3049
        %v3058 = vcombine.high %v3056, %v3056
        %3063 = vst.msk [vmem:[%s178 + $0x3] sm:$0x1] %vm932, %v3049
        %3064 = vst.msk [vmem:[%s178 + $0xb] sm:$0x1] %vm932, %v3056
        %3065 = vst.msk [vmem:[%s178 + $0x13] sm:$0x1] %vm932, %v3057
        %3066 = vst.msk [vmem:[%s178 + $0x1b] sm:$0x1] %vm932, %v3058
        %v3067 = vld [vmem:[%s2807] sm:$0xf]
        %v3068 = vld [vmem:[%s2883] sm:$0xf]
        %v3070 = vsel %vm203, %v3068, 0
        %3072 = vmatprep.subr.mxu0 0.0
        %3073 = vmatpush1.msra.mxu0 %v3070
        %3074 = vmatprep.subr.mxu0 0.0
        %3075 = vmatpush1.msra.mxu0 0.0
        %3076 = vmatprep.subr.mxu0 0.0
        %3077 = vmatpush1.msra.mxu0 0.0
        %3078 = vmatprep.subr.mxu0 0.0
        %3079 = vmatpush1.msra.mxu0 0.0
        %3080 = vmatprep.subr.mxu0 0.0
        %3081 = vmatpush1.msra.mxu0 0.0
        %3082 = vmatprep.subr.mxu0 0.0
        %3083 = vmatpush1.msra.mxu0 0.0
        %3084 = vmatprep.subr.mxu0 0.0
        %3085 = vmatpush1.msra.mxu0 0.0
        %3086 = vmatprep.subr.mxu0 0.0
        %3087 = vmatpush1.msra.mxu0 0.0
        %3088 = vmatprep.subr.mxu0 0.0
        %3089 = vmatpush1.msra.mxu0 0.0
        %3090 = vmatprep.subr.mxu0 0.0
        %3091 = vmatpush1.msra.mxu0 0.0
        %3092 = vmatprep.subr.mxu0 0.0
        %3093 = vmatpush1.msra.mxu0 0.0
        %3094 = vmatprep.subr.mxu0 0.0
        %3095 = vmatpush1.msra.mxu0 0.0
        %3096 = vmatprep.subr.mxu0 0.0
        %3097 = vmatpush1.msra.mxu0 0.0
        %3098 = vmatprep.subr.mxu0 0.0
        %3099 = vmatpush1.msra.mxu0 0.0
        %3100 = vmatprep.subr.mxu0 0.0
        %3101 = vmatpush1.msra.mxu0 0.0
        %3102 = vmatprep.subr.mxu0 0.0
        %3103 = vmatpush1.msra.mxu0 0.0
        %3104 = vmatprep.subr.mxu0 0.0
        %3105 = vmatpush1.msra.mxu0 0.0
        %3106 = vmatprep.subr.mxu0 0.0
        %3107 = vmatpush1.msra.mxu0 0.0
        %3108 = vmatprep.subr.mxu0 0.0
        %3109 = vmatpush1.msra.mxu0 0.0
        %3110 = vmatprep.subr.mxu0 0.0
        %3111 = vmatpush1.msra.mxu0 0.0
        %3112 = vmatprep.subr.mxu0 0.0
        %3113 = vmatpush1.msra.mxu0 0.0
        %3114 = vmatprep.subr.mxu0 0.0
        %3115 = vmatpush1.msra.mxu0 0.0
        %3116 = vmatprep.subr.mxu0 0.0
        %3117 = vmatpush1.msra.mxu0 0.0
        %3118 = vmatprep.subr.mxu0 0.0
        %3119 = vmatpush1.msra.mxu0 0.0
        %3120 = vmatprep.subr.mxu0 0.0
        %3121 = vmatpush1.msra.mxu0 0.0
        %3122 = vmatprep.subr.mxu0 0.0
        %3123 = vmatpush1.msra.mxu0 0.0
        %3124 = vmatprep.subr.mxu0 0.0
        %3125 = vmatpush1.msra.mxu0 0.0
        %3126 = vmatprep.subr.mxu0 0.0
        %3127 = vmatpush1.msra.mxu0 0.0
        %3128 = vmatprep.subr.mxu0 0.0
        %3129 = vmatpush1.msra.mxu0 0.0
        %3130 = vmatprep.subr.mxu0 0.0
        %3131 = vmatpush1.msra.mxu0 0.0
        %3132 = vmatprep.subr.mxu0 0.0
        %3133 = vmatpush1.msra.mxu0 0.0
        %3134 = vmatprep.subr.mxu0 0.0
        %3135 = vmatpush1.msra.mxu0 0.0
        %3136 = vmatprep.mubr.f32.mxu0 0.0
        %3137 = vmatmul.mubr.f32.gmra.mrb[0].mxu0 %v201
        %v3138 = vpop.f32.mrb[0].mxu0
        %v3139 = vadd.f32 0.0, %v3138
        %v3140 = vpop.f32.mrb[0].mxu0
        %3141 = vdwg.mxu0
        %v3143 = vsel %vm203, %v3067, 0
        %3145 = vmatprep.subr.mxu0 0.0
        %3146 = vmatpush1.msra.mxu0 %v3143
        %3147 = vmatprep.subr.mxu0 0.0
        %3148 = vmatpush1.msra.mxu0 0.0
        %3149 = vmatprep.subr.mxu0 0.0
        %3150 = vmatpush1.msra.mxu0 0.0
        %3151 = vmatprep.subr.mxu0 0.0
        %3152 = vmatpush1.msra.mxu0 0.0
        %3153 = vmatprep.subr.mxu0 0.0
        %3154 = vmatpush1.msra.mxu0 0.0
        %3155 = vmatprep.subr.mxu0 0.0
        %3156 = vmatpush1.msra.mxu0 0.0
        %3157 = vmatprep.subr.mxu0 0.0
        %3158 = vmatpush1.msra.mxu0 0.0
        %3159 = vmatprep.subr.mxu0 0.0
        %3160 = vmatpush1.msra.mxu0 0.0
        %3161 = vmatprep.subr.mxu0 0.0
        %3162 = vmatpush1.msra.mxu0 0.0
        %3163 = vmatprep.subr.mxu0 0.0
        %3164 = vmatpush1.msra.mxu0 0.0
        %3165 = vmatprep.subr.mxu0 0.0
        %3166 = vmatpush1.msra.mxu0 0.0
        %3167 = vmatprep.subr.mxu0 0.0
        %3168 = vmatpush1.msra.mxu0 0.0
        %3169 = vmatprep.subr.mxu0 0.0
        %3170 = vmatpush1.msra.mxu0 0.0
        %3171 = vmatprep.subr.mxu0 0.0
        %3172 = vmatpush1.msra.mxu0 0.0
        %3173 = vmatprep.subr.mxu0 0.0
        %3174 = vmatpush1.msra.mxu0 0.0
        %3175 = vmatprep.subr.mxu0 0.0
        %3176 = vmatpush1.msra.mxu0 0.0
        %3177 = vmatprep.subr.mxu0 0.0
        %3178 = vmatpush1.msra.mxu0 0.0
        %3179 = vmatprep.subr.mxu0 0.0
        %3180 = vmatpush1.msra.mxu0 0.0
        %3181 = vmatprep.subr.mxu0 0.0
        %3182 = vmatpush1.msra.mxu0 0.0
        %3183 = vmatprep.subr.mxu0 0.0
        %3184 = vmatpush1.msra.mxu0 0.0
        %3185 = vmatprep.subr.mxu0 0.0
        %3186 = vmatpush1.msra.mxu0 0.0
        %3187 = vmatprep.subr.mxu0 0.0
        %3188 = vmatpush1.msra.mxu0 0.0
        %3189 = vmatprep.subr.mxu0 0.0
        %3190 = vmatpush1.msra.mxu0 0.0
        %3191 = vmatprep.subr.mxu0 0.0
        %3192 = vmatpush1.msra.mxu0 0.0
        %3193 = vmatprep.subr.mxu0 0.0
        %3194 = vmatpush1.msra.mxu0 0.0
        %3195 = vmatprep.subr.mxu0 0.0
        %3196 = vmatpush1.msra.mxu0 0.0
        %3197 = vmatprep.subr.mxu0 0.0
        %3198 = vmatpush1.msra.mxu0 0.0
        %3199 = vmatprep.subr.mxu0 0.0
        %3200 = vmatpush1.msra.mxu0 0.0
        %3201 = vmatprep.subr.mxu0 0.0
        %3202 = vmatpush1.msra.mxu0 0.0
        %3203 = vmatprep.subr.mxu0 0.0
        %3204 = vmatpush1.msra.mxu0 0.0
        %3205 = vmatprep.subr.mxu0 0.0
        %3206 = vmatpush1.msra.mxu0 0.0
        %3207 = vmatprep.subr.mxu0 0.0
        %3208 = vmatpush1.msra.mxu0 0.0
        %3209 = vmatprep.mubr.f32.mxu0 0.0
        %3210 = vmatmul.mubr.f32.gmra.mrb[0].mxu0 %v278
        %v3211 = vpop.f32.mrb[0].mxu0
        %v3212 = vadd.f32 %v3139, %v3211
        %v3213 = vpop.f32.mrb[0].mxu0
        %3214 = vdwg.mxu0
        %3215 = vrot.lane.b32.xlu0 %v3067, 127
        %v3216 = vpop.permute.xlu0 %3215
        %v3217 = vsel %vm203, %v3216, 0
        %3219 = vmatprep.subr.mxu0 0.0
        %3220 = vmatpush1.msra.mxu0 %v3217
        %3221 = vmatprep.subr.mxu0 0.0
        %3222 = vmatpush1.msra.mxu0 0.0
        %3223 = vmatprep.subr.mxu0 0.0
        %3224 = vmatpush1.msra.mxu0 0.0
        %3225 = vmatprep.subr.mxu0 0.0
        %3226 = vmatpush1.msra.mxu0 0.0
        %3227 = vmatprep.subr.mxu0 0.0
        %3228 = vmatpush1.msra.mxu0 0.0
        %3229 = vmatprep.subr.mxu0 0.0
        %3230 = vmatpush1.msra.mxu0 0.0
        %3231 = vmatprep.subr.mxu0 0.0
        %3232 = vmatpush1.msra.mxu0 0.0
        %3233 = vmatprep.subr.mxu0 0.0
        %3234 = vmatpush1.msra.mxu0 0.0
        %3235 = vmatprep.subr.mxu0 0.0
        %3236 = vmatpush1.msra.mxu0 0.0
        %3237 = vmatprep.subr.mxu0 0.0
        %3238 = vmatpush1.msra.mxu0 0.0
        %3239 = vmatprep.subr.mxu0 0.0
        %3240 = vmatpush1.msra.mxu0 0.0
        %3241 = vmatprep.subr.mxu0 0.0
        %3242 = vmatpush1.msra.mxu0 0.0
        %3243 = vmatprep.subr.mxu0 0.0
        %3244 = vmatpush1.msra.mxu0 0.0
        %3245 = vmatprep.subr.mxu0 0.0
        %3246 = vmatpush1.msra.mxu0 0.0
        %3247 = vmatprep.subr.mxu0 0.0
        %3248 = vmatpush1.msra.mxu0 0.0
        %3249 = vmatprep.subr.mxu0 0.0
        %3250 = vmatpush1.msra.mxu0 0.0
        %3251 = vmatprep.subr.mxu0 0.0
        %3252 = vmatpush1.msra.mxu0 0.0
        %3253 = vmatprep.subr.mxu0 0.0
        %3254 = vmatpush1.msra.mxu0 0.0
        %3255 = vmatprep.subr.mxu0 0.0
        %3256 = vmatpush1.msra.mxu0 0.0
        %3257 = vmatprep.subr.mxu0 0.0
        %3258 = vmatpush1.msra.mxu0 0.0
        %3259 = vmatprep.subr.mxu0 0.0
        %3260 = vmatpush1.msra.mxu0 0.0
        %3261 = vmatprep.subr.mxu0 0.0
        %3262 = vmatpush1.msra.mxu0 0.0
        %3263 = vmatprep.subr.mxu0 0.0
        %3264 = vmatpush1.msra.mxu0 0.0
        %3265 = vmatprep.subr.mxu0 0.0
        %3266 = vmatpush1.msra.mxu0 0.0
        %3267 = vmatprep.subr.mxu0 0.0
        %3268 = vmatpush1.msra.mxu0 0.0
        %3269 = vmatprep.subr.mxu0 0.0
        %3270 = vmatpush1.msra.mxu0 0.0
        %3271 = vmatprep.subr.mxu0 0.0
        %3272 = vmatpush1.msra.mxu0 0.0
        %3273 = vmatprep.subr.mxu0 0.0
        %3274 = vmatpush1.msra.mxu0 0.0
        %3275 = vmatprep.subr.mxu0 0.0
        %3276 = vmatpush1.msra.mxu0 0.0
        %3277 = vmatprep.subr.mxu0 0.0
        %3278 = vmatpush1.msra.mxu0 0.0
        %3279 = vmatprep.subr.mxu0 0.0
        %3280 = vmatpush1.msra.mxu0 0.0
        %3281 = vmatprep.subr.mxu0 0.0
        %3282 = vmatpush1.msra.mxu0 0.0
        %3283 = vmatprep.mubr.f32.mxu0 0.0
        %3284 = vmatmul.mubr.f32.gmra.mrb[0].mxu0 %v356
        %v3285 = vpop.f32.mrb[0].mxu0
        %v3286 = vadd.f32 0.0, %v3285
        %v3287 = vpop.f32.mrb[0].mxu0
        %3288 = vdwg.mxu0
        %v3289 = vadd.f32 %v3212, %v3286
        %s3290 = scalar_lea.vmem %s149, 80 [#allocation2]
        %v3291 = vld [vmem:[%s3290] sm:$0xf]
        %v3293 = vsel %vm203, %v3291, 0
        %3295 = vmatprep.subr.mxu0 0.0
        %3296 = vmatpush1.msra.mxu0 %v3293
        %3297 = vmatprep.subr.mxu0 0.0
        %3298 = vmatpush1.msra.mxu0 0.0
        %3299 = vmatprep.subr.mxu0 0.0
        %3300 = vmatpush1.msra.mxu0 0.0
        %3301 = vmatprep.subr.mxu0 0.0
        %3302 = vmatpush1.msra.mxu0 0.0
        %3303 = vmatprep.subr.mxu0 0.0
        %3304 = vmatpush1.msra.mxu0 0.0
        %3305 = vmatprep.subr.mxu0 0.0
        %3306 = vmatpush1.msra.mxu0 0.0
        %3307 = vmatprep.subr.mxu0 0.0
        %3308 = vmatpush1.msra.mxu0 0.0
        %3309 = vmatprep.subr.mxu0 0.0
        %3310 = vmatpush1.msra.mxu0 0.0
        %3311 = vmatprep.subr.mxu0 0.0
        %3312 = vmatpush1.msra.mxu0 0.0
        %3313 = vmatprep.subr.mxu0 0.0
        %3314 = vmatpush1.msra.mxu0 0.0
        %3315 = vmatprep.subr.mxu0 0.0
        %3316 = vmatpush1.msra.mxu0 0.0
        %3317 = vmatprep.subr.mxu0 0.0
        %3318 = vmatpush1.msra.mxu0 0.0
        %3319 = vmatprep.subr.mxu0 0.0
        %3320 = vmatpush1.msra.mxu0 0.0
        %3321 = vmatprep.subr.mxu0 0.0
        %3322 = vmatpush1.msra.mxu0 0.0
        %3323 = vmatprep.subr.mxu0 0.0
        %3324 = vmatpush1.msra.mxu0 0.0
        %3325 = vmatprep.subr.mxu0 0.0
        %3326 = vmatpush1.msra.mxu0 0.0
        %3327 = vmatprep.subr.mxu0 0.0
        %3328 = vmatpush1.msra.mxu0 0.0
        %3329 = vmatprep.subr.mxu0 0.0
        %3330 = vmatpush1.msra.mxu0 0.0
        %3331 = vmatprep.subr.mxu0 0.0
        %3332 = vmatpush1.msra.mxu0 0.0
        %3333 = vmatprep.subr.mxu0 0.0
        %3334 = vmatpush1.msra.mxu0 0.0
        %3335 = vmatprep.subr.mxu0 0.0
        %3336 = vmatpush1.msra.mxu0 0.0
        %3337 = vmatprep.subr.mxu0 0.0
        %3338 = vmatpush1.msra.mxu0 0.0
        %3339 = vmatprep.subr.mxu0 0.0
        %3340 = vmatpush1.msra.mxu0 0.0
        %3341 = vmatprep.subr.mxu0 0.0
        %3342 = vmatpush1.msra.mxu0 0.0
        %3343 = vmatprep.subr.mxu0 0.0
        %3344 = vmatpush1.msra.mxu0 0.0
        %3345 = vmatprep.subr.mxu0 0.0
        %3346 = vmatpush1.msra.mxu0 0.0
        %3347 = vmatprep.subr.mxu0 0.0
        %3348 = vmatpush1.msra.mxu0 0.0
        %3349 = vmatprep.subr.mxu0 0.0
        %3350 = vmatpush1.msra.mxu0 0.0
        %3351 = vmatprep.subr.mxu0 0.0
        %3352 = vmatpush1.msra.mxu0 0.0
        %3353 = vmatprep.subr.mxu0 0.0
        %3354 = vmatpush1.msra.mxu0 0.0
        %3355 = vmatprep.subr.mxu0 0.0
        %3356 = vmatpush1.msra.mxu0 0.0
        %3357 = vmatprep.subr.mxu0 0.0
        %3358 = vmatpush1.msra.mxu0 0.0
        %3359 = vmatprep.mubr.f32.mxu0 0.0
        %3360 = vmatmul.mubr.f32.gmra.mrb[0].mxu0 %v434
        %v3361 = vpop.f32.mrb[0].mxu0
        %v3362 = vadd.f32 0.0, %v3361
        %v3363 = vpop.f32.mrb[0].mxu0
        %3364 = vdwg.mxu0
        %v3365 = vadd.f32 %v3289, %v3362
        %s3366 = scalar_lea.vmem %s149, 112 [#allocation2]
        %v3367 = vld [vmem:[%s3366] sm:$0xf]
        %v3369 = vsel %vm203, %v3367, 0
        %3371 = vmatprep.subr.mxu0 0.0
        %3372 = vmatpush1.msra.mxu0 %v3369
        %3373 = vmatprep.subr.mxu0 0.0
        %3374 = vmatpush1.msra.mxu0 0.0
        %3375 = vmatprep.subr.mxu0 0.0
        %3376 = vmatpush1.msra.mxu0 0.0
        %3377 = vmatprep.subr.mxu0 0.0
        %3378 = vmatpush1.msra.mxu0 0.0
        %3379 = vmatprep.subr.mxu0 0.0
        %3380 = vmatpush1.msra.mxu0 0.0
        %3381 = vmatprep.subr.mxu0 0.0
        %3382 = vmatpush1.msra.mxu0 0.0
        %3383 = vmatprep.subr.mxu0 0.0
        %3384 = vmatpush1.msra.mxu0 0.0
        %3385 = vmatprep.subr.mxu0 0.0
        %3386 = vmatpush1.msra.mxu0 0.0
        %3387 = vmatprep.subr.mxu0 0.0
        %3388 = vmatpush1.msra.mxu0 0.0
        %3389 = vmatprep.subr.mxu0 0.0
        %3390 = vmatpush1.msra.mxu0 0.0
        %3391 = vmatprep.subr.mxu0 0.0
        %3392 = vmatpush1.msra.mxu0 0.0
        %3393 = vmatprep.subr.mxu0 0.0
        %3394 = vmatpush1.msra.mxu0 0.0
        %3395 = vmatprep.subr.mxu0 0.0
        %3396 = vmatpush1.msra.mxu0 0.0
        %3397 = vmatprep.subr.mxu0 0.0
        %3398 = vmatpush1.msra.mxu0 0.0
        %3399 = vmatprep.subr.mxu0 0.0
        %3400 = vmatpush1.msra.mxu0 0.0
        %3401 = vmatprep.subr.mxu0 0.0
        %3402 = vmatpush1.msra.mxu0 0.0
        %3403 = vmatprep.subr.mxu0 0.0
        %3404 = vmatpush1.msra.mxu0 0.0
        %3405 = vmatprep.subr.mxu0 0.0
        %3406 = vmatpush1.msra.mxu0 0.0
        %3407 = vmatprep.subr.mxu0 0.0
        %3408 = vmatpush1.msra.mxu0 0.0
        %3409 = vmatprep.subr.mxu0 0.0
        %3410 = vmatpush1.msra.mxu0 0.0
        %3411 = vmatprep.subr.mxu0 0.0
        %3412 = vmatpush1.msra.mxu0 0.0
        %3413 = vmatprep.subr.mxu0 0.0
        %3414 = vmatpush1.msra.mxu0 0.0
        %3415 = vmatprep.subr.mxu0 0.0
        %3416 = vmatpush1.msra.mxu0 0.0
        %3417 = vmatprep.subr.mxu0 0.0
        %3418 = vmatpush1.msra.mxu0 0.0
        %3419 = vmatprep.subr.mxu0 0.0
        %3420 = vmatpush1.msra.mxu0 0.0
        %3421 = vmatprep.subr.mxu0 0.0
        %3422 = vmatpush1.msra.mxu0 0.0
        %3423 = vmatprep.subr.mxu0 0.0
        %3424 = vmatpush1.msra.mxu0 0.0
        %3425 = vmatprep.subr.mxu0 0.0
        %3426 = vmatpush1.msra.mxu0 0.0
        %3427 = vmatprep.subr.mxu0 0.0
        %3428 = vmatpush1.msra.mxu0 0.0
        %3429 = vmatprep.subr.mxu0 0.0
        %3430 = vmatpush1.msra.mxu0 0.0
        %3431 = vmatprep.subr.mxu0 0.0
        %3432 = vmatpush1.msra.mxu0 0.0
        %3433 = vmatprep.subr.mxu0 0.0
        %3434 = vmatpush1.msra.mxu0 0.0
        %3435 = vmatprep.mubr.f32.mxu0 0.0
        %3436 = vmatmul.mubr.f32.gmra.mrb[0].mxu0 %v513
        %v3437 = vpop.f32.mrb[0].mxu0
        %v3438 = vadd.f32 0.0, %v3437
        %v3439 = vpop.f32.mrb[0].mxu0
        %3440 = vdwg.mxu0
        %v3441 = vadd.f32 %v3365, %v3438
        %3442 = vrot.lane.b32.xlu0 %v3291, 127
        %v3443 = vpop.permute.xlu0 %3442
        %v3444 = vsel %vm203, %v3443, 0
        %3446 = vmatprep.subr.mxu0 0.0
        %3447 = vmatpush1.msra.mxu0 %v3444
        %3448 = vmatprep.subr.mxu0 0.0
        %3449 = vmatpush1.msra.mxu0 0.0
        %3450 = vmatprep.subr.mxu0 0.0
        %3451 = vmatpush1.msra.mxu0 0.0
        %3452 = vmatprep.subr.mxu0 0.0
        %3453 = vmatpush1.msra.mxu0 0.0
        %3454 = vmatprep.subr.mxu0 0.0
        %3455 = vmatpush1.msra.mxu0 0.0
        %3456 = vmatprep.subr.mxu0 0.0
        %3457 = vmatpush1.msra.mxu0 0.0
        %3458 = vmatprep.subr.mxu0 0.0
        %3459 = vmatpush1.msra.mxu0 0.0
        %3460 = vmatprep.subr.mxu0 0.0
        %3461 = vmatpush1.msra.mxu0 0.0
        %3462 = vmatprep.subr.mxu0 0.0
        %3463 = vmatpush1.msra.mxu0 0.0
        %3464 = vmatprep.subr.mxu0 0.0
        %3465 = vmatpush1.msra.mxu0 0.0
        %3466 = vmatprep.subr.mxu0 0.0
        %3467 = vmatpush1.msra.mxu0 0.0
        %3468 = vmatprep.subr.mxu0 0.0
        %3469 = vmatpush1.msra.mxu0 0.0
        %3470 = vmatprep.subr.mxu0 0.0
        %3471 = vmatpush1.msra.mxu0 0.0
        %3472 = vmatprep.subr.mxu0 0.0
        %3473 = vmatpush1.msra.mxu0 0.0
        %3474 = vmatprep.subr.mxu0 0.0
        %3475 = vmatpush1.msra.mxu0 0.0
        %3476 = vmatprep.subr.mxu0 0.0
        %3477 = vmatpush1.msra.mxu0 0.0
        %3478 = vmatprep.subr.mxu0 0.0
        %3479 = vmatpush1.msra.mxu0 0.0
        %3480 = vmatprep.subr.mxu0 0.0
        %3481 = vmatpush1.msra.mxu0 0.0
        %3482 = vmatprep.subr.mxu0 0.0
        %3483 = vmatpush1.msra.mxu0 0.0
        %3484 = vmatprep.subr.mxu0 0.0
        %3485 = vmatpush1.msra.mxu0 0.0
        %3486 = vmatprep.subr.mxu0 0.0
        %3487 = vmatpush1.msra.mxu0 0.0
        %3488 = vmatprep.subr.mxu0 0.0
        %3489 = vmatpush1.msra.mxu0 0.0
        %3490 = vmatprep.subr.mxu0 0.0
        %3491 = vmatpush1.msra.mxu0 0.0
        %3492 = vmatprep.subr.mxu0 0.0
        %3493 = vmatpush1.msra.mxu0 0.0
        %3494 = vmatprep.subr.mxu0 0.0
        %3495 = vmatpush1.msra.mxu0 0.0
        %3496 = vmatprep.subr.mxu0 0.0
        %3497 = vmatpush1.msra.mxu0 0.0
        %3498 = vmatprep.subr.mxu0 0.0
        %3499 = vmatpush1.msra.mxu0 0.0
        %3500 = vmatprep.subr.mxu0 0.0
        %3501 = vmatpush1.msra.mxu0 0.0
        %3502 = vmatprep.subr.mxu0 0.0
        %3503 = vmatpush1.msra.mxu0 0.0
        %3504 = vmatprep.subr.mxu0 0.0
        %3505 = vmatpush1.msra.mxu0 0.0
        %3506 = vmatprep.subr.mxu0 0.0
        %3507 = vmatpush1.msra.mxu0 0.0
        %3508 = vmatprep.subr.mxu0 0.0
        %3509 = vmatpush1.msra.mxu0 0.0
        %3510 = vmatprep.mubr.f32.mxu0 0.0
        %3511 = vmatmul.mubr.f32.gmra.mrb[0].mxu0 %v592
        %v3512 = vpop.f32.mrb[0].mxu0
        %v3513 = vadd.f32 0.0, %v3512
        %v3514 = vpop.f32.mrb[0].mxu0
        %3515 = vdwg.mxu0
        %v3516 = vadd.f32 %v3441, %v3513
        %s3517 = scalar_lea.vmem %s149, 20 [#allocation2]
        %v3518 = vld [vmem:[%s3517] sm:$0xf]
        %v3520 = vsel %vm203, %v3518, 0
        %3522 = vmatprep.subr.mxu0 0.0
        %3523 = vmatpush1.msra.mxu0 %v3520
        %3524 = vmatprep.subr.mxu0 0.0
        %3525 = vmatpush1.msra.mxu0 0.0
        %3526 = vmatprep.subr.mxu0 0.0
        %3527 = vmatpush1.msra.mxu0 0.0
        %3528 = vmatprep.subr.mxu0 0.0
        %3529 = vmatpush1.msra.mxu0 0.0
        %3530 = vmatprep.subr.mxu0 0.0
        %3531 = vmatpush1.msra.mxu0 0.0
        %3532 = vmatprep.subr.mxu0 0.0
        %3533 = vmatpush1.msra.mxu0 0.0
        %3534 = vmatprep.subr.mxu0 0.0
        %3535 = vmatpush1.msra.mxu0 0.0
        %3536 = vmatprep.subr.mxu0 0.0
        %3537 = vmatpush1.msra.mxu0 0.0
        %3538 = vmatprep.subr.mxu0 0.0
        %3539 = vmatpush1.msra.mxu0 0.0
        %3540 = vmatprep.subr.mxu0 0.0
        %3541 = vmatpush1.msra.mxu0 0.0
        %3542 = vmatprep.subr.mxu0 0.0
        %3543 = vmatpush1.msra.mxu0 0.0
        %3544 = vmatprep.subr.mxu0 0.0
        %3545 = vmatpush1.msra.mxu0 0.0
        %3546 = vmatprep.subr.mxu0 0.0
        %3547 = vmatpush1.msra.mxu0 0.0
        %3548 = vmatprep.subr.mxu0 0.0
        %3549 = vmatpush1.msra.mxu0 0.0
        %3550 = vmatprep.subr.mxu0 0.0
        %3551 = vmatpush1.msra.mxu0 0.0
        %3552 = vmatprep.subr.mxu0 0.0
        %3553 = vmatpush1.msra.mxu0 0.0
        %3554 = vmatprep.subr.mxu0 0.0
        %3555 = vmatpush1.msra.mxu0 0.0
        %3556 = vmatprep.subr.mxu0 0.0
        %3557 = vmatpush1.msra.mxu0 0.0
        %3558 = vmatprep.subr.mxu0 0.0
        %3559 = vmatpush1.msra.mxu0 0.0
        %3560 = vmatprep.subr.mxu0 0.0
        %3561 = vmatpush1.msra.mxu0 0.0
        %3562 = vmatprep.subr.mxu0 0.0
        %3563 = vmatpush1.msra.mxu0 0.0
        %3564 = vmatprep.subr.mxu0 0.0
        %3565 = vmatpush1.msra.mxu0 0.0
        %3566 = vmatprep.subr.mxu0 0.0
        %3567 = vmatpush1.msra.mxu0 0.0
        %3568 = vmatprep.subr.mxu0 0.0
        %3569 = vmatpush1.msra.mxu0 0.0
        %3570 = vmatprep.subr.mxu0 0.0
        %3571 = vmatpush1.msra.mxu0 0.0
        %3572 = vmatprep.subr.mxu0 0.0
        %3573 = vmatpush1.msra.mxu0 0.0
        %3574 = vmatprep.subr.mxu0 0.0
        %3575 = vmatpush1.msra.mxu0 0.0
        %3576 = vmatprep.subr.mxu0 0.0
        %3577 = vmatpush1.msra.mxu0 0.0
        %3578 = vmatprep.subr.mxu0 0.0
        %3579 = vmatpush1.msra.mxu0 0.0
        %3580 = vmatprep.subr.mxu0 0.0
        %3581 = vmatpush1.msra.mxu0 0.0
        %3582 = vmatprep.subr.mxu0 0.0
        %3583 = vmatpush1.msra.mxu0 0.0
        %3584 = vmatprep.subr.mxu0 0.0
        %3585 = vmatpush1.msra.mxu0 0.0
        %3586 = vmatprep.mubr.f32.mxu0 0.0
        %3587 = vmatmul.mubr.f32.gmra.mrb[0].mxu0 %v670
        %v3588 = vpop.f32.mrb[0].mxu0
        %v3589 = vadd.f32 0.0, %v3588
        %v3590 = vpop.f32.mrb[0].mxu0
        %3591 = vdwg.mxu0
        %v3592 = vadd.f32 %v3516, %v3589
        %s3593 = scalar_lea.vmem %s149, 52 [#allocation2]
        %v3594 = vld [vmem:[%s3593] sm:$0xf]
        %v3596 = vsel %vm203, %v3594, 0
        %3598 = vmatprep.subr.mxu0 0.0
        %3599 = vmatpush1.msra.mxu0 %v3596
        %3600 = vmatprep.subr.mxu0 0.0
        %3601 = vmatpush1.msra.mxu0 0.0
        %3602 = vmatprep.subr.mxu0 0.0
        %3603 = vmatpush1.msra.mxu0 0.0
        %3604 = vmatprep.subr.mxu0 0.0
        %3605 = vmatpush1.msra.mxu0 0.0
        %3606 = vmatprep.subr.mxu0 0.0
        %3607 = vmatpush1.msra.mxu0 0.0
        %3608 = vmatprep.subr.mxu0 0.0
        %3609 = vmatpush1.msra.mxu0 0.0
        %3610 = vmatprep.subr.mxu0 0.0
        %3611 = vmatpush1.msra.mxu0 0.0
        %3612 = vmatprep.subr.mxu0 0.0
        %3613 = vmatpush1.msra.mxu0 0.0
        %3614 = vmatprep.subr.mxu0 0.0
        %3615 = vmatpush1.msra.mxu0 0.0
        %3616 = vmatprep.subr.mxu0 0.0
        %3617 = vmatpush1.msra.mxu0 0.0
        %3618 = vmatprep.subr.mxu0 0.0
        %3619 = vmatpush1.msra.mxu0 0.0
        %3620 = vmatprep.subr.mxu0 0.0
        %3621 = vmatpush1.msra.mxu0 0.0
        %3622 = vmatprep.subr.mxu0 0.0
        %3623 = vmatpush1.msra.mxu0 0.0
        %3624 = vmatprep.subr.mxu0 0.0
        %3625 = vmatpush1.msra.mxu0 0.0
        %3626 = vmatprep.subr.mxu0 0.0
        %3627 = vmatpush1.msra.mxu0 0.0
        %3628 = vmatprep.subr.mxu0 0.0
        %3629 = vmatpush1.msra.mxu0 0.0
        %3630 = vmatprep.subr.mxu0 0.0
        %3631 = vmatpush1.msra.mxu0 0.0
        %3632 = vmatprep.subr.mxu0 0.0
        %3633 = vmatpush1.msra.mxu0 0.0
        %3634 = vmatprep.subr.mxu0 0.0
        %3635 = vmatpush1.msra.mxu0 0.0
        %3636 = vmatprep.subr.mxu0 0.0
        %3637 = vmatpush1.msra.mxu0 0.0
        %3638 = vmatprep.subr.mxu0 0.0
        %3639 = vmatpush1.msra.mxu0 0.0
        %3640 = vmatprep.subr.mxu0 0.0
        %3641 = vmatpush1.msra.mxu0 0.0
        %3642 = vmatprep.subr.mxu0 0.0
        %3643 = vmatpush1.msra.mxu0 0.0
        %3644 = vmatprep.subr.mxu0 0.0
        %3645 = vmatpush1.msra.mxu0 0.0
        %3646 = vmatprep.subr.mxu0 0.0
        %3647 = vmatpush1.msra.mxu0 0.0
        %3648 = vmatprep.subr.mxu0 0.0
        %3649 = vmatpush1.msra.mxu0 0.0
        %3650 = vmatprep.subr.mxu0 0.0
        %3651 = vmatpush1.msra.mxu0 0.0
        %3652 = vmatprep.subr.mxu0 0.0
        %3653 = vmatpush1.msra.mxu0 0.0
        %3654 = vmatprep.subr.mxu0 0.0
        %3655 = vmatpush1.msra.mxu0 0.0
        %3656 = vmatprep.subr.mxu0 0.0
        %3657 = vmatpush1.msra.mxu0 0.0
        %3658 = vmatprep.subr.mxu0 0.0
        %3659 = vmatpush1.msra.mxu0 0.0
        %3660 = vmatprep.subr.mxu0 0.0
        %3661 = vmatpush1.msra.mxu0 0.0
        %3662 = vmatprep.mubr.f32.mxu0 0.0
        %3663 = vmatmul.mubr.f32.gmra.mrb[0].mxu0 %v749
        %v3664 = vpop.f32.mrb[0].mxu0
        %v3665 = vadd.f32 0.0, %v3664
        %v3666 = vpop.f32.mrb[0].mxu0
        %3667 = vdwg.mxu0
        %v3668 = vadd.f32 %v3592, %v3665
        %3669 = vrot.lane.b32.xlu0 %v3518, 127
        %v3670 = vpop.permute.xlu0 %3669
        %v3671 = vsel %vm203, %v3670, 0
        %3673 = vmatprep.subr.mxu0 0.0
        %3674 = vmatpush1.msra.mxu0 %v3671
        %3675 = vmatprep.subr.mxu0 0.0
        %3676 = vmatpush1.msra.mxu0 0.0
        %3677 = vmatprep.subr.mxu0 0.0
        %3678 = vmatpush1.msra.mxu0 0.0
        %3679 = vmatprep.subr.mxu0 0.0
        %3680 = vmatpush1.msra.mxu0 0.0
        %3681 = vmatprep.subr.mxu0 0.0
        %3682 = vmatpush1.msra.mxu0 0.0
        %3683 = vmatprep.subr.mxu0 0.0
        %3684 = vmatpush1.msra.mxu0 0.0
        %3685 = vmatprep.subr.mxu0 0.0
        %3686 = vmatpush1.msra.mxu0 0.0
        %3687 = vmatprep.subr.mxu0 0.0
        %3688 = vmatpush1.msra.mxu0 0.0
        %3689 = vmatprep.subr.mxu0 0.0
        %3690 = vmatpush1.msra.mxu0 0.0
        %3691 = vmatprep.subr.mxu0 0.0
        %3692 = vmatpush1.msra.mxu0 0.0
        %3693 = vmatprep.subr.mxu0 0.0
        %3694 = vmatpush1.msra.mxu0 0.0
        %3695 = vmatprep.subr.mxu0 0.0
        %3696 = vmatpush1.msra.mxu0 0.0
        %3697 = vmatprep.subr.mxu0 0.0
        %3698 = vmatpush1.msra.mxu0 0.0
        %3699 = vmatprep.subr.mxu0 0.0
        %3700 = vmatpush1.msra.mxu0 0.0
        %3701 = vmatprep.subr.mxu0 0.0
        %3702 = vmatpush1.msra.mxu0 0.0
        %3703 = vmatprep.subr.mxu0 0.0
        %3704 = vmatpush1.msra.mxu0 0.0
        %3705 = vmatprep.subr.mxu0 0.0
        %3706 = vmatpush1.msra.mxu0 0.0
        %3707 = vmatprep.subr.mxu0 0.0
        %3708 = vmatpush1.msra.mxu0 0.0
        %3709 = vmatprep.subr.mxu0 0.0
        %3710 = vmatpush1.msra.mxu0 0.0
        %3711 = vmatprep.subr.mxu0 0.0
        %3712 = vmatpush1.msra.mxu0 0.0
        %3713 = vmatprep.subr.mxu0 0.0
        %3714 = vmatpush1.msra.mxu0 0.0
        %3715 = vmatprep.subr.mxu0 0.0
        %3716 = vmatpush1.msra.mxu0 0.0
        %3717 = vmatprep.subr.mxu0 0.0
        %3718 = vmatpush1.msra.mxu0 0.0
        %3719 = vmatprep.subr.mxu0 0.0
        %3720 = vmatpush1.msra.mxu0 0.0
        %3721 = vmatprep.subr.mxu0 0.0
        %3722 = vmatpush1.msra.mxu0 0.0
        %3723 = vmatprep.subr.mxu0 0.0
        %3724 = vmatpush1.msra.mxu0 0.0
        %3725 = vmatprep.subr.mxu0 0.0
        %3726 = vmatpush1.msra.mxu0 0.0
        %3727 = vmatprep.subr.mxu0 0.0
        %3728 = vmatpush1.msra.mxu0 0.0
        %3729 = vmatprep.subr.mxu0 0.0
        %3730 = vmatpush1.msra.mxu0 0.0
        %3731 = vmatprep.subr.mxu0 0.0
        %3732 = vmatpush1.msra.mxu0 0.0
        %3733 = vmatprep.subr.mxu0 0.0
        %3734 = vmatpush1.msra.mxu0 0.0
        %3735 = vmatprep.subr.mxu0 0.0
        %3736 = vmatpush1.msra.mxu0 0.0
        %3737 = vmatprep.mubr.f32.mxu0 0.0
        %3738 = vmatmul.mubr.f32.gmra.mrb[0].mxu0 %v828
        %v3739 = vpop.f32.mrb[0].mxu0
        %v3740 = vadd.f32 0.0, %v3739
        %v3741 = vpop.f32.mrb[0].mxu0
        %3742 = vdwg.mxu0
        %v3743 = vadd.f32 %v3668, %v3740
        %v3746 = vunpack.c.l.s4 1966171168
        %v3747 = vunpack.c.0.s8 %v3746
        %v3748 = vlaneseq
        %v3749 = vshrl.u32 %v3748, 7
        %v3750 = vsub.s32 %v3747, %v3749
        %v3751 = vrot.slane %v3743, %v3750
        %v3752 = vcombine.high %v3751, %v3751
        %v3754 = vunpack.c.l.s4 1966171168
        %v3755 = vunpack.c.0.s8 %v3754
        %v3756 = vlaneseq
        %v3757 = vshrl.u32 %v3756, 7
        %v3758 = vsub.s32 %v3755, %v3757
        %v3759 = vrot.slane %v3751, %v3758
        %v3761 = vunpack.c.l.s4 1966171168
        %v3762 = vunpack.c.0.s8 %v3761
        %v3763 = vlaneseq
        %v3764 = vshrl.u32 %v3763, 7
        %v3765 = vsub.s32 %v3762, %v3764
        %v3766 = vrot.slane %v3752, %v3765
        %v3767 = vcombine.high %v3759, %v3759
        %v3768 = vcombine.high %v3766, %v3766
        %3773 = vst.msk [vmem:[%s178 + $0x4] sm:$0x1] %vm932, %v3759
        %3774 = vst.msk [vmem:[%s178 + $0xc] sm:$0x1] %vm932, %v3766
        %3775 = vst.msk [vmem:[%s178 + $0x14] sm:$0x1] %vm932, %v3767
        %3776 = vst.msk [vmem:[%s178 + $0x1c] sm:$0x1] %vm932, %v3768
        %v3777 = vld [vmem:[%s3517] sm:$0xf]
        %v3778 = vld [vmem:[%s3593] sm:$0xf]
        %v3780 = vsel %vm203, %v3778, 0
        %3782 = vmatprep.subr.mxu0 0.0
        %3783 = vmatpush1.msra.mxu0 %v3780
        %3784 = vmatprep.subr.mxu0 0.0
        %3785 = vmatpush1.msra.mxu0 0.0
        %3786 = vmatprep.subr.mxu0 0.0
        %3787 = vmatpush1.msra.mxu0 0.0
        %3788 = vmatprep.subr.mxu0 0.0
        %3789 = vmatpush1.msra.mxu0 0.0
        %3790 = vmatprep.subr.mxu0 0.0
        %3791 = vmatpush1.msra.mxu0 0.0
        %3792 = vmatprep.subr.mxu0 0.0
        %3793 = vmatpush1.msra.mxu0 0.0
        %3794 = vmatprep.subr.mxu0 0.0
        %3795 = vmatpush1.msra.mxu0 0.0
        %3796 = vmatprep.subr.mxu0 0.0
        %3797 = vmatpush1.msra.mxu0 0.0
        %3798 = vmatprep.subr.mxu0 0.0
        %3799 = vmatpush1.msra.mxu0 0.0
        %3800 = vmatprep.subr.mxu0 0.0
        %3801 = vmatpush1.msra.mxu0 0.0
        %3802 = vmatprep.subr.mxu0 0.0
        %3803 = vmatpush1.msra.mxu0 0.0
        %3804 = vmatprep.subr.mxu0 0.0
        %3805 = vmatpush1.msra.mxu0 0.0
        %3806 = vmatprep.subr.mxu0 0.0
        %3807 = vmatpush1.msra.mxu0 0.0
        %3808 = vmatprep.subr.mxu0 0.0
        %3809 = vmatpush1.msra.mxu0 0.0
        %3810 = vmatprep.subr.mxu0 0.0
        %3811 = vmatpush1.msra.mxu0 0.0
        %3812 = vmatprep.subr.mxu0 0.0
        %3813 = vmatpush1.msra.mxu0 0.0
        %3814 = vmatprep.subr.mxu0 0.0
        %3815 = vmatpush1.msra.mxu0 0.0
        %3816 = vmatprep.subr.mxu0 0.0
        %3817 = vmatpush1.msra.mxu0 0.0
        %3818 = vmatprep.subr.mxu0 0.0
        %3819 = vmatpush1.msra.mxu0 0.0
        %3820 = vmatprep.subr.mxu0 0.0
        %3821 = vmatpush1.msra.mxu0 0.0
        %3822 = vmatprep.subr.mxu0 0.0
        %3823 = vmatpush1.msra.mxu0 0.0
        %3824 = vmatprep.subr.mxu0 0.0
        %3825 = vmatpush1.msra.mxu0 0.0
        %3826 = vmatprep.subr.mxu0 0.0
        %3827 = vmatpush1.msra.mxu0 0.0
        %3828 = vmatprep.subr.mxu0 0.0
        %3829 = vmatpush1.msra.mxu0 0.0
        %3830 = vmatprep.subr.mxu0 0.0
        %3831 = vmatpush1.msra.mxu0 0.0
        %3832 = vmatprep.subr.mxu0 0.0
        %3833 = vmatpush1.msra.mxu0 0.0
        %3834 = vmatprep.subr.mxu0 0.0
        %3835 = vmatpush1.msra.mxu0 0.0
        %3836 = vmatprep.subr.mxu0 0.0
        %3837 = vmatpush1.msra.mxu0 0.0
        %3838 = vmatprep.subr.mxu0 0.0
        %3839 = vmatpush1.msra.mxu0 0.0
        %3840 = vmatprep.subr.mxu0 0.0
        %3841 = vmatpush1.msra.mxu0 0.0
        %3842 = vmatprep.subr.mxu0 0.0
        %3843 = vmatpush1.msra.mxu0 0.0
        %3844 = vmatprep.subr.mxu0 0.0
        %3845 = vmatpush1.msra.mxu0 0.0
        %3846 = vmatprep.mubr.f32.mxu0 0.0
        %3847 = vmatmul.mubr.f32.gmra.mrb[0].mxu0 %v201
        %v3848 = vpop.f32.mrb[0].mxu0
        %v3849 = vadd.f32 0.0, %v3848
        %v3850 = vpop.f32.mrb[0].mxu0
        %3851 = vdwg.mxu0
        %v3853 = vsel %vm203, %v3777, 0
        %3855 = vmatprep.subr.mxu0 0.0
        %3856 = vmatpush1.msra.mxu0 %v3853
        %3857 = vmatprep.subr.mxu0 0.0
        %3858 = vmatpush1.msra.mxu0 0.0
        %3859 = vmatprep.subr.mxu0 0.0
        %3860 = vmatpush1.msra.mxu0 0.0
        %3861 = vmatprep.subr.mxu0 0.0
        %3862 = vmatpush1.msra.mxu0 0.0
        %3863 = vmatprep.subr.mxu0 0.0
        %3864 = vmatpush1.msra.mxu0 0.0
        %3865 = vmatprep.subr.mxu0 0.0
        %3866 = vmatpush1.msra.mxu0 0.0
        %3867 = vmatprep.subr.mxu0 0.0
        %3868 = vmatpush1.msra.mxu0 0.0
        %3869 = vmatprep.subr.mxu0 0.0
        %3870 = vmatpush1.msra.mxu0 0.0
        %3871 = vmatprep.subr.mxu0 0.0
        %3872 = vmatpush1.msra.mxu0 0.0
        %3873 = vmatprep.subr.mxu0 0.0
        %3874 = vmatpush1.msra.mxu0 0.0
        %3875 = vmatprep.subr.mxu0 0.0
        %3876 = vmatpush1.msra.mxu0 0.0
        %3877 = vmatprep.subr.mxu0 0.0
        %3878 = vmatpush1.msra.mxu0 0.0
        %3879 = vmatprep.subr.mxu0 0.0
        %3880 = vmatpush1.msra.mxu0 0.0
        %3881 = vmatprep.subr.mxu0 0.0
        %3882 = vmatpush1.msra.mxu0 0.0
        %3883 = vmatprep.subr.mxu0 0.0
        %3884 = vmatpush1.msra.mxu0 0.0
        %3885 = vmatprep.subr.mxu0 0.0
        %3886 = vmatpush1.msra.mxu0 0.0
        %3887 = vmatprep.subr.mxu0 0.0
        %3888 = vmatpush1.msra.mxu0 0.0
        %3889 = vmatprep.subr.mxu0 0.0
        %3890 = vmatpush1.msra.mxu0 0.0
        %3891 = vmatprep.subr.mxu0 0.0
        %3892 = vmatpush1.msra.mxu0 0.0
        %3893 = vmatprep.subr.mxu0 0.0
        %3894 = vmatpush1.msra.mxu0 0.0
        %3895 = vmatprep.subr.mxu0 0.0
        %3896 = vmatpush1.msra.mxu0 0.0
        %3897 = vmatprep.subr.mxu0 0.0
        %3898 = vmatpush1.msra.mxu0 0.0
        %3899 = vmatprep.subr.mxu0 0.0
        %3900 = vmatpush1.msra.mxu0 0.0
        %3901 = vmatprep.subr.mxu0 0.0
        %3902 = vmatpush1.msra.mxu0 0.0
        %3903 = vmatprep.subr.mxu0 0.0
        %3904 = vmatpush1.msra.mxu0 0.0
        %3905 = vmatprep.subr.mxu0 0.0
        %3906 = vmatpush1.msra.mxu0 0.0
        %3907 = vmatprep.subr.mxu0 0.0
        %3908 = vmatpush1.msra.mxu0 0.0
        %3909 = vmatprep.subr.mxu0 0.0
        %3910 = vmatpush1.msra.mxu0 0.0
        %3911 = vmatprep.subr.mxu0 0.0
        %3912 = vmatpush1.msra.mxu0 0.0
        %3913 = vmatprep.subr.mxu0 0.0
        %3914 = vmatpush1.msra.mxu0 0.0
        %3915 = vmatprep.subr.mxu0 0.0
        %3916 = vmatpush1.msra.mxu0 0.0
        %3917 = vmatprep.subr.mxu0 0.0
        %3918 = vmatpush1.msra.mxu0 0.0
        %3919 = vmatprep.mubr.f32.mxu0 0.0
        %3920 = vmatmul.mubr.f32.gmra.mrb[0].mxu0 %v278
        %v3921 = vpop.f32.mrb[0].mxu0
        %v3922 = vadd.f32 %v3849, %v3921
        %v3923 = vpop.f32.mrb[0].mxu0
        %3924 = vdwg.mxu0
        %3925 = vrot.lane.b32.xlu0 %v3777, 127
        %v3926 = vpop.permute.xlu0 %3925
        %v3927 = vsel %vm203, %v3926, 0
        %3929 = vmatprep.subr.mxu0 0.0
        %3930 = vmatpush1.msra.mxu0 %v3927
        %3931 = vmatprep.subr.mxu0 0.0
        %3932 = vmatpush1.msra.mxu0 0.0
        %3933 = vmatprep.subr.mxu0 0.0
        %3934 = vmatpush1.msra.mxu0 0.0
        %3935 = vmatprep.subr.mxu0 0.0
        %3936 = vmatpush1.msra.mxu0 0.0
        %3937 = vmatprep.subr.mxu0 0.0
        %3938 = vmatpush1.msra.mxu0 0.0
        %3939 = vmatprep.subr.mxu0 0.0
        %3940 = vmatpush1.msra.mxu0 0.0
        %3941 = vmatprep.subr.mxu0 0.0
        %3942 = vmatpush1.msra.mxu0 0.0
        %3943 = vmatprep.subr.mxu0 0.0
        %3944 = vmatpush1.msra.mxu0 0.0
        %3945 = vmatprep.subr.mxu0 0.0
        %3946 = vmatpush1.msra.mxu0 0.0
        %3947 = vmatprep.subr.mxu0 0.0
        %3948 = vmatpush1.msra.mxu0 0.0
        %3949 = vmatprep.subr.mxu0 0.0
        %3950 = vmatpush1.msra.mxu0 0.0
        %3951 = vmatprep.subr.mxu0 0.0
        %3952 = vmatpush1.msra.mxu0 0.0
        %3953 = vmatprep.subr.mxu0 0.0
        %3954 = vmatpush1.msra.mxu0 0.0
        %3955 = vmatprep.subr.mxu0 0.0
        %3956 = vmatpush1.msra.mxu0 0.0
        %3957 = vmatprep.subr.mxu0 0.0
        %3958 = vmatpush1.msra.mxu0 0.0
        %3959 = vmatprep.subr.mxu0 0.0
        %3960 = vmatpush1.msra.mxu0 0.0
        %3961 = vmatprep.subr.mxu0 0.0
        %3962 = vmatpush1.msra.mxu0 0.0
        %3963 = vmatprep.subr.mxu0 0.0
        %3964 = vmatpush1.msra.mxu0 0.0
        %3965 = vmatprep.subr.mxu0 0.0
        %3966 = vmatpush1.msra.mxu0 0.0
        %3967 = vmatprep.subr.mxu0 0.0
        %3968 = vmatpush1.msra.mxu0 0.0
        %3969 = vmatprep.subr.mxu0 0.0
        %3970 = vmatpush1.msra.mxu0 0.0
        %3971 = vmatprep.subr.mxu0 0.0
        %3972 = vmatpush1.msra.mxu0 0.0
        %3973 = vmatprep.subr.mxu0 0.0
        %3974 = vmatpush1.msra.mxu0 0.0
        %3975 = vmatprep.subr.mxu0 0.0
        %3976 = vmatpush1.msra.mxu0 0.0
        %3977 = vmatprep.subr.mxu0 0.0
        %3978 = vmatpush1.msra.mxu0 0.0
        %3979 = vmatprep.subr.mxu0 0.0
        %3980 = vmatpush1.msra.mxu0 0.0
        %3981 = vmatprep.subr.mxu0 0.0
        %3982 = vmatpush1.msra.mxu0 0.0
        %3983 = vmatprep.subr.mxu0 0.0
        %3984 = vmatpush1.msra.mxu0 0.0
        %3985 = vmatprep.subr.mxu0 0.0
        %3986 = vmatpush1.msra.mxu0 0.0
        %3987 = vmatprep.subr.mxu0 0.0
        %3988 = vmatpush1.msra.mxu0 0.0
        %3989 = vmatprep.subr.mxu0 0.0
        %3990 = vmatpush1.msra.mxu0 0.0
        %3991 = vmatprep.subr.mxu0 0.0
        %3992 = vmatpush1.msra.mxu0 0.0
        %3993 = vmatprep.mubr.f32.mxu0 0.0
        %3994 = vmatmul.mubr.f32.gmra.mrb[0].mxu0 %v356
        %v3995 = vpop.f32.mrb[0].mxu0
        %v3996 = vadd.f32 0.0, %v3995
        %v3997 = vpop.f32.mrb[0].mxu0
        %3998 = vdwg.mxu0
        %v3999 = vadd.f32 %v3922, %v3996
        %s4000 = scalar_lea.vmem %s149, 84 [#allocation2]
        %v4001 = vld [vmem:[%s4000] sm:$0xf]
        %v4003 = vsel %vm203, %v4001, 0
        %4005 = vmatprep.subr.mxu0 0.0
        %4006 = vmatpush1.msra.mxu0 %v4003
        %4007 = vmatprep.subr.mxu0 0.0
        %4008 = vmatpush1.msra.mxu0 0.0
        %4009 = vmatprep.subr.mxu0 0.0
        %4010 = vmatpush1.msra.mxu0 0.0
        %4011 = vmatprep.subr.mxu0 0.0
        %4012 = vmatpush1.msra.mxu0 0.0
        %4013 = vmatprep.subr.mxu0 0.0
        %4014 = vmatpush1.msra.mxu0 0.0
        %4015 = vmatprep.subr.mxu0 0.0
        %4016 = vmatpush1.msra.mxu0 0.0
        %4017 = vmatprep.subr.mxu0 0.0
        %4018 = vmatpush1.msra.mxu0 0.0
        %4019 = vmatprep.subr.mxu0 0.0
        %4020 = vmatpush1.msra.mxu0 0.0
        %4021 = vmatprep.subr.mxu0 0.0
        %4022 = vmatpush1.msra.mxu0 0.0
        %4023 = vmatprep.subr.mxu0 0.0
        %4024 = vmatpush1.msra.mxu0 0.0
        %4025 = vmatprep.subr.mxu0 0.0
        %4026 = vmatpush1.msra.mxu0 0.0
        %4027 = vmatprep.subr.mxu0 0.0
        %4028 = vmatpush1.msra.mxu0 0.0
        %4029 = vmatprep.subr.mxu0 0.0
        %4030 = vmatpush1.msra.mxu0 0.0
        %4031 = vmatprep.subr.mxu0 0.0
        %4032 = vmatpush1.msra.mxu0 0.0
        %4033 = vmatprep.subr.mxu0 0.0
        %4034 = vmatpush1.msra.mxu0 0.0
        %4035 = vmatprep.subr.mxu0 0.0
        %4036 = vmatpush1.msra.mxu0 0.0
        %4037 = vmatprep.subr.mxu0 0.0
        %4038 = vmatpush1.msra.mxu0 0.0
        %4039 = vmatprep.subr.mxu0 0.0
        %4040 = vmatpush1.msra.mxu0 0.0
        %4041 = vmatprep.subr.mxu0 0.0
        %4042 = vmatpush1.msra.mxu0 0.0
        %4043 = vmatprep.subr.mxu0 0.0
        %4044 = vmatpush1.msra.mxu0 0.0
        %4045 = vmatprep.subr.mxu0 0.0
        %4046 = vmatpush1.msra.mxu0 0.0
        %4047 = vmatprep.subr.mxu0 0.0
        %4048 = vmatpush1.msra.mxu0 0.0
        %4049 = vmatprep.subr.mxu0 0.0
        %4050 = vmatpush1.msra.mxu0 0.0
        %4051 = vmatprep.subr.mxu0 0.0
        %4052 = vmatpush1.msra.mxu0 0.0
        %4053 = vmatprep.subr.mxu0 0.0
        %4054 = vmatpush1.msra.mxu0 0.0
        %4055 = vmatprep.subr.mxu0 0.0
        %4056 = vmatpush1.msra.mxu0 0.0
        %4057 = vmatprep.subr.mxu0 0.0
        %4058 = vmatpush1.msra.mxu0 0.0
        %4059 = vmatprep.subr.mxu0 0.0
        %4060 = vmatpush1.msra.mxu0 0.0
        %4061 = vmatprep.subr.mxu0 0.0
        %4062 = vmatpush1.msra.mxu0 0.0
        %4063 = vmatprep.subr.mxu0 0.0
        %4064 = vmatpush1.msra.mxu0 0.0
        %4065 = vmatprep.subr.mxu0 0.0
        %4066 = vmatpush1.msra.mxu0 0.0
        %4067 = vmatprep.subr.mxu0 0.0
        %4068 = vmatpush1.msra.mxu0 0.0
        %4069 = vmatprep.mubr.f32.mxu0 0.0
        %4070 = vmatmul.mubr.f32.gmra.mrb[0].mxu0 %v434
        %v4071 = vpop.f32.mrb[0].mxu0
        %v4072 = vadd.f32 0.0, %v4071
        %v4073 = vpop.f32.mrb[0].mxu0
        %4074 = vdwg.mxu0
        %v4075 = vadd.f32 %v3999, %v4072
        %s4076 = scalar_lea.vmem %s149, 116 [#allocation2]
        %v4077 = vld [vmem:[%s4076] sm:$0xf]
        %v4079 = vsel %vm203, %v4077, 0
        %4081 = vmatprep.subr.mxu0 0.0
        %4082 = vmatpush1.msra.mxu0 %v4079
        %4083 = vmatprep.subr.mxu0 0.0
        %4084 = vmatpush1.msra.mxu0 0.0
        %4085 = vmatprep.subr.mxu0 0.0
        %4086 = vmatpush1.msra.mxu0 0.0
        %4087 = vmatprep.subr.mxu0 0.0
        %4088 = vmatpush1.msra.mxu0 0.0
        %4089 = vmatprep.subr.mxu0 0.0
        %4090 = vmatpush1.msra.mxu0 0.0
        %4091 = vmatprep.subr.mxu0 0.0
        %4092 = vmatpush1.msra.mxu0 0.0
        %4093 = vmatprep.subr.mxu0 0.0
        %4094 = vmatpush1.msra.mxu0 0.0
        %4095 = vmatprep.subr.mxu0 0.0
        %4096 = vmatpush1.msra.mxu0 0.0
        %4097 = vmatprep.subr.mxu0 0.0
        %4098 = vmatpush1.msra.mxu0 0.0
        %4099 = vmatprep.subr.mxu0 0.0
        %4100 = vmatpush1.msra.mxu0 0.0
        %4101 = vmatprep.subr.mxu0 0.0
        %4102 = vmatpush1.msra.mxu0 0.0
        %4103 = vmatprep.subr.mxu0 0.0
        %4104 = vmatpush1.msra.mxu0 0.0
        %4105 = vmatprep.subr.mxu0 0.0
        %4106 = vmatpush1.msra.mxu0 0.0
        %4107 = vmatprep.subr.mxu0 0.0
        %4108 = vmatpush1.msra.mxu0 0.0
        %4109 = vmatprep.subr.mxu0 0.0
        %4110 = vmatpush1.msra.mxu0 0.0
        %4111 = vmatprep.subr.mxu0 0.0
        %4112 = vmatpush1.msra.mxu0 0.0
        %4113 = vmatprep.subr.mxu0 0.0
        %4114 = vmatpush1.msra.mxu0 0.0
        %4115 = vmatprep.subr.mxu0 0.0
        %4116 = vmatpush1.msra.mxu0 0.0
        %4117 = vmatprep.subr.mxu0 0.0
        %4118 = vmatpush1.msra.mxu0 0.0
        %4119 = vmatprep.subr.mxu0 0.0
        %4120 = vmatpush1.msra.mxu0 0.0
        %4121 = vmatprep.subr.mxu0 0.0
        %4122 = vmatpush1.msra.mxu0 0.0
        %4123 = vmatprep.subr.mxu0 0.0
        %4124 = vmatpush1.msra.mxu0 0.0
        %4125 = vmatprep.subr.mxu0 0.0
        %4126 = vmatpush1.msra.mxu0 0.0
        %4127 = vmatprep.subr.mxu0 0.0
        %4128 = vmatpush1.msra.mxu0 0.0
        %4129 = vmatprep.subr.mxu0 0.0
        %4130 = vmatpush1.msra.mxu0 0.0
        %4131 = vmatprep.subr.mxu0 0.0
        %4132 = vmatpush1.msra.mxu0 0.0
        %4133 = vmatprep.subr.mxu0 0.0
        %4134 = vmatpush1.msra.mxu0 0.0
        %4135 = vmatprep.subr.mxu0 0.0
        %4136 = vmatpush1.msra.mxu0 0.0
        %4137 = vmatprep.subr.mxu0 0.0
        %4138 = vmatpush1.msra.mxu0 0.0
        %4139 = vmatprep.subr.mxu0 0.0
        %4140 = vmatpush1.msra.mxu0 0.0
        %4141 = vmatprep.subr.mxu0 0.0
        %4142 = vmatpush1.msra.mxu0 0.0
        %4143 = vmatprep.subr.mxu0 0.0
        %4144 = vmatpush1.msra.mxu0 0.0
        %4145 = vmatprep.mubr.f32.mxu0 0.0
        %4146 = vmatmul.mubr.f32.gmra.mrb[0].mxu0 %v513
        %v4147 = vpop.f32.mrb[0].mxu0
        %v4148 = vadd.f32 0.0, %v4147
        %v4149 = vpop.f32.mrb[0].mxu0
        %4150 = vdwg.mxu0
        %v4151 = vadd.f32 %v4075, %v4148
        %4152 = vrot.lane.b32.xlu0 %v4001, 127
        %v4153 = vpop.permute.xlu0 %4152
        %v4154 = vsel %vm203, %v4153, 0
        %4156 = vmatprep.subr.mxu0 0.0
        %4157 = vmatpush1.msra.mxu0 %v4154
        %4158 = vmatprep.subr.mxu0 0.0
        %4159 = vmatpush1.msra.mxu0 0.0
        %4160 = vmatprep.subr.mxu0 0.0
        %4161 = vmatpush1.msra.mxu0 0.0
        %4162 = vmatprep.subr.mxu0 0.0
        %4163 = vmatpush1.msra.mxu0 0.0
        %4164 = vmatprep.subr.mxu0 0.0
        %4165 = vmatpush1.msra.mxu0 0.0
        %4166 = vmatprep.subr.mxu0 0.0
        %4167 = vmatpush1.msra.mxu0 0.0
        %4168 = vmatprep.subr.mxu0 0.0
        %4169 = vmatpush1.msra.mxu0 0.0
        %4170 = vmatprep.subr.mxu0 0.0
        %4171 = vmatpush1.msra.mxu0 0.0
        %4172 = vmatprep.subr.mxu0 0.0
        %4173 = vmatpush1.msra.mxu0 0.0
        %4174 = vmatprep.subr.mxu0 0.0
        %4175 = vmatpush1.msra.mxu0 0.0
        %4176 = vmatprep.subr.mxu0 0.0
        %4177 = vmatpush1.msra.mxu0 0.0
        %4178 = vmatprep.subr.mxu0 0.0
        %4179 = vmatpush1.msra.mxu0 0.0
        %4180 = vmatprep.subr.mxu0 0.0
        %4181 = vmatpush1.msra.mxu0 0.0
        %4182 = vmatprep.subr.mxu0 0.0
        %4183 = vmatpush1.msra.mxu0 0.0
        %4184 = vmatprep.subr.mxu0 0.0
        %4185 = vmatpush1.msra.mxu0 0.0
        %4186 = vmatprep.subr.mxu0 0.0
        %4187 = vmatpush1.msra.mxu0 0.0
        %4188 = vmatprep.subr.mxu0 0.0
        %4189 = vmatpush1.msra.mxu0 0.0
        %4190 = vmatprep.subr.mxu0 0.0
        %4191 = vmatpush1.msra.mxu0 0.0
        %4192 = vmatprep.subr.mxu0 0.0
        %4193 = vmatpush1.msra.mxu0 0.0
        %4194 = vmatprep.subr.mxu0 0.0
        %4195 = vmatpush1.msra.mxu0 0.0
        %4196 = vmatprep.subr.mxu0 0.0
        %4197 = vmatpush1.msra.mxu0 0.0
        %4198 = vmatprep.subr.mxu0 0.0
        %4199 = vmatpush1.msra.mxu0 0.0
        %4200 = vmatprep.subr.mxu0 0.0
        %4201 = vmatpush1.msra.mxu0 0.0
        %4202 = vmatprep.subr.mxu0 0.0
        %4203 = vmatpush1.msra.mxu0 0.0
        %4204 = vmatprep.subr.mxu0 0.0
        %4205 = vmatpush1.msra.mxu0 0.0
        %4206 = vmatprep.subr.mxu0 0.0
        %4207 = vmatpush1.msra.mxu0 0.0
        %4208 = vmatprep.subr.mxu0 0.0
        %4209 = vmatpush1.msra.mxu0 0.0
        %4210 = vmatprep.subr.mxu0 0.0
        %4211 = vmatpush1.msra.mxu0 0.0
        %4212 = vmatprep.subr.mxu0 0.0
        %4213 = vmatpush1.msra.mxu0 0.0
        %4214 = vmatprep.subr.mxu0 0.0
        %4215 = vmatpush1.msra.mxu0 0.0
        %4216 = vmatprep.subr.mxu0 0.0
        %4217 = vmatpush1.msra.mxu0 0.0
        %4218 = vmatprep.subr.mxu0 0.0
        %4219 = vmatpush1.msra.mxu0 0.0
        %4220 = vmatprep.mubr.f32.mxu0 0.0
        %4221 = vmatmul.mubr.f32.gmra.mrb[0].mxu0 %v592
        %v4222 = vpop.f32.mrb[0].mxu0
        %v4223 = vadd.f32 0.0, %v4222
        %v4224 = vpop.f32.mrb[0].mxu0
        %4225 = vdwg.mxu0
        %v4226 = vadd.f32 %v4151, %v4223
        %s4227 = scalar_lea.vmem %s149, 24 [#allocation2]
        %v4228 = vld [vmem:[%s4227] sm:$0xf]
        %v4230 = vsel %vm203, %v4228, 0
        %4232 = vmatprep.subr.mxu0 0.0
        %4233 = vmatpush1.msra.mxu0 %v4230
        %4234 = vmatprep.subr.mxu0 0.0
        %4235 = vmatpush1.msra.mxu0 0.0
        %4236 = vmatprep.subr.mxu0 0.0
        %4237 = vmatpush1.msra.mxu0 0.0
        %4238 = vmatprep.subr.mxu0 0.0
        %4239 = vmatpush1.msra.mxu0 0.0
        %4240 = vmatprep.subr.mxu0 0.0
        %4241 = vmatpush1.msra.mxu0 0.0
        %4242 = vmatprep.subr.mxu0 0.0
        %4243 = vmatpush1.msra.mxu0 0.0
        %4244 = vmatprep.subr.mxu0 0.0
        %4245 = vmatpush1.msra.mxu0 0.0
        %4246 = vmatprep.subr.mxu0 0.0
        %4247 = vmatpush1.msra.mxu0 0.0
        %4248 = vmatprep.subr.mxu0 0.0
        %4249 = vmatpush1.msra.mxu0 0.0
        %4250 = vmatprep.subr.mxu0 0.0
        %4251 = vmatpush1.msra.mxu0 0.0
        %4252 = vmatprep.subr.mxu0 0.0
        %4253 = vmatpush1.msra.mxu0 0.0
        %4254 = vmatprep.subr.mxu0 0.0
        %4255 = vmatpush1.msra.mxu0 0.0
        %4256 = vmatprep.subr.mxu0 0.0
        %4257 = vmatpush1.msra.mxu0 0.0
        %4258 = vmatprep.subr.mxu0 0.0
        %4259 = vmatpush1.msra.mxu0 0.0
        %4260 = vmatprep.subr.mxu0 0.0
        %4261 = vmatpush1.msra.mxu0 0.0
        %4262 = vmatprep.subr.mxu0 0.0
        %4263 = vmatpush1.msra.mxu0 0.0
        %4264 = vmatprep.subr.mxu0 0.0
        %4265 = vmatpush1.msra.mxu0 0.0
        %4266 = vmatprep.subr.mxu0 0.0
        %4267 = vmatpush1.msra.mxu0 0.0
        %4268 = vmatprep.subr.mxu0 0.0
        %4269 = vmatpush1.msra.mxu0 0.0
        %4270 = vmatprep.subr.mxu0 0.0
        %4271 = vmatpush1.msra.mxu0 0.0
        %4272 = vmatprep.subr.mxu0 0.0
        %4273 = vmatpush1.msra.mxu0 0.0
        %4274 = vmatprep.subr.mxu0 0.0
        %4275 = vmatpush1.msra.mxu0 0.0
        %4276 = vmatprep.subr.mxu0 0.0
        %4277 = vmatpush1.msra.mxu0 0.0
        %4278 = vmatprep.subr.mxu0 0.0
        %4279 = vmatpush1.msra.mxu0 0.0
        %4280 = vmatprep.subr.mxu0 0.0
        %4281 = vmatpush1.msra.mxu0 0.0
        %4282 = vmatprep.subr.mxu0 0.0
        %4283 = vmatpush1.msra.mxu0 0.0
        %4284 = vmatprep.subr.mxu0 0.0
        %4285 = vmatpush1.msra.mxu0 0.0
        %4286 = vmatprep.subr.mxu0 0.0
        %4287 = vmatpush1.msra.mxu0 0.0
        %4288 = vmatprep.subr.mxu0 0.0
        %4289 = vmatpush1.msra.mxu0 0.0
        %4290 = vmatprep.subr.mxu0 0.0
        %4291 = vmatpush1.msra.mxu0 0.0
        %4292 = vmatprep.subr.mxu0 0.0
        %4293 = vmatpush1.msra.mxu0 0.0
        %4294 = vmatprep.subr.mxu0 0.0
        %4295 = vmatpush1.msra.mxu0 0.0
        %4296 = vmatprep.mubr.f32.mxu0 0.0
        %4297 = vmatmul.mubr.f32.gmra.mrb[0].mxu0 %v670
        %v4298 = vpop.f32.mrb[0].mxu0
        %v4299 = vadd.f32 0.0, %v4298
        %v4300 = vpop.f32.mrb[0].mxu0
        %4301 = vdwg.mxu0
        %v4302 = vadd.f32 %v4226, %v4299
        %s4303 = scalar_lea.vmem %s149, 56 [#allocation2]
        %v4304 = vld [vmem:[%s4303] sm:$0xf]
        %v4306 = vsel %vm203, %v4304, 0
        %4308 = vmatprep.subr.mxu0 0.0
        %4309 = vmatpush1.msra.mxu0 %v4306
        %4310 = vmatprep.subr.mxu0 0.0
        %4311 = vmatpush1.msra.mxu0 0.0
        %4312 = vmatprep.subr.mxu0 0.0
        %4313 = vmatpush1.msra.mxu0 0.0
        %4314 = vmatprep.subr.mxu0 0.0
        %4315 = vmatpush1.msra.mxu0 0.0
        %4316 = vmatprep.subr.mxu0 0.0
        %4317 = vmatpush1.msra.mxu0 0.0
        %4318 = vmatprep.subr.mxu0 0.0
        %4319 = vmatpush1.msra.mxu0 0.0
        %4320 = vmatprep.subr.mxu0 0.0
        %4321 = vmatpush1.msra.mxu0 0.0
        %4322 = vmatprep.subr.mxu0 0.0
        %4323 = vmatpush1.msra.mxu0 0.0
        %4324 = vmatprep.subr.mxu0 0.0
        %4325 = vmatpush1.msra.mxu0 0.0
        %4326 = vmatprep.subr.mxu0 0.0
        %4327 = vmatpush1.msra.mxu0 0.0
        %4328 = vmatprep.subr.mxu0 0.0
        %4329 = vmatpush1.msra.mxu0 0.0
        %4330 = vmatprep.subr.mxu0 0.0
        %4331 = vmatpush1.msra.mxu0 0.0
        %4332 = vmatprep.subr.mxu0 0.0
        %4333 = vmatpush1.msra.mxu0 0.0
        %4334 = vmatprep.subr.mxu0 0.0
        %4335 = vmatpush1.msra.mxu0 0.0
        %4336 = vmatprep.subr.mxu0 0.0
        %4337 = vmatpush1.msra.mxu0 0.0
        %4338 = vmatprep.subr.mxu0 0.0
        %4339 = vmatpush1.msra.mxu0 0.0
        %4340 = vmatprep.subr.mxu0 0.0
        %4341 = vmatpush1.msra.mxu0 0.0
        %4342 = vmatprep.subr.mxu0 0.0
        %4343 = vmatpush1.msra.mxu0 0.0
        %4344 = vmatprep.subr.mxu0 0.0
        %4345 = vmatpush1.msra.mxu0 0.0
        %4346 = vmatprep.subr.mxu0 0.0
        %4347 = vmatpush1.msra.mxu0 0.0
        %4348 = vmatprep.subr.mxu0 0.0
        %4349 = vmatpush1.msra.mxu0 0.0
        %4350 = vmatprep.subr.mxu0 0.0
        %4351 = vmatpush1.msra.mxu0 0.0
        %4352 = vmatprep.subr.mxu0 0.0
        %4353 = vmatpush1.msra.mxu0 0.0
        %4354 = vmatprep.subr.mxu0 0.0
        %4355 = vmatpush1.msra.mxu0 0.0
        %4356 = vmatprep.subr.mxu0 0.0
        %4357 = vmatpush1.msra.mxu0 0.0
        %4358 = vmatprep.subr.mxu0 0.0
        %4359 = vmatpush1.msra.mxu0 0.0
        %4360 = vmatprep.subr.mxu0 0.0
        %4361 = vmatpush1.msra.mxu0 0.0
        %4362 = vmatprep.subr.mxu0 0.0
        %4363 = vmatpush1.msra.mxu0 0.0
        %4364 = vmatprep.subr.mxu0 0.0
        %4365 = vmatpush1.msra.mxu0 0.0
        %4366 = vmatprep.subr.mxu0 0.0
        %4367 = vmatpush1.msra.mxu0 0.0
        %4368 = vmatprep.subr.mxu0 0.0
        %4369 = vmatpush1.msra.mxu0 0.0
        %4370 = vmatprep.subr.mxu0 0.0
        %4371 = vmatpush1.msra.mxu0 0.0
        %4372 = vmatprep.mubr.f32.mxu0 0.0
        %4373 = vmatmul.mubr.f32.gmra.mrb[0].mxu0 %v749
        %v4374 = vpop.f32.mrb[0].mxu0
        %v4375 = vadd.f32 0.0, %v4374
        %v4376 = vpop.f32.mrb[0].mxu0
        %4377 = vdwg.mxu0
        %v4378 = vadd.f32 %v4302, %v4375
        %4379 = vrot.lane.b32.xlu0 %v4228, 127
        %v4380 = vpop.permute.xlu0 %4379
        %v4381 = vsel %vm203, %v4380, 0
        %4383 = vmatprep.subr.mxu0 0.0
        %4384 = vmatpush1.msra.mxu0 %v4381
        %4385 = vmatprep.subr.mxu0 0.0
        %4386 = vmatpush1.msra.mxu0 0.0
        %4387 = vmatprep.subr.mxu0 0.0
        %4388 = vmatpush1.msra.mxu0 0.0
        %4389 = vmatprep.subr.mxu0 0.0
        %4390 = vmatpush1.msra.mxu0 0.0
        %4391 = vmatprep.subr.mxu0 0.0
        %4392 = vmatpush1.msra.mxu0 0.0
        %4393 = vmatprep.subr.mxu0 0.0
        %4394 = vmatpush1.msra.mxu0 0.0
        %4395 = vmatprep.subr.mxu0 0.0
        %4396 = vmatpush1.msra.mxu0 0.0
        %4397 = vmatprep.subr.mxu0 0.0
        %4398 = vmatpush1.msra.mxu0 0.0
        %4399 = vmatprep.subr.mxu0 0.0
        %4400 = vmatpush1.msra.mxu0 0.0
        %4401 = vmatprep.subr.mxu0 0.0
        %4402 = vmatpush1.msra.mxu0 0.0
        %4403 = vmatprep.subr.mxu0 0.0
        %4404 = vmatpush1.msra.mxu0 0.0
        %4405 = vmatprep.subr.mxu0 0.0
        %4406 = vmatpush1.msra.mxu0 0.0
        %4407 = vmatprep.subr.mxu0 0.0
        %4408 = vmatpush1.msra.mxu0 0.0
        %4409 = vmatprep.subr.mxu0 0.0
        %4410 = vmatpush1.msra.mxu0 0.0
        %4411 = vmatprep.subr.mxu0 0.0
        %4412 = vmatpush1.msra.mxu0 0.0
        %4413 = vmatprep.subr.mxu0 0.0
        %4414 = vmatpush1.msra.mxu0 0.0
        %4415 = vmatprep.subr.mxu0 0.0
        %4416 = vmatpush1.msra.mxu0 0.0
        %4417 = vmatprep.subr.mxu0 0.0
        %4418 = vmatpush1.msra.mxu0 0.0
        %4419 = vmatprep.subr.mxu0 0.0
        %4420 = vmatpush1.msra.mxu0 0.0
        %4421 = vmatprep.subr.mxu0 0.0
        %4422 = vmatpush1.msra.mxu0 0.0
        %4423 = vmatprep.subr.mxu0 0.0
        %4424 = vmatpush1.msra.mxu0 0.0
        %4425 = vmatprep.subr.mxu0 0.0
        %4426 = vmatpush1.msra.mxu0 0.0
        %4427 = vmatprep.subr.mxu0 0.0
        %4428 = vmatpush1.msra.mxu0 0.0
        %4429 = vmatprep.subr.mxu0 0.0
        %4430 = vmatpush1.msra.mxu0 0.0
        %4431 = vmatprep.subr.mxu0 0.0
        %4432 = vmatpush1.msra.mxu0 0.0
        %4433 = vmatprep.subr.mxu0 0.0
        %4434 = vmatpush1.msra.mxu0 0.0
        %4435 = vmatprep.subr.mxu0 0.0
        %4436 = vmatpush1.msra.mxu0 0.0
        %4437 = vmatprep.subr.mxu0 0.0
        %4438 = vmatpush1.msra.mxu0 0.0
        %4439 = vmatprep.subr.mxu0 0.0
        %4440 = vmatpush1.msra.mxu0 0.0
        %4441 = vmatprep.subr.mxu0 0.0
        %4442 = vmatpush1.msra.mxu0 0.0
        %4443 = vmatprep.subr.mxu0 0.0
        %4444 = vmatpush1.msra.mxu0 0.0
        %4445 = vmatprep.subr.mxu0 0.0
        %4446 = vmatpush1.msra.mxu0 0.0
        %4447 = vmatprep.mubr.f32.mxu0 0.0
        %4448 = vmatmul.mubr.f32.gmra.mrb[0].mxu0 %v828
        %v4449 = vpop.f32.mrb[0].mxu0
        %v4450 = vadd.f32 0.0, %v4449
        %v4451 = vpop.f32.mrb[0].mxu0
        %4452 = vdwg.mxu0
        %v4453 = vadd.f32 %v4378, %v4450
        %v4456 = vunpack.c.l.s4 1966171168
        %v4457 = vunpack.c.0.s8 %v4456
        %v4458 = vlaneseq
        %v4459 = vshrl.u32 %v4458, 7
        %v4460 = vsub.s32 %v4457, %v4459
        %v4461 = vrot.slane %v4453, %v4460
        %v4462 = vcombine.high %v4461, %v4461
        %v4464 = vunpack.c.l.s4 1966171168
        %v4465 = vunpack.c.0.s8 %v4464
        %v4466 = vlaneseq
        %v4467 = vshrl.u32 %v4466, 7
        %v4468 = vsub.s32 %v4465, %v4467
        %v4469 = vrot.slane %v4461, %v4468
        %v4471 = vunpack.c.l.s4 1966171168
        %v4472 = vunpack.c.0.s8 %v4471
        %v4473 = vlaneseq
        %v4474 = vshrl.u32 %v4473, 7
        %v4475 = vsub.s32 %v4472, %v4474
        %v4476 = vrot.slane %v4462, %v4475
        %v4477 = vcombine.high %v4469, %v4469
        %v4478 = vcombine.high %v4476, %v4476
        %4483 = vst.msk [vmem:[%s178 + $0x5] sm:$0x1] %vm932, %v4469
        %4484 = vst.msk [vmem:[%s178 + $0xd] sm:$0x1] %vm932, %v4476
        %4485 = vst.msk [vmem:[%s178 + $0x15] sm:$0x1] %vm932, %v4477
        %4486 = vst.msk [vmem:[%s178 + $0x1d] sm:$0x1] %vm932, %v4478
        %v4487 = vld [vmem:[%s4227] sm:$0xf]
        %v4488 = vld [vmem:[%s4303] sm:$0xf]
        %v4490 = vsel %vm203, %v4488, 0
        %4492 = vmatprep.subr.mxu0 0.0
        %4493 = vmatpush1.msra.mxu0 %v4490
        %4494 = vmatprep.subr.mxu0 0.0
        %4495 = vmatpush1.msra.mxu0 0.0
        %4496 = vmatprep.subr.mxu0 0.0
        %4497 = vmatpush1.msra.mxu0 0.0
        %4498 = vmatprep.subr.mxu0 0.0
        %4499 = vmatpush1.msra.mxu0 0.0
        %4500 = vmatprep.subr.mxu0 0.0
        %4501 = vmatpush1.msra.mxu0 0.0
        %4502 = vmatprep.subr.mxu0 0.0
        %4503 = vmatpush1.msra.mxu0 0.0
        %4504 = vmatprep.subr.mxu0 0.0
        %4505 = vmatpush1.msra.mxu0 0.0
        %4506 = vmatprep.subr.mxu0 0.0
        %4507 = vmatpush1.msra.mxu0 0.0
        %4508 = vmatprep.subr.mxu0 0.0
        %4509 = vmatpush1.msra.mxu0 0.0
        %4510 = vmatprep.subr.mxu0 0.0
        %4511 = vmatpush1.msra.mxu0 0.0
        %4512 = vmatprep.subr.mxu0 0.0
        %4513 = vmatpush1.msra.mxu0 0.0
        %4514 = vmatprep.subr.mxu0 0.0
        %4515 = vmatpush1.msra.mxu0 0.0
        %4516 = vmatprep.subr.mxu0 0.0
        %4517 = vmatpush1.msra.mxu0 0.0
        %4518 = vmatprep.subr.mxu0 0.0
        %4519 = vmatpush1.msra.mxu0 0.0
        %4520 = vmatprep.subr.mxu0 0.0
        %4521 = vmatpush1.msra.mxu0 0.0
        %4522 = vmatprep.subr.mxu0 0.0
        %4523 = vmatpush1.msra.mxu0 0.0
        %4524 = vmatprep.subr.mxu0 0.0
        %4525 = vmatpush1.msra.mxu0 0.0
        %4526 = vmatprep.subr.mxu0 0.0
        %4527 = vmatpush1.msra.mxu0 0.0
        %4528 = vmatprep.subr.mxu0 0.0
        %4529 = vmatpush1.msra.mxu0 0.0
        %4530 = vmatprep.subr.mxu0 0.0
        %4531 = vmatpush1.msra.mxu0 0.0
        %4532 = vmatprep.subr.mxu0 0.0
        %4533 = vmatpush1.msra.mxu0 0.0
        %4534 = vmatprep.subr.mxu0 0.0
        %4535 = vmatpush1.msra.mxu0 0.0
        %4536 = vmatprep.subr.mxu0 0.0
        %4537 = vmatpush1.msra.mxu0 0.0
        %4538 = vmatprep.subr.mxu0 0.0
        %4539 = vmatpush1.msra.mxu0 0.0
        %4540 = vmatprep.subr.mxu0 0.0
        %4541 = vmatpush1.msra.mxu0 0.0
        %4542 = vmatprep.subr.mxu0 0.0
        %4543 = vmatpush1.msra.mxu0 0.0
        %4544 = vmatprep.subr.mxu0 0.0
        %4545 = vmatpush1.msra.mxu0 0.0
        %4546 = vmatprep.subr.mxu0 0.0
        %4547 = vmatpush1.msra.mxu0 0.0
        %4548 = vmatprep.subr.mxu0 0.0
        %4549 = vmatpush1.msra.mxu0 0.0
        %4550 = vmatprep.subr.mxu0 0.0
        %4551 = vmatpush1.msra.mxu0 0.0
        %4552 = vmatprep.subr.mxu0 0.0
        %4553 = vmatpush1.msra.mxu0 0.0
        %4554 = vmatprep.subr.mxu0 0.0
        %4555 = vmatpush1.msra.mxu0 0.0
        %4556 = vmatprep.mubr.f32.mxu0 0.0
        %4557 = vmatmul.mubr.f32.gmra.mrb[0].mxu0 %v201
        %v4558 = vpop.f32.mrb[0].mxu0
        %v4559 = vadd.f32 0.0, %v4558
        %v4560 = vpop.f32.mrb[0].mxu0
        %4561 = vdwg.mxu0
        %v4563 = vsel %vm203, %v4487, 0
        %4565 = vmatprep.subr.mxu0 0.0
        %4566 = vmatpush1.msra.mxu0 %v4563
        %4567 = vmatprep.subr.mxu0 0.0
        %4568 = vmatpush1.msra.mxu0 0.0
        %4569 = vmatprep.subr.mxu0 0.0
        %4570 = vmatpush1.msra.mxu0 0.0
        %4571 = vmatprep.subr.mxu0 0.0
        %4572 = vmatpush1.msra.mxu0 0.0
        %4573 = vmatprep.subr.mxu0 0.0
        %4574 = vmatpush1.msra.mxu0 0.0
        %4575 = vmatprep.subr.mxu0 0.0
        %4576 = vmatpush1.msra.mxu0 0.0
        %4577 = vmatprep.subr.mxu0 0.0
        %4578 = vmatpush1.msra.mxu0 0.0
        %4579 = vmatprep.subr.mxu0 0.0
        %4580 = vmatpush1.msra.mxu0 0.0
        %4581 = vmatprep.subr.mxu0 0.0
        %4582 = vmatpush1.msra.mxu0 0.0
        %4583 = vmatprep.subr.mxu0 0.0
        %4584 = vmatpush1.msra.mxu0 0.0
        %4585 = vmatprep.subr.mxu0 0.0
        %4586 = vmatpush1.msra.mxu0 0.0
        %4587 = vmatprep.subr.mxu0 0.0
        %4588 = vmatpush1.msra.mxu0 0.0
        %4589 = vmatprep.subr.mxu0 0.0
        %4590 = vmatpush1.msra.mxu0 0.0
        %4591 = vmatprep.subr.mxu0 0.0
        %4592 = vmatpush1.msra.mxu0 0.0
        %4593 = vmatprep.subr.mxu0 0.0
        %4594 = vmatpush1.msra.mxu0 0.0
        %4595 = vmatprep.subr.mxu0 0.0
        %4596 = vmatpush1.msra.mxu0 0.0
        %4597 = vmatprep.subr.mxu0 0.0
        %4598 = vmatpush1.msra.mxu0 0.0
        %4599 = vmatprep.subr.mxu0 0.0
        %4600 = vmatpush1.msra.mxu0 0.0
        %4601 = vmatprep.subr.mxu0 0.0
        %4602 = vmatpush1.msra.mxu0 0.0
        %4603 = vmatprep.subr.mxu0 0.0
        %4604 = vmatpush1.msra.mxu0 0.0
        %4605 = vmatprep.subr.mxu0 0.0
        %4606 = vmatpush1.msra.mxu0 0.0
        %4607 = vmatprep.subr.mxu0 0.0
        %4608 = vmatpush1.msra.mxu0 0.0
        %4609 = vmatprep.subr.mxu0 0.0
        %4610 = vmatpush1.msra.mxu0 0.0
        %4611 = vmatprep.subr.mxu0 0.0
        %4612 = vmatpush1.msra.mxu0 0.0
        %4613 = vmatprep.subr.mxu0 0.0
        %4614 = vmatpush1.msra.mxu0 0.0
        %4615 = vmatprep.subr.mxu0 0.0
        %4616 = vmatpush1.msra.mxu0 0.0
        %4617 = vmatprep.subr.mxu0 0.0
        %4618 = vmatpush1.msra.mxu0 0.0
        %4619 = vmatprep.subr.mxu0 0.0
        %4620 = vmatpush1.msra.mxu0 0.0
        %4621 = vmatprep.subr.mxu0 0.0
        %4622 = vmatpush1.msra.mxu0 0.0
        %4623 = vmatprep.subr.mxu0 0.0
        %4624 = vmatpush1.msra.mxu0 0.0
        %4625 = vmatprep.subr.mxu0 0.0
        %4626 = vmatpush1.msra.mxu0 0.0
        %4627 = vmatprep.subr.mxu0 0.0
        %4628 = vmatpush1.msra.mxu0 0.0
        %4629 = vmatprep.mubr.f32.mxu0 0.0
        %4630 = vmatmul.mubr.f32.gmra.mrb[0].mxu0 %v278
        %v4631 = vpop.f32.mrb[0].mxu0
        %v4632 = vadd.f32 %v4559, %v4631
        %v4633 = vpop.f32.mrb[0].mxu0
        %4634 = vdwg.mxu0
        %4635 = vrot.lane.b32.xlu0 %v4487, 127
        %v4636 = vpop.permute.xlu0 %4635
        %v4637 = vsel %vm203, %v4636, 0
        %4639 = vmatprep.subr.mxu0 0.0
        %4640 = vmatpush1.msra.mxu0 %v4637
        %4641 = vmatprep.subr.mxu0 0.0
        %4642 = vmatpush1.msra.mxu0 0.0
        %4643 = vmatprep.subr.mxu0 0.0
        %4644 = vmatpush1.msra.mxu0 0.0
        %4645 = vmatprep.subr.mxu0 0.0
        %4646 = vmatpush1.msra.mxu0 0.0
        %4647 = vmatprep.subr.mxu0 0.0
        %4648 = vmatpush1.msra.mxu0 0.0
        %4649 = vmatprep.subr.mxu0 0.0
        %4650 = vmatpush1.msra.mxu0 0.0
        %4651 = vmatprep.subr.mxu0 0.0
        %4652 = vmatpush1.msra.mxu0 0.0
        %4653 = vmatprep.subr.mxu0 0.0
        %4654 = vmatpush1.msra.mxu0 0.0
        %4655 = vmatprep.subr.mxu0 0.0
        %4656 = vmatpush1.msra.mxu0 0.0
        %4657 = vmatprep.subr.mxu0 0.0
        %4658 = vmatpush1.msra.mxu0 0.0
        %4659 = vmatprep.subr.mxu0 0.0
        %4660 = vmatpush1.msra.mxu0 0.0
        %4661 = vmatprep.subr.mxu0 0.0
        %4662 = vmatpush1.msra.mxu0 0.0
        %4663 = vmatprep.subr.mxu0 0.0
        %4664 = vmatpush1.msra.mxu0 0.0
        %4665 = vmatprep.subr.mxu0 0.0
        %4666 = vmatpush1.msra.mxu0 0.0
        %4667 = vmatprep.subr.mxu0 0.0
        %4668 = vmatpush1.msra.mxu0 0.0
        %4669 = vmatprep.subr.mxu0 0.0
        %4670 = vmatpush1.msra.mxu0 0.0
        %4671 = vmatprep.subr.mxu0 0.0
        %4672 = vmatpush1.msra.mxu0 0.0
        %4673 = vmatprep.subr.mxu0 0.0
        %4674 = vmatpush1.msra.mxu0 0.0
        %4675 = vmatprep.subr.mxu0 0.0
        %4676 = vmatpush1.msra.mxu0 0.0
        %4677 = vmatprep.subr.mxu0 0.0
        %4678 = vmatpush1.msra.mxu0 0.0
        %4679 = vmatprep.subr.mxu0 0.0
        %4680 = vmatpush1.msra.mxu0 0.0
        %4681 = vmatprep.subr.mxu0 0.0
        %4682 = vmatpush1.msra.mxu0 0.0
        %4683 = vmatprep.subr.mxu0 0.0
        %4684 = vmatpush1.msra.mxu0 0.0
        %4685 = vmatprep.subr.mxu0 0.0
        %4686 = vmatpush1.msra.mxu0 0.0
        %4687 = vmatprep.subr.mxu0 0.0
        %4688 = vmatpush1.msra.mxu0 0.0
        %4689 = vmatprep.subr.mxu0 0.0
        %4690 = vmatpush1.msra.mxu0 0.0
        %4691 = vmatprep.subr.mxu0 0.0
        %4692 = vmatpush1.msra.mxu0 0.0
        %4693 = vmatprep.subr.mxu0 0.0
        %4694 = vmatpush1.msra.mxu0 0.0
        %4695 = vmatprep.subr.mxu0 0.0
        %4696 = vmatpush1.msra.mxu0 0.0
        %4697 = vmatprep.subr.mxu0 0.0
        %4698 = vmatpush1.msra.mxu0 0.0
        %4699 = vmatprep.subr.mxu0 0.0
        %4700 = vmatpush1.msra.mxu0 0.0
        %4701 = vmatprep.subr.mxu0 0.0
        %4702 = vmatpush1.msra.mxu0 0.0
        %4703 = vmatprep.mubr.f32.mxu0 0.0
        %4704 = vmatmul.mubr.f32.gmra.mrb[0].mxu0 %v356
        %v4705 = vpop.f32.mrb[0].mxu0
        %v4706 = vadd.f32 0.0, %v4705
        %v4707 = vpop.f32.mrb[0].mxu0
        %4708 = vdwg.mxu0
        %v4709 = vadd.f32 %v4632, %v4706
        %s4710 = scalar_lea.vmem %s149, 88 [#allocation2]
        %v4711 = vld [vmem:[%s4710] sm:$0xf]
        %v4713 = vsel %vm203, %v4711, 0
        %4715 = vmatprep.subr.mxu0 0.0
        %4716 = vmatpush1.msra.mxu0 %v4713
        %4717 = vmatprep.subr.mxu0 0.0
        %4718 = vmatpush1.msra.mxu0 0.0
        %4719 = vmatprep.subr.mxu0 0.0
        %4720 = vmatpush1.msra.mxu0 0.0
        %4721 = vmatprep.subr.mxu0 0.0
        %4722 = vmatpush1.msra.mxu0 0.0
        %4723 = vmatprep.subr.mxu0 0.0
        %4724 = vmatpush1.msra.mxu0 0.0
        %4725 = vmatprep.subr.mxu0 0.0
        %4726 = vmatpush1.msra.mxu0 0.0
        %4727 = vmatprep.subr.mxu0 0.0
        %4728 = vmatpush1.msra.mxu0 0.0
        %4729 = vmatprep.subr.mxu0 0.0
        %4730 = vmatpush1.msra.mxu0 0.0
        %4731 = vmatprep.subr.mxu0 0.0
        %4732 = vmatpush1.msra.mxu0 0.0
        %4733 = vmatprep.subr.mxu0 0.0
        %4734 = vmatpush1.msra.mxu0 0.0
        %4735 = vmatprep.subr.mxu0 0.0
        %4736 = vmatpush1.msra.mxu0 0.0
        %4737 = vmatprep.subr.mxu0 0.0
        %4738 = vmatpush1.msra.mxu0 0.0
        %4739 = vmatprep.subr.mxu0 0.0
        %4740 = vmatpush1.msra.mxu0 0.0
        %4741 = vmatprep.subr.mxu0 0.0
        %4742 = vmatpush1.msra.mxu0 0.0
        %4743 = vmatprep.subr.mxu0 0.0
        %4744 = vmatpush1.msra.mxu0 0.0
        %4745 = vmatprep.subr.mxu0 0.0
        %4746 = vmatpush1.msra.mxu0 0.0
        %4747 = vmatprep.subr.mxu0 0.0
        %4748 = vmatpush1.msra.mxu0 0.0
        %4749 = vmatprep.subr.mxu0 0.0
        %4750 = vmatpush1.msra.mxu0 0.0
        %4751 = vmatprep.subr.mxu0 0.0
        %4752 = vmatpush1.msra.mxu0 0.0
        %4753 = vmatprep.subr.mxu0 0.0
        %4754 = vmatpush1.msra.mxu0 0.0
        %4755 = vmatprep.subr.mxu0 0.0
        %4756 = vmatpush1.msra.mxu0 0.0
        %4757 = vmatprep.subr.mxu0 0.0
        %4758 = vmatpush1.msra.mxu0 0.0
        %4759 = vmatprep.subr.mxu0 0.0
        %4760 = vmatpush1.msra.mxu0 0.0
        %4761 = vmatprep.subr.mxu0 0.0
        %4762 = vmatpush1.msra.mxu0 0.0
        %4763 = vmatprep.subr.mxu0 0.0
        %4764 = vmatpush1.msra.mxu0 0.0
        %4765 = vmatprep.subr.mxu0 0.0
        %4766 = vmatpush1.msra.mxu0 0.0
        %4767 = vmatprep.subr.mxu0 0.0
        %4768 = vmatpush1.msra.mxu0 0.0
        %4769 = vmatprep.subr.mxu0 0.0
        %4770 = vmatpush1.msra.mxu0 0.0
        %4771 = vmatprep.subr.mxu0 0.0
        %4772 = vmatpush1.msra.mxu0 0.0
        %4773 = vmatprep.subr.mxu0 0.0
        %4774 = vmatpush1.msra.mxu0 0.0
        %4775 = vmatprep.subr.mxu0 0.0
        %4776 = vmatpush1.msra.mxu0 0.0
        %4777 = vmatprep.subr.mxu0 0.0
        %4778 = vmatpush1.msra.mxu0 0.0
        %4779 = vmatprep.mubr.f32.mxu0 0.0
        %4780 = vmatmul.mubr.f32.gmra.mrb[0].mxu0 %v434
        %v4781 = vpop.f32.mrb[0].mxu0
        %v4782 = vadd.f32 0.0, %v4781
        %v4783 = vpop.f32.mrb[0].mxu0
        %4784 = vdwg.mxu0
        %v4785 = vadd.f32 %v4709, %v4782
        %s4786 = scalar_lea.vmem %s149, 120 [#allocation2]
        %v4787 = vld [vmem:[%s4786] sm:$0xf]
        %v4789 = vsel %vm203, %v4787, 0
        %4791 = vmatprep.subr.mxu0 0.0
        %4792 = vmatpush1.msra.mxu0 %v4789
        %4793 = vmatprep.subr.mxu0 0.0
        %4794 = vmatpush1.msra.mxu0 0.0
        %4795 = vmatprep.subr.mxu0 0.0
        %4796 = vmatpush1.msra.mxu0 0.0
        %4797 = vmatprep.subr.mxu0 0.0
        %4798 = vmatpush1.msra.mxu0 0.0
        %4799 = vmatprep.subr.mxu0 0.0
        %4800 = vmatpush1.msra.mxu0 0.0
        %4801 = vmatprep.subr.mxu0 0.0
        %4802 = vmatpush1.msra.mxu0 0.0
        %4803 = vmatprep.subr.mxu0 0.0
        %4804 = vmatpush1.msra.mxu0 0.0
        %4805 = vmatprep.subr.mxu0 0.0
        %4806 = vmatpush1.msra.mxu0 0.0
        %4807 = vmatprep.subr.mxu0 0.0
        %4808 = vmatpush1.msra.mxu0 0.0
        %4809 = vmatprep.subr.mxu0 0.0
        %4810 = vmatpush1.msra.mxu0 0.0
        %4811 = vmatprep.subr.mxu0 0.0
        %4812 = vmatpush1.msra.mxu0 0.0
        %4813 = vmatprep.subr.mxu0 0.0
        %4814 = vmatpush1.msra.mxu0 0.0
        %4815 = vmatprep.subr.mxu0 0.0
        %4816 = vmatpush1.msra.mxu0 0.0
        %4817 = vmatprep.subr.mxu0 0.0
        %4818 = vmatpush1.msra.mxu0 0.0
        %4819 = vmatprep.subr.mxu0 0.0
        %4820 = vmatpush1.msra.mxu0 0.0
        %4821 = vmatprep.subr.mxu0 0.0
        %4822 = vmatpush1.msra.mxu0 0.0
        %4823 = vmatprep.subr.mxu0 0.0
        %4824 = vmatpush1.msra.mxu0 0.0
        %4825 = vmatprep.subr.mxu0 0.0
        %4826 = vmatpush1.msra.mxu0 0.0
        %4827 = vmatprep.subr.mxu0 0.0
        %4828 = vmatpush1.msra.mxu0 0.0
        %4829 = vmatprep.subr.mxu0 0.0
        %4830 = vmatpush1.msra.mxu0 0.0
        %4831 = vmatprep.subr.mxu0 0.0
        %4832 = vmatpush1.msra.mxu0 0.0
        %4833 = vmatprep.subr.mxu0 0.0
        %4834 = vmatpush1.msra.mxu0 0.0
        %4835 = vmatprep.subr.mxu0 0.0
        %4836 = vmatpush1.msra.mxu0 0.0
        %4837 = vmatprep.subr.mxu0 0.0
        %4838 = vmatpush1.msra.mxu0 0.0
        %4839 = vmatprep.subr.mxu0 0.0
        %4840 = vmatpush1.msra.mxu0 0.0
        %4841 = vmatprep.subr.mxu0 0.0
        %4842 = vmatpush1.msra.mxu0 0.0
        %4843 = vmatprep.subr.mxu0 0.0
        %4844 = vmatpush1.msra.mxu0 0.0
        %4845 = vmatprep.subr.mxu0 0.0
        %4846 = vmatpush1.msra.mxu0 0.0
        %4847 = vmatprep.subr.mxu0 0.0
        %4848 = vmatpush1.msra.mxu0 0.0
        %4849 = vmatprep.subr.mxu0 0.0
        %4850 = vmatpush1.msra.mxu0 0.0
        %4851 = vmatprep.subr.mxu0 0.0
        %4852 = vmatpush1.msra.mxu0 0.0
        %4853 = vmatprep.subr.mxu0 0.0
        %4854 = vmatpush1.msra.mxu0 0.0
        %4855 = vmatprep.mubr.f32.mxu0 0.0
        %4856 = vmatmul.mubr.f32.gmra.mrb[0].mxu0 %v513
        %v4857 = vpop.f32.mrb[0].mxu0
        %v4858 = vadd.f32 0.0, %v4857
        %v4859 = vpop.f32.mrb[0].mxu0
        %4860 = vdwg.mxu0
        %v4861 = vadd.f32 %v4785, %v4858
        %4862 = vrot.lane.b32.xlu0 %v4711, 127
        %v4863 = vpop.permute.xlu0 %4862
        %v4864 = vsel %vm203, %v4863, 0
        %4866 = vmatprep.subr.mxu0 0.0
        %4867 = vmatpush1.msra.mxu0 %v4864
        %4868 = vmatprep.subr.mxu0 0.0
        %4869 = vmatpush1.msra.mxu0 0.0
        %4870 = vmatprep.subr.mxu0 0.0
        %4871 = vmatpush1.msra.mxu0 0.0
        %4872 = vmatprep.subr.mxu0 0.0
        %4873 = vmatpush1.msra.mxu0 0.0
        %4874 = vmatprep.subr.mxu0 0.0
        %4875 = vmatpush1.msra.mxu0 0.0
        %4876 = vmatprep.subr.mxu0 0.0
        %4877 = vmatpush1.msra.mxu0 0.0
        %4878 = vmatprep.subr.mxu0 0.0
        %4879 = vmatpush1.msra.mxu0 0.0
        %4880 = vmatprep.subr.mxu0 0.0
        %4881 = vmatpush1.msra.mxu0 0.0
        %4882 = vmatprep.subr.mxu0 0.0
        %4883 = vmatpush1.msra.mxu0 0.0
        %4884 = vmatprep.subr.mxu0 0.0
        %4885 = vmatpush1.msra.mxu0 0.0
        %4886 = vmatprep.subr.mxu0 0.0
        %4887 = vmatpush1.msra.mxu0 0.0
        %4888 = vmatprep.subr.mxu0 0.0
        %4889 = vmatpush1.msra.mxu0 0.0
        %4890 = vmatprep.subr.mxu0 0.0
        %4891 = vmatpush1.msra.mxu0 0.0
        %4892 = vmatprep.subr.mxu0 0.0
        %4893 = vmatpush1.msra.mxu0 0.0
        %4894 = vmatprep.subr.mxu0 0.0
        %4895 = vmatpush1.msra.mxu0 0.0
        %4896 = vmatprep.subr.mxu0 0.0
        %4897 = vmatpush1.msra.mxu0 0.0
        %4898 = vmatprep.subr.mxu0 0.0
        %4899 = vmatpush1.msra.mxu0 0.0
        %4900 = vmatprep.subr.mxu0 0.0
        %4901 = vmatpush1.msra.mxu0 0.0
        %4902 = vmatprep.subr.mxu0 0.0
        %4903 = vmatpush1.msra.mxu0 0.0
        %4904 = vmatprep.subr.mxu0 0.0
        %4905 = vmatpush1.msra.mxu0 0.0
        %4906 = vmatprep.subr.mxu0 0.0
        %4907 = vmatpush1.msra.mxu0 0.0
        %4908 = vmatprep.subr.mxu0 0.0
        %4909 = vmatpush1.msra.mxu0 0.0
        %4910 = vmatprep.subr.mxu0 0.0
        %4911 = vmatpush1.msra.mxu0 0.0
        %4912 = vmatprep.subr.mxu0 0.0
        %4913 = vmatpush1.msra.mxu0 0.0
        %4914 = vmatprep.subr.mxu0 0.0
        %4915 = vmatpush1.msra.mxu0 0.0
        %4916 = vmatprep.subr.mxu0 0.0
        %4917 = vmatpush1.msra.mxu0 0.0
        %4918 = vmatprep.subr.mxu0 0.0
        %4919 = vmatpush1.msra.mxu0 0.0
        %4920 = vmatprep.subr.mxu0 0.0
        %4921 = vmatpush1.msra.mxu0 0.0
        %4922 = vmatprep.subr.mxu0 0.0
        %4923 = vmatpush1.msra.mxu0 0.0
        %4924 = vmatprep.subr.mxu0 0.0
        %4925 = vmatpush1.msra.mxu0 0.0
        %4926 = vmatprep.subr.mxu0 0.0
        %4927 = vmatpush1.msra.mxu0 0.0
        %4928 = vmatprep.subr.mxu0 0.0
        %4929 = vmatpush1.msra.mxu0 0.0
        %4930 = vmatprep.mubr.f32.mxu0 0.0
        %4931 = vmatmul.mubr.f32.gmra.mrb[0].mxu0 %v592
        %v4932 = vpop.f32.mrb[0].mxu0
        %v4933 = vadd.f32 0.0, %v4932
        %v4934 = vpop.f32.mrb[0].mxu0
        %4935 = vdwg.mxu0
        %v4936 = vadd.f32 %v4861, %v4933
        %s4937 = scalar_lea.vmem %s149, 28 [#allocation2]
        %v4938 = vld [vmem:[%s4937] sm:$0xf]
        %v4940 = vsel %vm203, %v4938, 0
        %4942 = vmatprep.subr.mxu0 0.0
        %4943 = vmatpush1.msra.mxu0 %v4940
        %4944 = vmatprep.subr.mxu0 0.0
        %4945 = vmatpush1.msra.mxu0 0.0
        %4946 = vmatprep.subr.mxu0 0.0
        %4947 = vmatpush1.msra.mxu0 0.0
        %4948 = vmatprep.subr.mxu0 0.0
        %4949 = vmatpush1.msra.mxu0 0.0
        %4950 = vmatprep.subr.mxu0 0.0
        %4951 = vmatpush1.msra.mxu0 0.0
        %4952 = vmatprep.subr.mxu0 0.0
        %4953 = vmatpush1.msra.mxu0 0.0
        %4954 = vmatprep.subr.mxu0 0.0
        %4955 = vmatpush1.msra.mxu0 0.0
        %4956 = vmatprep.subr.mxu0 0.0
        %4957 = vmatpush1.msra.mxu0 0.0
        %4958 = vmatprep.subr.mxu0 0.0
        %4959 = vmatpush1.msra.mxu0 0.0
        %4960 = vmatprep.subr.mxu0 0.0
        %4961 = vmatpush1.msra.mxu0 0.0
        %4962 = vmatprep.subr.mxu0 0.0
        %4963 = vmatpush1.msra.mxu0 0.0
        %4964 = vmatprep.subr.mxu0 0.0
        %4965 = vmatpush1.msra.mxu0 0.0
        %4966 = vmatprep.subr.mxu0 0.0
        %4967 = vmatpush1.msra.mxu0 0.0
        %4968 = vmatprep.subr.mxu0 0.0
        %4969 = vmatpush1.msra.mxu0 0.0
        %4970 = vmatprep.subr.mxu0 0.0
        %4971 = vmatpush1.msra.mxu0 0.0
        %4972 = vmatprep.subr.mxu0 0.0
        %4973 = vmatpush1.msra.mxu0 0.0
        %4974 = vmatprep.subr.mxu0 0.0
        %4975 = vmatpush1.msra.mxu0 0.0
        %4976 = vmatprep.subr.mxu0 0.0
        %4977 = vmatpush1.msra.mxu0 0.0
        %4978 = vmatprep.subr.mxu0 0.0
        %4979 = vmatpush1.msra.mxu0 0.0
        %4980 = vmatprep.subr.mxu0 0.0
        %4981 = vmatpush1.msra.mxu0 0.0
        %4982 = vmatprep.subr.mxu0 0.0
        %4983 = vmatpush1.msra.mxu0 0.0
        %4984 = vmatprep.subr.mxu0 0.0
        %4985 = vmatpush1.msra.mxu0 0.0
        %4986 = vmatprep.subr.mxu0 0.0
        %4987 = vmatpush1.msra.mxu0 0.0
        %4988 = vmatprep.subr.mxu0 0.0
        %4989 = vmatpush1.msra.mxu0 0.0
        %4990 = vmatprep.subr.mxu0 0.0
        %4991 = vmatpush1.msra.mxu0 0.0
        %4992 = vmatprep.subr.mxu0 0.0
        %4993 = vmatpush1.msra.mxu0 0.0
        %4994 = vmatprep.subr.mxu0 0.0
        %4995 = vmatpush1.msra.mxu0 0.0
        %4996 = vmatprep.subr.mxu0 0.0
        %4997 = vmatpush1.msra.mxu0 0.0
        %4998 = vmatprep.subr.mxu0 0.0
        %4999 = vmatpush1.msra.mxu0 0.0
        %5000 = vmatprep.subr.mxu0 0.0
        %5001 = vmatpush1.msra.mxu0 0.0
        %5002 = vmatprep.subr.mxu0 0.0
        %5003 = vmatpush1.msra.mxu0 0.0
        %5004 = vmatprep.subr.mxu0 0.0
        %5005 = vmatpush1.msra.mxu0 0.0
        %5006 = vmatprep.mubr.f32.mxu0 0.0
        %5007 = vmatmul.mubr.f32.gmra.mrb[0].mxu0 %v670
        %v5008 = vpop.f32.mrb[0].mxu0
        %v5009 = vadd.f32 0.0, %v5008
        %v5010 = vpop.f32.mrb[0].mxu0
        %5011 = vdwg.mxu0
        %v5012 = vadd.f32 %v4936, %v5009
        %s5013 = scalar_lea.vmem %s149, 60 [#allocation2]
        %v5014 = vld [vmem:[%s5013] sm:$0xf]
        %v5016 = vsel %vm203, %v5014, 0
        %5018 = vmatprep.subr.mxu0 0.0
        %5019 = vmatpush1.msra.mxu0 %v5016
        %5020 = vmatprep.subr.mxu0 0.0
        %5021 = vmatpush1.msra.mxu0 0.0
        %5022 = vmatprep.subr.mxu0 0.0
        %5023 = vmatpush1.msra.mxu0 0.0
        %5024 = vmatprep.subr.mxu0 0.0
        %5025 = vmatpush1.msra.mxu0 0.0
        %5026 = vmatprep.subr.mxu0 0.0
        %5027 = vmatpush1.msra.mxu0 0.0
        %5028 = vmatprep.subr.mxu0 0.0
        %5029 = vmatpush1.msra.mxu0 0.0
        %5030 = vmatprep.subr.mxu0 0.0
        %5031 = vmatpush1.msra.mxu0 0.0
        %5032 = vmatprep.subr.mxu0 0.0
        %5033 = vmatpush1.msra.mxu0 0.0
        %5034 = vmatprep.subr.mxu0 0.0
        %5035 = vmatpush1.msra.mxu0 0.0
        %5036 = vmatprep.subr.mxu0 0.0
        %5037 = vmatpush1.msra.mxu0 0.0
        %5038 = vmatprep.subr.mxu0 0.0
        %5039 = vmatpush1.msra.mxu0 0.0
        %5040 = vmatprep.subr.mxu0 0.0
        %5041 = vmatpush1.msra.mxu0 0.0
        %5042 = vmatprep.subr.mxu0 0.0
        %5043 = vmatpush1.msra.mxu0 0.0
        %5044 = vmatprep.subr.mxu0 0.0
        %5045 = vmatpush1.msra.mxu0 0.0
        %5046 = vmatprep.subr.mxu0 0.0
        %5047 = vmatpush1.msra.mxu0 0.0
        %5048 = vmatprep.subr.mxu0 0.0
        %5049 = vmatpush1.msra.mxu0 0.0
        %5050 = vmatprep.subr.mxu0 0.0
        %5051 = vmatpush1.msra.mxu0 0.0
        %5052 = vmatprep.subr.mxu0 0.0
        %5053 = vmatpush1.msra.mxu0 0.0
        %5054 = vmatprep.subr.mxu0 0.0
        %5055 = vmatpush1.msra.mxu0 0.0
        %5056 = vmatprep.subr.mxu0 0.0
        %5057 = vmatpush1.msra.mxu0 0.0
        %5058 = vmatprep.subr.mxu0 0.0
        %5059 = vmatpush1.msra.mxu0 0.0
        %5060 = vmatprep.subr.mxu0 0.0
        %5061 = vmatpush1.msra.mxu0 0.0
        %5062 = vmatprep.subr.mxu0 0.0
        %5063 = vmatpush1.msra.mxu0 0.0
        %5064 = vmatprep.subr.mxu0 0.0
        %5065 = vmatpush1.msra.mxu0 0.0
        %5066 = vmatprep.subr.mxu0 0.0
        %5067 = vmatpush1.msra.mxu0 0.0
        %5068 = vmatprep.subr.mxu0 0.0
        %5069 = vmatpush1.msra.mxu0 0.0
        %5070 = vmatprep.subr.mxu0 0.0
        %5071 = vmatpush1.msra.mxu0 0.0
        %5072 = vmatprep.subr.mxu0 0.0
        %5073 = vmatpush1.msra.mxu0 0.0
        %5074 = vmatprep.subr.mxu0 0.0
        %5075 = vmatpush1.msra.mxu0 0.0
        %5076 = vmatprep.subr.mxu0 0.0
        %5077 = vmatpush1.msra.mxu0 0.0
        %5078 = vmatprep.subr.mxu0 0.0
        %5079 = vmatpush1.msra.mxu0 0.0
        %5080 = vmatprep.subr.mxu0 0.0
        %5081 = vmatpush1.msra.mxu0 0.0
        %5082 = vmatprep.mubr.f32.mxu0 0.0
        %5083 = vmatmul.mubr.f32.gmra.mrb[0].mxu0 %v749
        %v5084 = vpop.f32.mrb[0].mxu0
        %v5085 = vadd.f32 0.0, %v5084
        %v5086 = vpop.f32.mrb[0].mxu0
        %5087 = vdwg.mxu0
        %v5088 = vadd.f32 %v5012, %v5085
        %5089 = vrot.lane.b32.xlu0 %v4938, 127
        %v5090 = vpop.permute.xlu0 %5089
        %v5091 = vsel %vm203, %v5090, 0
        %5093 = vmatprep.subr.mxu0 0.0
        %5094 = vmatpush1.msra.mxu0 %v5091
        %5095 = vmatprep.subr.mxu0 0.0
        %5096 = vmatpush1.msra.mxu0 0.0
        %5097 = vmatprep.subr.mxu0 0.0
        %5098 = vmatpush1.msra.mxu0 0.0
        %5099 = vmatprep.subr.mxu0 0.0
        %5100 = vmatpush1.msra.mxu0 0.0
        %5101 = vmatprep.subr.mxu0 0.0
        %5102 = vmatpush1.msra.mxu0 0.0
        %5103 = vmatprep.subr.mxu0 0.0
        %5104 = vmatpush1.msra.mxu0 0.0
        %5105 = vmatprep.subr.mxu0 0.0
        %5106 = vmatpush1.msra.mxu0 0.0
        %5107 = vmatprep.subr.mxu0 0.0
        %5108 = vmatpush1.msra.mxu0 0.0
        %5109 = vmatprep.subr.mxu0 0.0
        %5110 = vmatpush1.msra.mxu0 0.0
        %5111 = vmatprep.subr.mxu0 0.0
        %5112 = vmatpush1.msra.mxu0 0.0
        %5113 = vmatprep.subr.mxu0 0.0
        %5114 = vmatpush1.msra.mxu0 0.0
        %5115 = vmatprep.subr.mxu0 0.0
        %5116 = vmatpush1.msra.mxu0 0.0
        %5117 = vmatprep.subr.mxu0 0.0
        %5118 = vmatpush1.msra.mxu0 0.0
        %5119 = vmatprep.subr.mxu0 0.0
        %5120 = vmatpush1.msra.mxu0 0.0
        %5121 = vmatprep.subr.mxu0 0.0
        %5122 = vmatpush1.msra.mxu0 0.0
        %5123 = vmatprep.subr.mxu0 0.0
        %5124 = vmatpush1.msra.mxu0 0.0
        %5125 = vmatprep.subr.mxu0 0.0
        %5126 = vmatpush1.msra.mxu0 0.0
        %5127 = vmatprep.subr.mxu0 0.0
        %5128 = vmatpush1.msra.mxu0 0.0
        %5129 = vmatprep.subr.mxu0 0.0
        %5130 = vmatpush1.msra.mxu0 0.0
        %5131 = vmatprep.subr.mxu0 0.0
        %5132 = vmatpush1.msra.mxu0 0.0
        %5133 = vmatprep.subr.mxu0 0.0
        %5134 = vmatpush1.msra.mxu0 0.0
        %5135 = vmatprep.subr.mxu0 0.0
        %5136 = vmatpush1.msra.mxu0 0.0
        %5137 = vmatprep.subr.mxu0 0.0
        %5138 = vmatpush1.msra.mxu0 0.0
        %5139 = vmatprep.subr.mxu0 0.0
        %5140 = vmatpush1.msra.mxu0 0.0
        %5141 = vmatprep.subr.mxu0 0.0
        %5142 = vmatpush1.msra.mxu0 0.0
        %5143 = vmatprep.subr.mxu0 0.0
        %5144 = vmatpush1.msra.mxu0 0.0
        %5145 = vmatprep.subr.mxu0 0.0
        %5146 = vmatpush1.msra.mxu0 0.0
        %5147 = vmatprep.subr.mxu0 0.0
        %5148 = vmatpush1.msra.mxu0 0.0
        %5149 = vmatprep.subr.mxu0 0.0
        %5150 = vmatpush1.msra.mxu0 0.0
        %5151 = vmatprep.subr.mxu0 0.0
        %5152 = vmatpush1.msra.mxu0 0.0
        %5153 = vmatprep.subr.mxu0 0.0
        %5154 = vmatpush1.msra.mxu0 0.0
        %5155 = vmatprep.subr.mxu0 0.0
        %5156 = vmatpush1.msra.mxu0 0.0
        %5157 = vmatprep.mubr.f32.mxu0 0.0
        %5158 = vmatmul.mubr.f32.gmra.mrb[0].mxu0 %v828
        %v5159 = vpop.f32.mrb[0].mxu0
        %v5160 = vadd.f32 0.0, %v5159
        %v5161 = vpop.f32.mrb[0].mxu0
        %5162 = vdwg.mxu0
        %v5163 = vadd.f32 %v5088, %v5160
        %v5166 = vunpack.c.l.s4 1966171168
        %v5167 = vunpack.c.0.s8 %v5166
        %v5168 = vlaneseq
        %v5169 = vshrl.u32 %v5168, 7
        %v5170 = vsub.s32 %v5167, %v5169
        %v5171 = vrot.slane %v5163, %v5170
        %v5172 = vcombine.high %v5171, %v5171
        %v5174 = vunpack.c.l.s4 1966171168
        %v5175 = vunpack.c.0.s8 %v5174
        %v5176 = vlaneseq
        %v5177 = vshrl.u32 %v5176, 7
        %v5178 = vsub.s32 %v5175, %v5177
        %v5179 = vrot.slane %v5171, %v5178
        %v5181 = vunpack.c.l.s4 1966171168
        %v5182 = vunpack.c.0.s8 %v5181
        %v5183 = vlaneseq
        %v5184 = vshrl.u32 %v5183, 7
        %v5185 = vsub.s32 %v5182, %v5184
        %v5186 = vrot.slane %v5172, %v5185
        %v5187 = vcombine.high %v5179, %v5179
        %v5188 = vcombine.high %v5186, %v5186
        %5193 = vst.msk [vmem:[%s178 + $0x6] sm:$0x1] %vm932, %v5179
        %5194 = vst.msk [vmem:[%s178 + $0xe] sm:$0x1] %vm932, %v5186
        %5195 = vst.msk [vmem:[%s178 + $0x16] sm:$0x1] %vm932, %v5187
        %5196 = vst.msk [vmem:[%s178 + $0x1e] sm:$0x1] %vm932, %v5188
        %p5197 = scmp.lt.s32.totalorder %s17, 1
        %s5198 = scalar_select %p5197, %s17, 1
        %s5199 = smul.addr %s5198, 4
        %s5200 = smul.addr %s5199, 8
        %s5201 = scalar_lea.vmem %s2, %s5200
        // Predicated region
        $region37: #{tpu_custom_call.1} parent=27 // pred_check
          %p5202 = pneg %p82
        $region38: #{tpu_custom_call.1} parent=27 // pred_check_branch
          %5204 = sbr.rel (%p5202) target = $region40
        $region39: #{tpu_custom_call.1} parent=27 // pred_region
          _
        $region40: #{tpu_custom_call.1} parent=27 // pred_fallthru
          _
      $region28: #{tpu_custom_call.1} parent=5 // pred_fallthru
        _
      %p5205 = scmp.le.s32.totalorder 2, %s12
      // Predicated region
      $region41: #{tpu_custom_call.1} parent=5 // pred_check
        %p5206 = pneg %p5205
      $region42: #{tpu_custom_call.1} parent=5 // pred_check_branch
        %5208 = sbr.rel (%p5206) target = $region44
      $region43: #{tpu_custom_call.1} parent=5 // pred_region
        %s5209 = ssub.s32 %s12, 2
        // Predicated region
        $region45: #{tpu_custom_call.1} parent=43 // pred_check
          %p5210 = pneg %p88
        $region46: #{tpu_custom_call.1} parent=43 // pred_check_branch
          %5212 = sbr.rel (%p5210) target = $region48
        $region47: #{tpu_custom_call.1} parent=43 // pred_region
          %p5213 = scmp.lt.s32.totalorder %s18, 1
          %s5214 = scalar_select %p5213, %s18, 1
          %s5215 = smul.addr %s5214, 4
          %s5216 = smul.addr %s5215, 8
          %s5217 = scalar_lea.vmem %s2, %s5216
        $region48: #{tpu_custom_call.1} parent=43 // pred_fallthru
          _
      $region44: #{tpu_custom_call.1} parent=5 // pred_fallthru
        _
    $region6: #{tpu_custom_call.1} parent=1 // loop_footer
      %s16 = sadd.s32 1, %s12
    $region7: #{tpu_custom_call.1} parent=1 // loop_footer_branch
      %11 = sbr.rel target = $region3
    $region8: #{tpu_custom_call.1} parent=1 // loop_exit
      _
    %5218 = vsyncpa [#allocation3], 1
    %s5219 = scalar_lea.sflag [#allocation3], 1
    %5220 = vsyncpa %s5219, 1
    %5221 = vsyncpa [#allocation5], 1

</llo_original>
